<compile_context>
chip_gen: v6e
topology: v6e:2x2x1
jax: 0.10.0
libtpu: 0.0.40
codegen_flags: <defaults>
</compile_context>

<pallas_src>
import numpy as np
import jax
import jax.numpy as jnp
from jax.experimental import pallas as pl
from jax.experimental.pallas import tpu as pltpu


# ----------------------------- Pallas kernel --------------------------------
def _make_cbam_kernel(taps, H, W, HW, Bt):
    """taps: static tuple of (di, dj, flat_offset) for the 49 taps of a 7x7 conv."""

    def cbam_kernel(x_ref, w1_ref, w2_ref, wcols_ref, rc_ref, o_ref):
        # x_ref: (Bt, C, HW) block; lane axis = flattened spatial.
        x = x_ref[...].astype(jnp.float32)

        # ---- Channel attention: one batched MLP for all Bt elems & both pools ----
        avg_c = jnp.mean(x, axis=2)                       # (Bt, C)  AdaptiveAvgPool2d(1)
        max_c = jnp.max(x, axis=2)                        # (Bt, C)  AdaptiveMaxPool2d(1)
        v = jnp.concatenate([avg_c, max_c], axis=0)       # (2*Bt, C)
        h = jnp.maximum(
            jnp.dot(v, w1_ref[...], preferred_element_type=jnp.float32), 0.0)  # (2*Bt, Cr)
        o = jnp.dot(h, w2_ref[...], preferred_element_type=jnp.float32)        # (2*Bt, C)
        ca = jax.nn.sigmoid(o[:Bt] + o[Bt:])              # (Bt, C)
        y = x * ca[:, :, None]                            # (Bt, C, HW)

        # ---- Spatial attention: 7x7 conv (pad=3) as a 49-tap shift-add stencil.
        #      avg/max maps of the whole batch block packed on the sublane axis.
        avg_s = jnp.mean(y, axis=1)                       # (Bt, HW) mean over channels
        max_s = jnp.max(y, axis=1)                        # (Bt, HW) max over channels
        s = jnp.concatenate([avg_s, max_s], axis=0)       # (2*Bt, HW)

        row = rc_ref[0:1, :]                              # (1, HW) int32 row index plane
        col = rc_ref[1:2, :]                              # (1, HW) int32 col index plane
        wc = wcols_ref[...]                               # (2*Bt, 49) per-row tap weights

        acc = jnp.zeros((2 * Bt, HW), jnp.float32)
        for t, (di, dj, off) in enumerate(taps):          # static unroll, 49 taps
            rolled = s if off == 0 else pltpu.roll(s, shift=(-off) % HW, axis=1)
            # Validity mask built in-kernel (4 compares); kills values that the
            # cyclic roll wrapped around the image boundary.
            valid = ((row >= -di) & (row < H - di) &
                     (col >= -dj) & (col < W - dj))
            m = valid.astype(jnp.float32)                 # (1, HW)
            wcol = wc[:, t:t + 1]                         # (2*Bt, 1): avg rows get w[0,t], max rows w[1,t]
            acc = acc + (wcol * m) * rolled

        sa = jax.nn.sigmoid(acc[:Bt] + acc[Bt:])          # (Bt, HW): sum the two conv input channels
        o_ref[...] = (y * sa[:, None, :]).astype(o_ref.dtype)   # lane-dense store (last dim HW)

    return cbam_kernel


# ----------------------------- wrapper / glue --------------------------------
def _choose_block_batch(B, C, HW, itemsize, max_block_bytes=2 << 20):
    """Largest Bt dividing B s.t. the x block stays small and grid >= 2 (v7x megacore)."""
    best = 1
    for bt in range(1, B + 1):
        if B % bt != 0:
            continue
        if B >= 2 and (B // bt) < 2:
            continue
        if bt * C * HW * itemsize <= max_block_bytes:
            best = max(best, bt)
    return best


def cbam_pallas(x, w1, w2, wconv):
    """x: (B, C, H, W) float32 or bfloat16 (NCHW, matching the PyTorch module).
       w1: (Cr, C)  fc1 1x1-conv weight (squeezed), bias=False
       w2: (C, Cr)  fc2 1x1-conv weight (squeezed), bias=False
       wconv: (1, 2, 7, 7) spatial-attention conv weight, bias=False."""
    B, C, H, W = x.shape
    Cr = w1.shape[0]
    HW = H * W

    # Free layout change: NCHW -> (B, C, HW). No HBM transposes in or out.
    x_l = x.reshape(B, C, HW)

    Bt = _choose_block_batch(B, C, HW, np.dtype(x.dtype).itemsize)

    # Static tap offsets for the 7x7, pad=3 conv (di, dj, flat offset di*W+dj).
    taps = tuple((ki - 3, kj - 3, (ki - 3) * W + (kj - 3))
                 for ki in range(7) for kj in range(7))

    # Tiny per-tap weight table: rows [0:Bt) carry the avg-map weights,
    # rows [Bt:2Bt) the max-map weights.  (2*Bt, 49) ~ 4 KiB in VMEM.
    w_flat = jnp.reshape(jnp.asarray(wconv, dtype=jnp.float32), (2, 49))
    wcols = jnp.concatenate([jnp.broadcast_to(w_flat[0:1, :], (Bt, 49)),
                             jnp.broadcast_to(w_flat[1:2, :], (Bt, 49))], axis=0)

    # Row/col index planes for in-kernel boundary masks: (2, HW) int32 (~2 KiB).
    rows = np.repeat(np.arange(H, dtype=np.int32), W)
    cols = np.tile(np.arange(W, dtype=np.int32), H)
    rc = jnp.asarray(np.stack([rows, cols], axis=0))

    # Pre-transpose the MLP weights host-side so the kernel avoids XLU transposes.
    w1t = jnp.transpose(jnp.asarray(w1, dtype=jnp.float32))   # (C, Cr)
    w2t = jnp.transpose(jnp.asarray(w2, dtype=jnp.float32))   # (Cr, C)

    kernel = _make_cbam_kernel(taps, H, W, HW, Bt)

    out_l = pl.pallas_call(
        kernel,
        out_shape=jax.ShapeDtypeStruct((B, C, HW), x.dtype),
        grid_spec=pltpu.PrefetchScalarGridSpec(
            num_scalar_prefetch=0,
            grid=(B // Bt,),
            in_specs=[
                pl.BlockSpec((Bt, C, HW), lambda b: (b, 0, 0)),   # x block (Bt batch elems)
                pl.BlockSpec((C, Cr), lambda b: (0, 0)),          # fc1 weight (transposed)
                pl.BlockSpec((Cr, C), lambda b: (0, 0)),          # fc2 weight (transposed)
                pl.BlockSpec((2 * Bt, 49), lambda b: (0, 0)),     # per-row tap weights
                pl.BlockSpec((2, HW), lambda b: (0, 0)),          # row/col index planes
            ],
            out_specs=pl.BlockSpec((Bt, C, HW), lambda b: (b, 0, 0)),
        ),
        compiler_params=pltpu.CompilerParams(
            dimension_semantics=("parallel",),        # batch-block axis -> megacore sharding
            vmem_limit_bytes=32 * 1024 * 1024,        # explicit budget (fits v7x 64 MiB phys)
        ),
    )(x_l, w1t, w2t, wcols, rc)

    # (B, C, HW) -> NCHW (free reshape)
    return out_l.reshape(B, C, H, W)


# ----------------------------- pure-JAX reference ----------------------------
def cbam_reference(x, w1, w2, wconv):
    avg = x.mean(axis=(2, 3))           # (B, C)
    mx = x.max(axis=(2, 3))             # (B, C)

    def mlp(v):
        h = jax.nn.relu(v @ w1.T)
        return h @ w2.T

    ca = jax.nn.sigmoid(mlp(avg) + mlp(mx))[:, :, None, None]
    y = x * ca
    avg_s = y.mean(axis=1, keepdims=True)
    max_s = y.max(axis=1, keepdims=True)
    cat = jnp.concatenate([avg_s, max_s], axis=1)            # (B, 2, H, W)
    sa = jax.lax.conv_general_dilated(
        cat, wconv, window_strides=(1, 1), padding=((3, 3), (3, 3)),
        dimension_numbers=("NCHW", "OIHW", "NCHW"))
    return y * jax.nn.sigmoid(sa)


# ----------------------------- main -------------------------------------------
if __name__ == "__main__":
    B, C, H, W = 8, 32, 16, 16          # B=8 -> Bt=4, grid=2 (both v7x TCs busy)
    reduction = 16
    Cr = C // reduction

    key = jax.random.PRNGKey(0)
    kx, k1, k2, k3 = jax.random.split(key, 4)
    x = jax.random.normal(kx, (B, C, H, W), dtype=jnp.float32)
    # deterministic synthetic parameters (shapes from the module's __init__, all bias=False)
    w1 = 0.1 * jax.random.normal(k1, (Cr, C), dtype=jnp.float32)          # fc1: Conv2d(C, C//r, 1)
    w2 = 0.1 * jax.random.normal(k2, (C, Cr), dtype=jnp.float32)          # fc2: Conv2d(C//r, C, 1)
    wconv = 0.1 * jax.random.normal(k3, (1, 2, 7, 7), dtype=jnp.float32)  # SpatialAttention conv

    # f32 storage path
    out = jax.block_until_ready(cbam_pallas(x, w1, w2, wconv))
    ref = jax.block_until_ready(cbam_reference(x, w1, w2, wconv))
    np.testing.assert_allclose(np.asarray(out), np.asarray(ref), rtol=1e-4, atol=1e-4)

    # bf16 storage path (halves the dominant x/out HBM traffic; all math stays f32
    # inside the kernel, so it is also valid on v5e which has no bf16 VALU/EUP).
    x_bf = x.astype(jnp.bfloat16)
    out_bf = jax.block_until_ready(cbam_pallas(x_bf, w1, w2, wconv))
    ref_bf = jax.block_until_ready(
        cbam_reference(x_bf.astype(jnp.float32), w1, w2, wconv))
    np.testing.assert_allclose(np.asarray(out_bf.astype(jnp.float32)),
                               np.asarray(ref_bf), rtol=3e-2, atol=3e-2)

    print("KERNEL_OK")
</pallas_src>

<mosaic_0001>
module attributes {stable_mosaic.version = 11 : i64} {
  func.func @cbam_kernel(%arg0: i32, %arg1: memref<4x32x256xf32, #tpu.memory_space<vmem>>, %arg2: memref<32x2xf32, #tpu.memory_space<vmem>>, %arg3: memref<2x32xf32, #tpu.memory_space<vmem>>, %arg4: memref<8x49xf32, #tpu.memory_space<vmem>>, %arg5: memref<2x256xi32, #tpu.memory_space<vmem>>, %arg6: memref<4x32x256xf32, #tpu.memory_space<vmem>>) attributes {dimension_semantics = [#tpu.dimension_semantics<parallel>], iteration_bounds = array<i64: 2>, scalar_prefetch = 0 : i64, scratch_operands = 0 : i64, tpu.core_type = #tpu.core_type<tc>, window_params = [{transform_indices = @transform_0, window_bounds = array<i64: 4, 32, 256>}, {pipeline_mode = #tpu.pipeline_mode<synchronous>, transform_indices = @transform_1, window_bounds = array<i64: 32, 2>}, {pipeline_mode = #tpu.pipeline_mode<synchronous>, transform_indices = @transform_2, window_bounds = array<i64: 2, 32>}, {pipeline_mode = #tpu.pipeline_mode<synchronous>, transform_indices = @transform_3, window_bounds = array<i64: 8, 49>}, {pipeline_mode = #tpu.pipeline_mode<synchronous>, transform_indices = @transform_4, window_bounds = array<i64: 2, 256>}, {transform_indices = @transform_5, window_bounds = array<i64: 4, 32, 256>}]} {
    %c0 = arith.constant 0 : index
    %c0_0 = arith.constant 0 : index
    %c0_1 = arith.constant 0 : index
    %0 = vector.load %arg1[%c0, %c0_0, %c0_1] : memref<4x32x256xf32, #tpu.memory_space<vmem>>, vector<4x32x256xf32>
    %cst = arith.constant dense<0.000000e+00> : vector<4x32xf32>
    %1 = vector.multi_reduction <add>, %0, %cst [2] : vector<4x32x256xf32> to vector<4x32xf32>
    %cst_2 = arith.constant 2.560000e+02 : f32
    %2 = vector.broadcast %cst_2 : f32 to vector<4x32xf32>
    %3 = arith.divf %1, %2 : vector<4x32xf32>
    %cst_3 = arith.constant dense<0xFF800000> : vector<4x32xf32>
    %4 = vector.multi_reduction <maximumf>, %0, %cst_3 [2] : vector<4x32x256xf32> to vector<4x32xf32>
    %5 = tpu.concatenate %3, %4 in 0 : vector<4x32xf32>, vector<4x32xf32> -> vector<8x32xf32>
    %c0_4 = arith.constant 0 : index
    %c0_5 = arith.constant 0 : index
    %6 = vector.load %arg2[%c0_4, %c0_5] : memref<32x2xf32, #tpu.memory_space<vmem>>, vector<32x2xf32>
    %cst_6 = arith.constant dense<0.000000e+00> : vector<8x2xf32>
    %7 = tpu.matmul %5, %6, %cst_6 {dimension_numbers = #tpu.dot_dimension_numbers<[1], [0], [0], [1], [0, 0, 1, 1], [], []>} : vector<8x32xf32>, vector<32x2xf32>, vector<8x2xf32> -> vector<8x2xf32>
    %cst_7 = arith.constant 0.000000e+00 : f32
    %8 = vector.broadcast %cst_7 : f32 to vector<8x2xf32>
    %9 = arith.maximumf %7, %8 : vector<8x2xf32>
    %c0_8 = arith.constant 0 : index
    %c0_9 = arith.constant 0 : index
    %10 = vector.load %arg3[%c0_8, %c0_9] : memref<2x32xf32, #tpu.memory_space<vmem>>, vector<2x32xf32>
    %cst_10 = arith.constant dense<0.000000e+00> : vector<8x32xf32>
    %11 = tpu.matmul %9, %10, %cst_10 {dimension_numbers = #tpu.dot_dimension_numbers<[1], [0], [0], [1], [0, 0, 1, 1], [], []>} : vector<8x2xf32>, vector<2x32xf32>, vector<8x32xf32> -> vector<8x32xf32>
    %12 = vector.extract_strided_slice %11 {offsets = [0, 0], sizes = [4, 32], strides = [1, 1]} : vector<8x32xf32> to vector<4x32xf32>
    %13 = vector.extract_strided_slice %11 {offsets = [4, 0], sizes = [4, 32], strides = [1, 1]} : vector<8x32xf32> to vector<4x32xf32>
    %14 = arith.addf %12, %13 : vector<4x32xf32>
    %15 = arith.negf %14 : vector<4x32xf32>
    %16 = math.exp %15 : vector<4x32xf32>
    %cst_11 = arith.constant 1.000000e+00 : f32
    %17 = vector.broadcast %cst_11 : f32 to vector<4x32xf32>
    %18 = arith.addf %17, %16 : vector<4x32xf32>
    %19 = arith.divf %17, %18 : vector<4x32xf32>
    %20 = vector.shape_cast %19 : vector<4x32xf32> to vector<4x32x1xf32>
    %21 = vector.broadcast %20 : vector<4x32x1xf32> to vector<4x32x256xf32>
    %22 = arith.mulf %0, %21 : vector<4x32x256xf32>
    %cst_12 = arith.constant dense<0.000000e+00> : vector<4x256xf32>
    %23 = vector.multi_reduction <add>, %22, %cst_12 [1] : vector<4x32x256xf32> to vector<4x256xf32>
    %cst_13 = arith.constant 3.200000e+01 : f32
    %24 = vector.broadcast %cst_13 : f32 to vector<4x256xf32>
    %25 = arith.divf %23, %24 : vector<4x256xf32>
    %cst_14 = arith.constant dense<0xFF800000> : vector<4x256xf32>
    %26 = vector.multi_reduction <maximumf>, %22, %cst_14 [1] : vector<4x32x256xf32> to vector<4x256xf32>
    %27 = tpu.concatenate %25, %26 in 0 : vector<4x256xf32>, vector<4x256xf32> -> vector<8x256xf32>
    %c0_15 = arith.constant 0 : index
    %c0_16 = arith.constant 0 : index
    %28 = vector.load %arg5[%c0_15, %c0_16] : memref<2x256xi32, #tpu.memory_space<vmem>>, vector<1x256xi32>
    %c1 = arith.constant 1 : index
    %c0_17 = arith.constant 0 : index
    %29 = vector.load %arg5[%c1, %c0_17] : memref<2x256xi32, #tpu.memory_space<vmem>>, vector<1x256xi32>
    %c0_18 = arith.constant 0 : index
    %c0_19 = arith.constant 0 : index
    %30 = vector.load %arg4[%c0_18, %c0_19] : memref<8x49xf32, #tpu.memory_space<vmem>>, vector<8x49xf32>
    %cst_20 = arith.constant 0.000000e+00 : f32
    %31 = vector.broadcast %cst_20 : f32 to vector<8x256xf32>
    %c51_i32 = arith.constant 51 : i32
    %32 = tpu.dynamic_rotate %27 by %c51_i32 dim 1 : vector<8x256xf32>, i32 -> vector<8x256xf32>
    %c3_i32 = arith.constant 3 : i32
    %33 = vector.broadcast %c3_i32 : i32 to vector<1x256xi32>
    %34 = arith.cmpi sge, %28, %33 : vector<1x256xi32>
    %c19_i32 = arith.constant 19 : i32
    %35 = vector.broadcast %c19_i32 : i32 to vector<1x256xi32>
    %36 = arith.cmpi slt, %28, %35 : vector<1x256xi32>
    %37 = arith.andi %34, %36 : vector<1x256xi1>
    %c3_i32_21 = arith.constant 3 : i32
    %38 = vector.broadcast %c3_i32_21 : i32 to vector<1x256xi32>
    %39 = arith.cmpi sge, %29, %38 : vector<1x256xi32>
    %40 = arith.andi %37, %39 : vector<1x256xi1>
    %c19_i32_22 = arith.constant 19 : i32
    %41 = vector.broadcast %c19_i32_22 : i32 to vector<1x256xi32>
    %42 = arith.cmpi slt, %29, %41 : vector<1x256xi32>
    %43 = arith.andi %40, %42 : vector<1x256xi1>
    %44 = arith.extui %43 : vector<1x256xi1> to vector<1x256xi32>
    %45 = arith.sitofp %44 : vector<1x256xi32> to vector<1x256xf32>
    %46 = vector.extract_strided_slice %30 {offsets = [0, 0], sizes = [8, 1], strides = [1, 1]} : vector<8x49xf32> to vector<8x1xf32>
    %47 = vector.broadcast %46 : vector<8x1xf32> to vector<8x256xf32>
    %48 = vector.broadcast %45 : vector<1x256xf32> to vector<8x256xf32>
    %49 = arith.mulf %47, %48 : vector<8x256xf32>
    %50 = arith.mulf %49, %32 : vector<8x256xf32>
    %51 = arith.addf %31, %50 : vector<8x256xf32>
    %c50_i32 = arith.constant 50 : i32
    %52 = tpu.dynamic_rotate %27 by %c50_i32 dim 1 : vector<8x256xf32>, i32 -> vector<8x256xf32>
    %c3_i32_23 = arith.constant 3 : i32
    %53 = vector.broadcast %c3_i32_23 : i32 to vector<1x256xi32>
    %54 = arith.cmpi sge, %28, %53 : vector<1x256xi32>
    %c19_i32_24 = arith.constant 19 : i32
    %55 = vector.broadcast %c19_i32_24 : i32 to vector<1x256xi32>
    %56 = arith.cmpi slt, %28, %55 : vector<1x256xi32>
    %57 = arith.andi %54, %56 : vector<1x256xi1>
    %c2_i32 = arith.constant 2 : i32
    %58 = vector.broadcast %c2_i32 : i32 to vector<1x256xi32>
    %59 = arith.cmpi sge, %29, %58 : vector<1x256xi32>
    %60 = arith.andi %57, %59 : vector<1x256xi1>
    %c18_i32 = arith.constant 18 : i32
    %61 = vector.broadcast %c18_i32 : i32 to vector<1x256xi32>
    %62 = arith.cmpi slt, %29, %61 : vector<1x256xi32>
    %63 = arith.andi %60, %62 : vector<1x256xi1>
    %64 = arith.extui %63 : vector<1x256xi1> to vector<1x256xi32>
    %65 = arith.sitofp %64 : vector<1x256xi32> to vector<1x256xf32>
    %66 = vector.extract_strided_slice %30 {offsets = [0, 1], sizes = [8, 1], strides = [1, 1]} : vector<8x49xf32> to vector<8x1xf32>
    %67 = vector.broadcast %66 : vector<8x1xf32> to vector<8x256xf32>
    %68 = vector.broadcast %65 : vector<1x256xf32> to vector<8x256xf32>
    %69 = arith.mulf %67, %68 : vector<8x256xf32>
    %70 = arith.mulf %69, %52 : vector<8x256xf32>
    %71 = arith.addf %51, %70 : vector<8x256xf32>
    %c49_i32 = arith.constant 49 : i32
    %72 = tpu.dynamic_rotate %27 by %c49_i32 dim 1 : vector<8x256xf32>, i32 -> vector<8x256xf32>
    %c3_i32_25 = arith.constant 3 : i32
    %73 = vector.broadcast %c3_i32_25 : i32 to vector<1x256xi32>
    %74 = arith.cmpi sge, %28, %73 : vector<1x256xi32>
    %c19_i32_26 = arith.constant 19 : i32
    %75 = vector.broadcast %c19_i32_26 : i32 to vector<1x256xi32>
    %76 = arith.cmpi slt, %28, %75 : vector<1x256xi32>
    %77 = arith.andi %74, %76 : vector<1x256xi1>
    %c1_i32 = arith.constant 1 : i32
    %78 = vector.broadcast %c1_i32 : i32 to vector<1x256xi32>
    %79 = arith.cmpi sge, %29, %78 : vector<1x256xi32>
    %80 = arith.andi %77, %79 : vector<1x256xi1>
    %c17_i32 = arith.constant 17 : i32
    %81 = vector.broadcast %c17_i32 : i32 to vector<1x256xi32>
    %82 = arith.cmpi slt, %29, %81 : vector<1x256xi32>
    %83 = arith.andi %80, %82 : vector<1x256xi1>
    %84 = arith.extui %83 : vector<1x256xi1> to vector<1x256xi32>
    %85 = arith.sitofp %84 : vector<1x256xi32> to vector<1x256xf32>
    %86 = vector.extract_strided_slice %30 {offsets = [0, 2], sizes = [8, 1], strides = [1, 1]} : vector<8x49xf32> to vector<8x1xf32>
    %87 = vector.broadcast %86 : vector<8x1xf32> to vector<8x256xf32>
    %88 = vector.broadcast %85 : vector<1x256xf32> to vector<8x256xf32>
    %89 = arith.mulf %87, %88 : vector<8x256xf32>
    %90 = arith.mulf %89, %72 : vector<8x256xf32>
    %91 = arith.addf %71, %90 : vector<8x256xf32>
    %c48_i32 = arith.constant 48 : i32
    %92 = tpu.dynamic_rotate %27 by %c48_i32 dim 1 : vector<8x256xf32>, i32 -> vector<8x256xf32>
    %c3_i32_27 = arith.constant 3 : i32
    %93 = vector.broadcast %c3_i32_27 : i32 to vector<1x256xi32>
    %94 = arith.cmpi sge, %28, %93 : vector<1x256xi32>
    %c19_i32_28 = arith.constant 19 : i32
    %95 = vector.broadcast %c19_i32_28 : i32 to vector<1x256xi32>
    %96 = arith.cmpi slt, %28, %95 : vector<1x256xi32>
    %97 = arith.andi %94, %96 : vector<1x256xi1>
    %c0_i32 = arith.constant 0 : i32
    %98 = vector.broadcast %c0_i32 : i32 to vector<1x256xi32>
    %99 = arith.cmpi sge, %29, %98 : vector<1x256xi32>
    %100 = arith.andi %97, %99 : vector<1x256xi1>
    %c16_i32 = arith.constant 16 : i32
    %101 = vector.broadcast %c16_i32 : i32 to vector<1x256xi32>
    %102 = arith.cmpi slt, %29, %101 : vector<1x256xi32>
    %103 = arith.andi %100, %102 : vector<1x256xi1>
    %104 = arith.extui %103 : vector<1x256xi1> to vector<1x256xi32>
    %105 = arith.sitofp %104 : vector<1x256xi32> to vector<1x256xf32>
    %106 = vector.extract_strided_slice %30 {offsets = [0, 3], sizes = [8, 1], strides = [1, 1]} : vector<8x49xf32> to vector<8x1xf32>
    %107 = vector.broadcast %106 : vector<8x1xf32> to vector<8x256xf32>
    %108 = vector.broadcast %105 : vector<1x256xf32> to vector<8x256xf32>
    %109 = arith.mulf %107, %108 : vector<8x256xf32>
    %110 = arith.mulf %109, %92 : vector<8x256xf32>
    %111 = arith.addf %91, %110 : vector<8x256xf32>
    %c47_i32 = arith.constant 47 : i32
    %112 = tpu.dynamic_rotate %27 by %c47_i32 dim 1 : vector<8x256xf32>, i32 -> vector<8x256xf32>
    %c3_i32_29 = arith.constant 3 : i32
    %113 = vector.broadcast %c3_i32_29 : i32 to vector<1x256xi32>
    %114 = arith.cmpi sge, %28, %113 : vector<1x256xi32>
    %c19_i32_30 = arith.constant 19 : i32
    %115 = vector.broadcast %c19_i32_30 : i32 to vector<1x256xi32>
    %116 = arith.cmpi slt, %28, %115 : vector<1x256xi32>
    %117 = arith.andi %114, %116 : vector<1x256xi1>
    %c-1_i32 = arith.constant -1 : i32
    %118 = vector.broadcast %c-1_i32 : i32 to vector<1x256xi32>
    %119 = arith.cmpi sge, %29, %118 : vector<1x256xi32>
    %120 = arith.andi %117, %119 : vector<1x256xi1>
    %c15_i32 = arith.constant 15 : i32
    %121 = vector.broadcast %c15_i32 : i32 to vector<1x256xi32>
    %122 = arith.cmpi slt, %29, %121 : vector<1x256xi32>
    %123 = arith.andi %120, %122 : vector<1x256xi1>
    %124 = arith.extui %123 : vector<1x256xi1> to vector<1x256xi32>
    %125 = arith.sitofp %124 : vector<1x256xi32> to vector<1x256xf32>
    %126 = vector.extract_strided_slice %30 {offsets = [0, 4], sizes = [8, 1], strides = [1, 1]} : vector<8x49xf32> to vector<8x1xf32>
    %127 = vector.broadcast %126 : vector<8x1xf32> to vector<8x256xf32>
    %128 = vector.broadcast %125 : vector<1x256xf32> to vector<8x256xf32>
    %129 = arith.mulf %127, %128 : vector<8x256xf32>
    %130 = arith.mulf %129, %112 : vector<8x256xf32>
    %131 = arith.addf %111, %130 : vector<8x256xf32>
    %c46_i32 = arith.constant 46 : i32
    %132 = tpu.dynamic_rotate %27 by %c46_i32 dim 1 : vector<8x256xf32>, i32 -> vector<8x256xf32>
    %c3_i32_31 = arith.constant 3 : i32
    %133 = vector.broadcast %c3_i32_31 : i32 to vector<1x256xi32>
    %134 = arith.cmpi sge, %28, %133 : vector<1x256xi32>
    %c19_i32_32 = arith.constant 19 : i32
    %135 = vector.broadcast %c19_i32_32 : i32 to vector<1x256xi32>
    %136 = arith.cmpi slt, %28, %135 : vector<1x256xi32>
    %137 = arith.andi %134, %136 : vector<1x256xi1>
    %c-2_i32 = arith.constant -2 : i32
    %138 = vector.broadcast %c-2_i32 : i32 to vector<1x256xi32>
    %139 = arith.cmpi sge, %29, %138 : vector<1x256xi32>
    %140 = arith.andi %137, %139 : vector<1x256xi1>
    %c14_i32 = arith.constant 14 : i32
    %141 = vector.broadcast %c14_i32 : i32 to vector<1x256xi32>
    %142 = arith.cmpi slt, %29, %141 : vector<1x256xi32>
    %143 = arith.andi %140, %142 : vector<1x256xi1>
    %144 = arith.extui %143 : vector<1x256xi1> to vector<1x256xi32>
    %145 = arith.sitofp %144 : vector<1x256xi32> to vector<1x256xf32>
    %146 = vector.extract_strided_slice %30 {offsets = [0, 5], sizes = [8, 1], strides = [1, 1]} : vector<8x49xf32> to vector<8x1xf32>
    %147 = vector.broadcast %146 : vector<8x1xf32> to vector<8x256xf32>
    %148 = vector.broadcast %145 : vector<1x256xf32> to vector<8x256xf32>
    %149 = arith.mulf %147, %148 : vector<8x256xf32>
    %150 = arith.mulf %149, %132 : vector<8x256xf32>
    %151 = arith.addf %131, %150 : vector<8x256xf32>
    %c45_i32 = arith.constant 45 : i32
    %152 = tpu.dynamic_rotate %27 by %c45_i32 dim 1 : vector<8x256xf32>, i32 -> vector<8x256xf32>
    %c3_i32_33 = arith.constant 3 : i32
    %153 = vector.broadcast %c3_i32_33 : i32 to vector<1x256xi32>
    %154 = arith.cmpi sge, %28, %153 : vector<1x256xi32>
    %c19_i32_34 = arith.constant 19 : i32
    %155 = vector.broadcast %c19_i32_34 : i32 to vector<1x256xi32>
    %156 = arith.cmpi slt, %28, %155 : vector<1x256xi32>
    %157 = arith.andi %154, %156 : vector<1x256xi1>
    %c-3_i32 = arith.constant -3 : i32
    %158 = vector.broadcast %c-3_i32 : i32 to vector<1x256xi32>
    %159 = arith.cmpi sge, %29, %158 : vector<1x256xi32>
    %160 = arith.andi %157, %159 : vector<1x256xi1>
    %c13_i32 = arith.constant 13 : i32
    %161 = vector.broadcast %c13_i32 : i32 to vector<1x256xi32>
    %162 = arith.cmpi slt, %29, %161 : vector<1x256xi32>
    %163 = arith.andi %160, %162 : vector<1x256xi1>
    %164 = arith.extui %163 : vector<1x256xi1> to vector<1x256xi32>
    %165 = arith.sitofp %164 : vector<1x256xi32> to vector<1x256xf32>
    %166 = vector.extract_strided_slice %30 {offsets = [0, 6], sizes = [8, 1], strides = [1, 1]} : vector<8x49xf32> to vector<8x1xf32>
    %167 = vector.broadcast %166 : vector<8x1xf32> to vector<8x256xf32>
    %168 = vector.broadcast %165 : vector<1x256xf32> to vector<8x256xf32>
    %169 = arith.mulf %167, %168 : vector<8x256xf32>
    %170 = arith.mulf %169, %152 : vector<8x256xf32>
    %171 = arith.addf %151, %170 : vector<8x256xf32>
    %c35_i32 = arith.constant 35 : i32
    %172 = tpu.dynamic_rotate %27 by %c35_i32 dim 1 : vector<8x256xf32>, i32 -> vector<8x256xf32>
    %c2_i32_35 = arith.constant 2 : i32
    %173 = vector.broadcast %c2_i32_35 : i32 to vector<1x256xi32>
    %174 = arith.cmpi sge, %28, %173 : vector<1x256xi32>
    %c18_i32_36 = arith.constant 18 : i32
    %175 = vector.broadcast %c18_i32_36 : i32 to vector<1x256xi32>
    %176 = arith.cmpi slt, %28, %175 : vector<1x256xi32>
    %177 = arith.andi %174, %176 : vector<1x256xi1>
    %c3_i32_37 = arith.constant 3 : i32
    %178 = vector.broadcast %c3_i32_37 : i32 to vector<1x256xi32>
    %179 = arith.cmpi sge, %29, %178 : vector<1x256xi32>
    %180 = arith.andi %177, %179 : vector<1x256xi1>
    %c19_i32_38 = arith.constant 19 : i32
    %181 = vector.broadcast %c19_i32_38 : i32 to vector<1x256xi32>
    %182 = arith.cmpi slt, %29, %181 : vector<1x256xi32>
    %183 = arith.andi %180, %182 : vector<1x256xi1>
    %184 = arith.extui %183 : vector<1x256xi1> to vector<1x256xi32>
    %185 = arith.sitofp %184 : vector<1x256xi32> to vector<1x256xf32>
    %186 = vector.extract_strided_slice %30 {offsets = [0, 7], sizes = [8, 1], strides = [1, 1]} : vector<8x49xf32> to vector<8x1xf32>
    %187 = vector.broadcast %186 : vector<8x1xf32> to vector<8x256xf32>
    %188 = vector.broadcast %185 : vector<1x256xf32> to vector<8x256xf32>
    %189 = arith.mulf %187, %188 : vector<8x256xf32>
    %190 = arith.mulf %189, %172 : vector<8x256xf32>
    %191 = arith.addf %171, %190 : vector<8x256xf32>
    %c34_i32 = arith.constant 34 : i32
    %192 = tpu.dynamic_rotate %27 by %c34_i32 dim 1 : vector<8x256xf32>, i32 -> vector<8x256xf32>
    %c2_i32_39 = arith.constant 2 : i32
    %193 = vector.broadcast %c2_i32_39 : i32 to vector<1x256xi32>
    %194 = arith.cmpi sge, %28, %193 : vector<1x256xi32>
    %c18_i32_40 = arith.constant 18 : i32
    %195 = vector.broadcast %c18_i32_40 : i32 to vector<1x256xi32>
    %196 = arith.cmpi slt, %28, %195 : vector<1x256xi32>
    %197 = arith.andi %194, %196 : vector<1x256xi1>
    %c2_i32_41 = arith.constant 2 : i32
    %198 = vector.broadcast %c2_i32_41 : i32 to vector<1x256xi32>
    %199 = arith.cmpi sge, %29, %198 : vector<1x256xi32>
    %200 = arith.andi %197, %199 : vector<1x256xi1>
    %c18_i32_42 = arith.constant 18 : i32
    %201 = vector.broadcast %c18_i32_42 : i32 to vector<1x256xi32>
    %202 = arith.cmpi slt, %29, %201 : vector<1x256xi32>
    %203 = arith.andi %200, %202 : vector<1x256xi1>
    %204 = arith.extui %203 : vector<1x256xi1> to vector<1x256xi32>
    %205 = arith.sitofp %204 : vector<1x256xi32> to vector<1x256xf32>
    %206 = vector.extract_strided_slice %30 {offsets = [0, 8], sizes = [8, 1], strides = [1, 1]} : vector<8x49xf32> to vector<8x1xf32>
    %207 = vector.broadcast %206 : vector<8x1xf32> to vector<8x256xf32>
    %208 = vector.broadcast %205 : vector<1x256xf32> to vector<8x256xf32>
    %209 = arith.mulf %207, %208 : vector<8x256xf32>
    %210 = arith.mulf %209, %192 : vector<8x256xf32>
    %211 = arith.addf %191, %210 : vector<8x256xf32>
    %c33_i32 = arith.constant 33 : i32
    %212 = tpu.dynamic_rotate %27 by %c33_i32 dim 1 : vector<8x256xf32>, i32 -> vector<8x256xf32>
    %c2_i32_43 = arith.constant 2 : i32
    %213 = vector.broadcast %c2_i32_43 : i32 to vector<1x256xi32>
    %214 = arith.cmpi sge, %28, %213 : vector<1x256xi32>
    %c18_i32_44 = arith.constant 18 : i32
    %215 = vector.broadcast %c18_i32_44 : i32 to vector<1x256xi32>
    %216 = arith.cmpi slt, %28, %215 : vector<1x256xi32>
    %217 = arith.andi %214, %216 : vector<1x256xi1>
    %c1_i32_45 = arith.constant 1 : i32
    %218 = vector.broadcast %c1_i32_45 : i32 to vector<1x256xi32>
    %219 = arith.cmpi sge, %29, %218 : vector<1x256xi32>
    %220 = arith.andi %217, %219 : vector<1x256xi1>
    %c17_i32_46 = arith.constant 17 : i32
    %221 = vector.broadcast %c17_i32_46 : i32 to vector<1x256xi32>
    %222 = arith.cmpi slt, %29, %221 : vector<1x256xi32>
    %223 = arith.andi %220, %222 : vector<1x256xi1>
    %224 = arith.extui %223 : vector<1x256xi1> to vector<1x256xi32>
    %225 = arith.sitofp %224 : vector<1x256xi32> to vector<1x256xf32>
    %226 = vector.extract_strided_slice %30 {offsets = [0, 9], sizes = [8, 1], strides = [1, 1]} : vector<8x49xf32> to vector<8x1xf32>
    %227 = vector.broadcast %226 : vector<8x1xf32> to vector<8x256xf32>
    %228 = vector.broadcast %225 : vector<1x256xf32> to vector<8x256xf32>
    %229 = arith.mulf %227, %228 : vector<8x256xf32>
    %230 = arith.mulf %229, %212 : vector<8x256xf32>
    %231 = arith.addf %211, %230 : vector<8x256xf32>
    %c32_i32 = arith.constant 32 : i32
    %232 = tpu.dynamic_rotate %27 by %c32_i32 dim 1 : vector<8x256xf32>, i32 -> vector<8x256xf32>
    %c2_i32_47 = arith.constant 2 : i32
    %233 = vector.broadcast %c2_i32_47 : i32 to vector<1x256xi32>
    %234 = arith.cmpi sge, %28, %233 : vector<1x256xi32>
    %c18_i32_48 = arith.constant 18 : i32
    %235 = vector.broadcast %c18_i32_48 : i32 to vector<1x256xi32>
    %236 = arith.cmpi slt, %28, %235 : vector<1x256xi32>
    %237 = arith.andi %234, %236 : vector<1x256xi1>
    %c0_i32_49 = arith.constant 0 : i32
    %238 = vector.broadcast %c0_i32_49 : i32 to vector<1x256xi32>
    %239 = arith.cmpi sge, %29, %238 : vector<1x256xi32>
    %240 = arith.andi %237, %239 : vector<1x256xi1>
    %c16_i32_50 = arith.constant 16 : i32
    %241 = vector.broadcast %c16_i32_50 : i32 to vector<1x256xi32>
    %242 = arith.cmpi slt, %29, %241 : vector<1x256xi32>
    %243 = arith.andi %240, %242 : vector<1x256xi1>
    %244 = arith.extui %243 : vector<1x256xi1> to vector<1x256xi32>
    %245 = arith.sitofp %244 : vector<1x256xi32> to vector<1x256xf32>
    %246 = vector.extract_strided_slice %30 {offsets = [0, 10], sizes = [8, 1], strides = [1, 1]} : vector<8x49xf32> to vector<8x1xf32>
    %247 = vector.broadcast %246 : vector<8x1xf32> to vector<8x256xf32>
    %248 = vector.broadcast %245 : vector<1x256xf32> to vector<8x256xf32>
    %249 = arith.mulf %247, %248 : vector<8x256xf32>
    %250 = arith.mulf %249, %232 : vector<8x256xf32>
    %251 = arith.addf %231, %250 : vector<8x256xf32>
    %c31_i32 = arith.constant 31 : i32
    %252 = tpu.dynamic_rotate %27 by %c31_i32 dim 1 : vector<8x256xf32>, i32 -> vector<8x256xf32>
    %c2_i32_51 = arith.constant 2 : i32
    %253 = vector.broadcast %c2_i32_51 : i32 to vector<1x256xi32>
    %254 = arith.cmpi sge, %28, %253 : vector<1x256xi32>
    %c18_i32_52 = arith.constant 18 : i32
    %255 = vector.broadcast %c18_i32_52 : i32 to vector<1x256xi32>
    %256 = arith.cmpi slt, %28, %255 : vector<1x256xi32>
    %257 = arith.andi %254, %256 : vector<1x256xi1>
    %c-1_i32_53 = arith.constant -1 : i32
    %258 = vector.broadcast %c-1_i32_53 : i32 to vector<1x256xi32>
    %259 = arith.cmpi sge, %29, %258 : vector<1x256xi32>
    %260 = arith.andi %257, %259 : vector<1x256xi1>
    %c15_i32_54 = arith.constant 15 : i32
    %261 = vector.broadcast %c15_i32_54 : i32 to vector<1x256xi32>
    %262 = arith.cmpi slt, %29, %261 : vector<1x256xi32>
    %263 = arith.andi %260, %262 : vector<1x256xi1>
    %264 = arith.extui %263 : vector<1x256xi1> to vector<1x256xi32>
    %265 = arith.sitofp %264 : vector<1x256xi32> to vector<1x256xf32>
    %266 = vector.extract_strided_slice %30 {offsets = [0, 11], sizes = [8, 1], strides = [1, 1]} : vector<8x49xf32> to vector<8x1xf32>
    %267 = vector.broadcast %266 : vector<8x1xf32> to vector<8x256xf32>
    %268 = vector.broadcast %265 : vector<1x256xf32> to vector<8x256xf32>
    %269 = arith.mulf %267, %268 : vector<8x256xf32>
    %270 = arith.mulf %269, %252 : vector<8x256xf32>
    %271 = arith.addf %251, %270 : vector<8x256xf32>
    %c30_i32 = arith.constant 30 : i32
    %272 = tpu.dynamic_rotate %27 by %c30_i32 dim 1 : vector<8x256xf32>, i32 -> vector<8x256xf32>
    %c2_i32_55 = arith.constant 2 : i32
    %273 = vector.broadcast %c2_i32_55 : i32 to vector<1x256xi32>
    %274 = arith.cmpi sge, %28, %273 : vector<1x256xi32>
    %c18_i32_56 = arith.constant 18 : i32
    %275 = vector.broadcast %c18_i32_56 : i32 to vector<1x256xi32>
    %276 = arith.cmpi slt, %28, %275 : vector<1x256xi32>
    %277 = arith.andi %274, %276 : vector<1x256xi1>
    %c-2_i32_57 = arith.constant -2 : i32
    %278 = vector.broadcast %c-2_i32_57 : i32 to vector<1x256xi32>
    %279 = arith.cmpi sge, %29, %278 : vector<1x256xi32>
    %280 = arith.andi %277, %279 : vector<1x256xi1>
    %c14_i32_58 = arith.constant 14 : i32
    %281 = vector.broadcast %c14_i32_58 : i32 to vector<1x256xi32>
    %282 = arith.cmpi slt, %29, %281 : vector<1x256xi32>
    %283 = arith.andi %280, %282 : vector<1x256xi1>
    %284 = arith.extui %283 : vector<1x256xi1> to vector<1x256xi32>
    %285 = arith.sitofp %284 : vector<1x256xi32> to vector<1x256xf32>
    %286 = vector.extract_strided_slice %30 {offsets = [0, 12], sizes = [8, 1], strides = [1, 1]} : vector<8x49xf32> to vector<8x1xf32>
    %287 = vector.broadcast %286 : vector<8x1xf32> to vector<8x256xf32>
    %288 = vector.broadcast %285 : vector<1x256xf32> to vector<8x256xf32>
    %289 = arith.mulf %287, %288 : vector<8x256xf32>
    %290 = arith.mulf %289, %272 : vector<8x256xf32>
    %291 = arith.addf %271, %290 : vector<8x256xf32>
    %c29_i32 = arith.constant 29 : i32
    %292 = tpu.dynamic_rotate %27 by %c29_i32 dim 1 : vector<8x256xf32>, i32 -> vector<8x256xf32>
    %c2_i32_59 = arith.constant 2 : i32
    %293 = vector.broadcast %c2_i32_59 : i32 to vector<1x256xi32>
    %294 = arith.cmpi sge, %28, %293 : vector<1x256xi32>
    %c18_i32_60 = arith.constant 18 : i32
    %295 = vector.broadcast %c18_i32_60 : i32 to vector<1x256xi32>
    %296 = arith.cmpi slt, %28, %295 : vector<1x256xi32>
    %297 = arith.andi %294, %296 : vector<1x256xi1>
    %c-3_i32_61 = arith.constant -3 : i32
    %298 = vector.broadcast %c-3_i32_61 : i32 to vector<1x256xi32>
    %299 = arith.cmpi sge, %29, %298 : vector<1x256xi32>
    %300 = arith.andi %297, %299 : vector<1x256xi1>
    %c13_i32_62 = arith.constant 13 : i32
    %301 = vector.broadcast %c13_i32_62 : i32 to vector<1x256xi32>
    %302 = arith.cmpi slt, %29, %301 : vector<1x256xi32>
    %303 = arith.andi %300, %302 : vector<1x256xi1>
    %304 = arith.extui %303 : vector<1x256xi1> to vector<1x256xi32>
    %305 = arith.sitofp %304 : vector<1x256xi32> to vector<1x256xf32>
    %306 = vector.extract_strided_slice %30 {offsets = [0, 13], sizes = [8, 1], strides = [1, 1]} : vector<8x49xf32> to vector<8x1xf32>
    %307 = vector.broadcast %306 : vector<8x1xf32> to vector<8x256xf32>
    %308 = vector.broadcast %305 : vector<1x256xf32> to vector<8x256xf32>
    %309 = arith.mulf %307, %308 : vector<8x256xf32>
    %310 = arith.mulf %309, %292 : vector<8x256xf32>
    %311 = arith.addf %291, %310 : vector<8x256xf32>
    %c19_i32_63 = arith.constant 19 : i32
    %312 = tpu.dynamic_rotate %27 by %c19_i32_63 dim 1 : vector<8x256xf32>, i32 -> vector<8x256xf32>
    %c1_i32_64 = arith.constant 1 : i32
    %313 = vector.broadcast %c1_i32_64 : i32 to vector<1x256xi32>
    %314 = arith.cmpi sge, %28, %313 : vector<1x256xi32>
    %c17_i32_65 = arith.constant 17 : i32
    %315 = vector.broadcast %c17_i32_65 : i32 to vector<1x256xi32>
    %316 = arith.cmpi slt, %28, %315 : vector<1x256xi32>
    %317 = arith.andi %314, %316 : vector<1x256xi1>
    %c3_i32_66 = arith.constant 3 : i32
    %318 = vector.broadcast %c3_i32_66 : i32 to vector<1x256xi32>
    %319 = arith.cmpi sge, %29, %318 : vector<1x256xi32>
    %320 = arith.andi %317, %319 : vector<1x256xi1>
    %c19_i32_67 = arith.constant 19 : i32
    %321 = vector.broadcast %c19_i32_67 : i32 to vector<1x256xi32>
    %322 = arith.cmpi slt, %29, %321 : vector<1x256xi32>
    %323 = arith.andi %320, %322 : vector<1x256xi1>
    %324 = arith.extui %323 : vector<1x256xi1> to vector<1x256xi32>
    %325 = arith.sitofp %324 : vector<1x256xi32> to vector<1x256xf32>
    %326 = vector.extract_strided_slice %30 {offsets = [0, 14], sizes = [8, 1], strides = [1, 1]} : vector<8x49xf32> to vector<8x1xf32>
    %327 = vector.broadcast %326 : vector<8x1xf32> to vector<8x256xf32>
    %328 = vector.broadcast %325 : vector<1x256xf32> to vector<8x256xf32>
    %329 = arith.mulf %327, %328 : vector<8x256xf32>
    %330 = arith.mulf %329, %312 : vector<8x256xf32>
    %331 = arith.addf %311, %330 : vector<8x256xf32>
    %c18_i32_68 = arith.constant 18 : i32
    %332 = tpu.dynamic_rotate %27 by %c18_i32_68 dim 1 : vector<8x256xf32>, i32 -> vector<8x256xf32>
    %c1_i32_69 = arith.constant 1 : i32
    %333 = vector.broadcast %c1_i32_69 : i32 to vector<1x256xi32>
    %334 = arith.cmpi sge, %28, %333 : vector<1x256xi32>
    %c17_i32_70 = arith.constant 17 : i32
    %335 = vector.broadcast %c17_i32_70 : i32 to vector<1x256xi32>
    %336 = arith.cmpi slt, %28, %335 : vector<1x256xi32>
    %337 = arith.andi %334, %336 : vector<1x256xi1>
    %c2_i32_71 = arith.constant 2 : i32
    %338 = vector.broadcast %c2_i32_71 : i32 to vector<1x256xi32>
    %339 = arith.cmpi sge, %29, %338 : vector<1x256xi32>
    %340 = arith.andi %337, %339 : vector<1x256xi1>
    %c18_i32_72 = arith.constant 18 : i32
    %341 = vector.broadcast %c18_i32_72 : i32 to vector<1x256xi32>
    %342 = arith.cmpi slt, %29, %341 : vector<1x256xi32>
    %343 = arith.andi %340, %342 : vector<1x256xi1>
    %344 = arith.extui %343 : vector<1x256xi1> to vector<1x256xi32>
    %345 = arith.sitofp %344 : vector<1x256xi32> to vector<1x256xf32>
    %346 = vector.extract_strided_slice %30 {offsets = [0, 15], sizes = [8, 1], strides = [1, 1]} : vector<8x49xf32> to vector<8x1xf32>
    %347 = vector.broadcast %346 : vector<8x1xf32> to vector<8x256xf32>
    %348 = vector.broadcast %345 : vector<1x256xf32> to vector<8x256xf32>
    %349 = arith.mulf %347, %348 : vector<8x256xf32>
    %350 = arith.mulf %349, %332 : vector<8x256xf32>
    %351 = arith.addf %331, %350 : vector<8x256xf32>
    %c17_i32_73 = arith.constant 17 : i32
    %352 = tpu.dynamic_rotate %27 by %c17_i32_73 dim 1 : vector<8x256xf32>, i32 -> vector<8x256xf32>
    %c1_i32_74 = arith.constant 1 : i32
    %353 = vector.broadcast %c1_i32_74 : i32 to vector<1x256xi32>
    %354 = arith.cmpi sge, %28, %353 : vector<1x256xi32>
    %c17_i32_75 = arith.constant 17 : i32
    %355 = vector.broadcast %c17_i32_75 : i32 to vector<1x256xi32>
    %356 = arith.cmpi slt, %28, %355 : vector<1x256xi32>
    %357 = arith.andi %354, %356 : vector<1x256xi1>
    %c1_i32_76 = arith.constant 1 : i32
    %358 = vector.broadcast %c1_i32_76 : i32 to vector<1x256xi32>
    %359 = arith.cmpi sge, %29, %358 : vector<1x256xi32>
    %360 = arith.andi %357, %359 : vector<1x256xi1>
    %c17_i32_77 = arith.constant 17 : i32
    %361 = vector.broadcast %c17_i32_77 : i32 to vector<1x256xi32>
    %362 = arith.cmpi slt, %29, %361 : vector<1x256xi32>
    %363 = arith.andi %360, %362 : vector<1x256xi1>
    %364 = arith.extui %363 : vector<1x256xi1> to vector<1x256xi32>
    %365 = arith.sitofp %364 : vector<1x256xi32> to vector<1x256xf32>
    %366 = vector.extract_strided_slice %30 {offsets = [0, 16], sizes = [8, 1], strides = [1, 1]} : vector<8x49xf32> to vector<8x1xf32>
    %367 = vector.broadcast %366 : vector<8x1xf32> to vector<8x256xf32>
    %368 = vector.broadcast %365 : vector<1x256xf32> to vector<8x256xf32>
    %369 = arith.mulf %367, %368 : vector<8x256xf32>
    %370 = arith.mulf %369, %352 : vector<8x256xf32>
    %371 = arith.addf %351, %370 : vector<8x256xf32>
    %c16_i32_78 = arith.constant 16 : i32
    %372 = tpu.dynamic_rotate %27 by %c16_i32_78 dim 1 : vector<8x256xf32>, i32 -> vector<8x256xf32>
    %c1_i32_79 = arith.constant 1 : i32
    %373 = vector.broadcast %c1_i32_79 : i32 to vector<1x256xi32>
    %374 = arith.cmpi sge, %28, %373 : vector<1x256xi32>
    %c17_i32_80 = arith.constant 17 : i32
    %375 = vector.broadcast %c17_i32_80 : i32 to vector<1x256xi32>
    %376 = arith.cmpi slt, %28, %375 : vector<1x256xi32>
    %377 = arith.andi %374, %376 : vector<1x256xi1>
    %c0_i32_81 = arith.constant 0 : i32
    %378 = vector.broadcast %c0_i32_81 : i32 to vector<1x256xi32>
    %379 = arith.cmpi sge, %29, %378 : vector<1x256xi32>
    %380 = arith.andi %377, %379 : vector<1x256xi1>
    %c16_i32_82 = arith.constant 16 : i32
    %381 = vector.broadcast %c16_i32_82 : i32 to vector<1x256xi32>
    %382 = arith.cmpi slt, %29, %381 : vector<1x256xi32>
    %383 = arith.andi %380, %382 : vector<1x256xi1>
    %384 = arith.extui %383 : vector<1x256xi1> to vector<1x256xi32>
    %385 = arith.sitofp %384 : vector<1x256xi32> to vector<1x256xf32>
    %386 = vector.extract_strided_slice %30 {offsets = [0, 17], sizes = [8, 1], strides = [1, 1]} : vector<8x49xf32> to vector<8x1xf32>
    %387 = vector.broadcast %386 : vector<8x1xf32> to vector<8x256xf32>
    %388 = vector.broadcast %385 : vector<1x256xf32> to vector<8x256xf32>
    %389 = arith.mulf %387, %388 : vector<8x256xf32>
    %390 = arith.mulf %389, %372 : vector<8x256xf32>
    %391 = arith.addf %371, %390 : vector<8x256xf32>
    %c15_i32_83 = arith.constant 15 : i32
    %392 = tpu.dynamic_rotate %27 by %c15_i32_83 dim 1 : vector<8x256xf32>, i32 -> vector<8x256xf32>
    %c1_i32_84 = arith.constant 1 : i32
    %393 = vector.broadcast %c1_i32_84 : i32 to vector<1x256xi32>
    %394 = arith.cmpi sge, %28, %393 : vector<1x256xi32>
    %c17_i32_85 = arith.constant 17 : i32
    %395 = vector.broadcast %c17_i32_85 : i32 to vector<1x256xi32>
    %396 = arith.cmpi slt, %28, %395 : vector<1x256xi32>
    %397 = arith.andi %394, %396 : vector<1x256xi1>
    %c-1_i32_86 = arith.constant -1 : i32
    %398 = vector.broadcast %c-1_i32_86 : i32 to vector<1x256xi32>
    %399 = arith.cmpi sge, %29, %398 : vector<1x256xi32>
    %400 = arith.andi %397, %399 : vector<1x256xi1>
    %c15_i32_87 = arith.constant 15 : i32
    %401 = vector.broadcast %c15_i32_87 : i32 to vector<1x256xi32>
    %402 = arith.cmpi slt, %29, %401 : vector<1x256xi32>
    %403 = arith.andi %400, %402 : vector<1x256xi1>
    %404 = arith.extui %403 : vector<1x256xi1> to vector<1x256xi32>
    %405 = arith.sitofp %404 : vector<1x256xi32> to vector<1x256xf32>
    %406 = vector.extract_strided_slice %30 {offsets = [0, 18], sizes = [8, 1], strides = [1, 1]} : vector<8x49xf32> to vector<8x1xf32>
    %407 = vector.broadcast %406 : vector<8x1xf32> to vector<8x256xf32>
    %408 = vector.broadcast %405 : vector<1x256xf32> to vector<8x256xf32>
    %409 = arith.mulf %407, %408 : vector<8x256xf32>
    %410 = arith.mulf %409, %392 : vector<8x256xf32>
    %411 = arith.addf %391, %410 : vector<8x256xf32>
    %c14_i32_88 = arith.constant 14 : i32
    %412 = tpu.dynamic_rotate %27 by %c14_i32_88 dim 1 : vector<8x256xf32>, i32 -> vector<8x256xf32>
    %c1_i32_89 = arith.constant 1 : i32
    %413 = vector.broadcast %c1_i32_89 : i32 to vector<1x256xi32>
    %414 = arith.cmpi sge, %28, %413 : vector<1x256xi32>
    %c17_i32_90 = arith.constant 17 : i32
    %415 = vector.broadcast %c17_i32_90 : i32 to vector<1x256xi32>
    %416 = arith.cmpi slt, %28, %415 : vector<1x256xi32>
    %417 = arith.andi %414, %416 : vector<1x256xi1>
    %c-2_i32_91 = arith.constant -2 : i32
    %418 = vector.broadcast %c-2_i32_91 : i32 to vector<1x256xi32>
    %419 = arith.cmpi sge, %29, %418 : vector<1x256xi32>
    %420 = arith.andi %417, %419 : vector<1x256xi1>
    %c14_i32_92 = arith.constant 14 : i32
    %421 = vector.broadcast %c14_i32_92 : i32 to vector<1x256xi32>
    %422 = arith.cmpi slt, %29, %421 : vector<1x256xi32>
    %423 = arith.andi %420, %422 : vector<1x256xi1>
    %424 = arith.extui %423 : vector<1x256xi1> to vector<1x256xi32>
    %425 = arith.sitofp %424 : vector<1x256xi32> to vector<1x256xf32>
    %426 = vector.extract_strided_slice %30 {offsets = [0, 19], sizes = [8, 1], strides = [1, 1]} : vector<8x49xf32> to vector<8x1xf32>
    %427 = vector.broadcast %426 : vector<8x1xf32> to vector<8x256xf32>
    %428 = vector.broadcast %425 : vector<1x256xf32> to vector<8x256xf32>
    %429 = arith.mulf %427, %428 : vector<8x256xf32>
    %430 = arith.mulf %429, %412 : vector<8x256xf32>
    %431 = arith.addf %411, %430 : vector<8x256xf32>
    %c13_i32_93 = arith.constant 13 : i32
    %432 = tpu.dynamic_rotate %27 by %c13_i32_93 dim 1 : vector<8x256xf32>, i32 -> vector<8x256xf32>
    %c1_i32_94 = arith.constant 1 : i32
    %433 = vector.broadcast %c1_i32_94 : i32 to vector<1x256xi32>
    %434 = arith.cmpi sge, %28, %433 : vector<1x256xi32>
    %c17_i32_95 = arith.constant 17 : i32
    %435 = vector.broadcast %c17_i32_95 : i32 to vector<1x256xi32>
    %436 = arith.cmpi slt, %28, %435 : vector<1x256xi32>
    %437 = arith.andi %434, %436 : vector<1x256xi1>
    %c-3_i32_96 = arith.constant -3 : i32
    %438 = vector.broadcast %c-3_i32_96 : i32 to vector<1x256xi32>
    %439 = arith.cmpi sge, %29, %438 : vector<1x256xi32>
    %440 = arith.andi %437, %439 : vector<1x256xi1>
    %c13_i32_97 = arith.constant 13 : i32
    %441 = vector.broadcast %c13_i32_97 : i32 to vector<1x256xi32>
    %442 = arith.cmpi slt, %29, %441 : vector<1x256xi32>
    %443 = arith.andi %440, %442 : vector<1x256xi1>
    %444 = arith.extui %443 : vector<1x256xi1> to vector<1x256xi32>
    %445 = arith.sitofp %444 : vector<1x256xi32> to vector<1x256xf32>
    %446 = vector.extract_strided_slice %30 {offsets = [0, 20], sizes = [8, 1], strides = [1, 1]} : vector<8x49xf32> to vector<8x1xf32>
    %447 = vector.broadcast %446 : vector<8x1xf32> to vector<8x256xf32>
    %448 = vector.broadcast %445 : vector<1x256xf32> to vector<8x256xf32>
    %449 = arith.mulf %447, %448 : vector<8x256xf32>
    %450 = arith.mulf %449, %432 : vector<8x256xf32>
    %451 = arith.addf %431, %450 : vector<8x256xf32>
    %c3_i32_98 = arith.constant 3 : i32
    %452 = tpu.dynamic_rotate %27 by %c3_i32_98 dim 1 : vector<8x256xf32>, i32 -> vector<8x256xf32>
    %c0_i32_99 = arith.constant 0 : i32
    %453 = vector.broadcast %c0_i32_99 : i32 to vector<1x256xi32>
    %454 = arith.cmpi sge, %28, %453 : vector<1x256xi32>
    %c16_i32_100 = arith.constant 16 : i32
    %455 = vector.broadcast %c16_i32_100 : i32 to vector<1x256xi32>
    %456 = arith.cmpi slt, %28, %455 : vector<1x256xi32>
    %457 = arith.andi %454, %456 : vector<1x256xi1>
    %c3_i32_101 = arith.constant 3 : i32
    %458 = vector.broadcast %c3_i32_101 : i32 to vector<1x256xi32>
    %459 = arith.cmpi sge, %29, %458 : vector<1x256xi32>
    %460 = arith.andi %457, %459 : vector<1x256xi1>
    %c19_i32_102 = arith.constant 19 : i32
    %461 = vector.broadcast %c19_i32_102 : i32 to vector<1x256xi32>
    %462 = arith.cmpi slt, %29, %461 : vector<1x256xi32>
    %463 = arith.andi %460, %462 : vector<1x256xi1>
    %464 = arith.extui %463 : vector<1x256xi1> to vector<1x256xi32>
    %465 = arith.sitofp %464 : vector<1x256xi32> to vector<1x256xf32>
    %466 = vector.extract_strided_slice %30 {offsets = [0, 21], sizes = [8, 1], strides = [1, 1]} : vector<8x49xf32> to vector<8x1xf32>
    %467 = vector.broadcast %466 : vector<8x1xf32> to vector<8x256xf32>
    %468 = vector.broadcast %465 : vector<1x256xf32> to vector<8x256xf32>
    %469 = arith.mulf %467, %468 : vector<8x256xf32>
    %470 = arith.mulf %469, %452 : vector<8x256xf32>
    %471 = arith.addf %451, %470 : vector<8x256xf32>
    %c2_i32_103 = arith.constant 2 : i32
    %472 = tpu.dynamic_rotate %27 by %c2_i32_103 dim 1 : vector<8x256xf32>, i32 -> vector<8x256xf32>
    %c0_i32_104 = arith.constant 0 : i32
    %473 = vector.broadcast %c0_i32_104 : i32 to vector<1x256xi32>
    %474 = arith.cmpi sge, %28, %473 : vector<1x256xi32>
    %c16_i32_105 = arith.constant 16 : i32
    %475 = vector.broadcast %c16_i32_105 : i32 to vector<1x256xi32>
    %476 = arith.cmpi slt, %28, %475 : vector<1x256xi32>
    %477 = arith.andi %474, %476 : vector<1x256xi1>
    %c2_i32_106 = arith.constant 2 : i32
    %478 = vector.broadcast %c2_i32_106 : i32 to vector<1x256xi32>
    %479 = arith.cmpi sge, %29, %478 : vector<1x256xi32>
    %480 = arith.andi %477, %479 : vector<1x256xi1>
    %c18_i32_107 = arith.constant 18 : i32
    %481 = vector.broadcast %c18_i32_107 : i32 to vector<1x256xi32>
    %482 = arith.cmpi slt, %29, %481 : vector<1x256xi32>
    %483 = arith.andi %480, %482 : vector<1x256xi1>
    %484 = arith.extui %483 : vector<1x256xi1> to vector<1x256xi32>
    %485 = arith.sitofp %484 : vector<1x256xi32> to vector<1x256xf32>
    %486 = vector.extract_strided_slice %30 {offsets = [0, 22], sizes = [8, 1], strides = [1, 1]} : vector<8x49xf32> to vector<8x1xf32>
    %487 = vector.broadcast %486 : vector<8x1xf32> to vector<8x256xf32>
    %488 = vector.broadcast %485 : vector<1x256xf32> to vector<8x256xf32>
    %489 = arith.mulf %487, %488 : vector<8x256xf32>
    %490 = arith.mulf %489, %472 : vector<8x256xf32>
    %491 = arith.addf %471, %490 : vector<8x256xf32>
    %c1_i32_108 = arith.constant 1 : i32
    %492 = tpu.dynamic_rotate %27 by %c1_i32_108 dim 1 : vector<8x256xf32>, i32 -> vector<8x256xf32>
    %c0_i32_109 = arith.constant 0 : i32
    %493 = vector.broadcast %c0_i32_109 : i32 to vector<1x256xi32>
    %494 = arith.cmpi sge, %28, %493 : vector<1x256xi32>
    %c16_i32_110 = arith.constant 16 : i32
    %495 = vector.broadcast %c16_i32_110 : i32 to vector<1x256xi32>
    %496 = arith.cmpi slt, %28, %495 : vector<1x256xi32>
    %497 = arith.andi %494, %496 : vector<1x256xi1>
    %c1_i32_111 = arith.constant 1 : i32
    %498 = vector.broadcast %c1_i32_111 : i32 to vector<1x256xi32>
    %499 = arith.cmpi sge, %29, %498 : vector<1x256xi32>
    %500 = arith.andi %497, %499 : vector<1x256xi1>
    %c17_i32_112 = arith.constant 17 : i32
    %501 = vector.broadcast %c17_i32_112 : i32 to vector<1x256xi32>
    %502 = arith.cmpi slt, %29, %501 : vector<1x256xi32>
    %503 = arith.andi %500, %502 : vector<1x256xi1>
    %504 = arith.extui %503 : vector<1x256xi1> to vector<1x256xi32>
    %505 = arith.sitofp %504 : vector<1x256xi32> to vector<1x256xf32>
    %506 = vector.extract_strided_slice %30 {offsets = [0, 23], sizes = [8, 1], strides = [1, 1]} : vector<8x49xf32> to vector<8x1xf32>
    %507 = vector.broadcast %506 : vector<8x1xf32> to vector<8x256xf32>
    %508 = vector.broadcast %505 : vector<1x256xf32> to vector<8x256xf32>
    %509 = arith.mulf %507, %508 : vector<8x256xf32>
    %510 = arith.mulf %509, %492 : vector<8x256xf32>
    %511 = arith.addf %491, %510 : vector<8x256xf32>
    %c0_i32_113 = arith.constant 0 : i32
    %512 = vector.broadcast %c0_i32_113 : i32 to vector<1x256xi32>
    %513 = arith.cmpi sge, %28, %512 : vector<1x256xi32>
    %c16_i32_114 = arith.constant 16 : i32
    %514 = vector.broadcast %c16_i32_114 : i32 to vector<1x256xi32>
    %515 = arith.cmpi slt, %28, %514 : vector<1x256xi32>
    %516 = arith.andi %513, %515 : vector<1x256xi1>
    %c0_i32_115 = arith.constant 0 : i32
    %517 = vector.broadcast %c0_i32_115 : i32 to vector<1x256xi32>
    %518 = arith.cmpi sge, %29, %517 : vector<1x256xi32>
    %519 = arith.andi %516, %518 : vector<1x256xi1>
    %c16_i32_116 = arith.constant 16 : i32
    %520 = vector.broadcast %c16_i32_116 : i32 to vector<1x256xi32>
    %521 = arith.cmpi slt, %29, %520 : vector<1x256xi32>
    %522 = arith.andi %519, %521 : vector<1x256xi1>
    %523 = arith.extui %522 : vector<1x256xi1> to vector<1x256xi32>
    %524 = arith.sitofp %523 : vector<1x256xi32> to vector<1x256xf32>
    %525 = vector.extract_strided_slice %30 {offsets = [0, 24], sizes = [8, 1], strides = [1, 1]} : vector<8x49xf32> to vector<8x1xf32>
    %526 = vector.broadcast %525 : vector<8x1xf32> to vector<8x256xf32>
    %527 = vector.broadcast %524 : vector<1x256xf32> to vector<8x256xf32>
    %528 = arith.mulf %526, %527 : vector<8x256xf32>
    %529 = arith.mulf %528, %27 : vector<8x256xf32>
    %530 = arith.addf %511, %529 : vector<8x256xf32>
    %c255_i32 = arith.constant 255 : i32
    %531 = tpu.dynamic_rotate %27 by %c255_i32 dim 1 : vector<8x256xf32>, i32 -> vector<8x256xf32>
    %c0_i32_117 = arith.constant 0 : i32
    %532 = vector.broadcast %c0_i32_117 : i32 to vector<1x256xi32>
    %533 = arith.cmpi sge, %28, %532 : vector<1x256xi32>
    %c16_i32_118 = arith.constant 16 : i32
    %534 = vector.broadcast %c16_i32_118 : i32 to vector<1x256xi32>
    %535 = arith.cmpi slt, %28, %534 : vector<1x256xi32>
    %536 = arith.andi %533, %535 : vector<1x256xi1>
    %c-1_i32_119 = arith.constant -1 : i32
    %537 = vector.broadcast %c-1_i32_119 : i32 to vector<1x256xi32>
    %538 = arith.cmpi sge, %29, %537 : vector<1x256xi32>
    %539 = arith.andi %536, %538 : vector<1x256xi1>
    %c15_i32_120 = arith.constant 15 : i32
    %540 = vector.broadcast %c15_i32_120 : i32 to vector<1x256xi32>
    %541 = arith.cmpi slt, %29, %540 : vector<1x256xi32>
    %542 = arith.andi %539, %541 : vector<1x256xi1>
    %543 = arith.extui %542 : vector<1x256xi1> to vector<1x256xi32>
    %544 = arith.sitofp %543 : vector<1x256xi32> to vector<1x256xf32>
    %545 = vector.extract_strided_slice %30 {offsets = [0, 25], sizes = [8, 1], strides = [1, 1]} : vector<8x49xf32> to vector<8x1xf32>
    %546 = vector.broadcast %545 : vector<8x1xf32> to vector<8x256xf32>
    %547 = vector.broadcast %544 : vector<1x256xf32> to vector<8x256xf32>
    %548 = arith.mulf %546, %547 : vector<8x256xf32>
    %549 = arith.mulf %548, %531 : vector<8x256xf32>
    %550 = arith.addf %530, %549 : vector<8x256xf32>
    %c254_i32 = arith.constant 254 : i32
    %551 = tpu.dynamic_rotate %27 by %c254_i32 dim 1 : vector<8x256xf32>, i32 -> vector<8x256xf32>
    %c0_i32_121 = arith.constant 0 : i32
    %552 = vector.broadcast %c0_i32_121 : i32 to vector<1x256xi32>
    %553 = arith.cmpi sge, %28, %552 : vector<1x256xi32>
    %c16_i32_122 = arith.constant 16 : i32
    %554 = vector.broadcast %c16_i32_122 : i32 to vector<1x256xi32>
    %555 = arith.cmpi slt, %28, %554 : vector<1x256xi32>
    %556 = arith.andi %553, %555 : vector<1x256xi1>
    %c-2_i32_123 = arith.constant -2 : i32
    %557 = vector.broadcast %c-2_i32_123 : i32 to vector<1x256xi32>
    %558 = arith.cmpi sge, %29, %557 : vector<1x256xi32>
    %559 = arith.andi %556, %558 : vector<1x256xi1>
    %c14_i32_124 = arith.constant 14 : i32
    %560 = vector.broadcast %c14_i32_124 : i32 to vector<1x256xi32>
    %561 = arith.cmpi slt, %29, %560 : vector<1x256xi32>
    %562 = arith.andi %559, %561 : vector<1x256xi1>
    %563 = arith.extui %562 : vector<1x256xi1> to vector<1x256xi32>
    %564 = arith.sitofp %563 : vector<1x256xi32> to vector<1x256xf32>
    %565 = vector.extract_strided_slice %30 {offsets = [0, 26], sizes = [8, 1], strides = [1, 1]} : vector<8x49xf32> to vector<8x1xf32>
    %566 = vector.broadcast %565 : vector<8x1xf32> to vector<8x256xf32>
    %567 = vector.broadcast %564 : vector<1x256xf32> to vector<8x256xf32>
    %568 = arith.mulf %566, %567 : vector<8x256xf32>
    %569 = arith.mulf %568, %551 : vector<8x256xf32>
    %570 = arith.addf %550, %569 : vector<8x256xf32>
    %c253_i32 = arith.constant 253 : i32
    %571 = tpu.dynamic_rotate %27 by %c253_i32 dim 1 : vector<8x256xf32>, i32 -> vector<8x256xf32>
    %c0_i32_125 = arith.constant 0 : i32
    %572 = vector.broadcast %c0_i32_125 : i32 to vector<1x256xi32>
    %573 = arith.cmpi sge, %28, %572 : vector<1x256xi32>
    %c16_i32_126 = arith.constant 16 : i32
    %574 = vector.broadcast %c16_i32_126 : i32 to vector<1x256xi32>
    %575 = arith.cmpi slt, %28, %574 : vector<1x256xi32>
    %576 = arith.andi %573, %575 : vector<1x256xi1>
    %c-3_i32_127 = arith.constant -3 : i32
    %577 = vector.broadcast %c-3_i32_127 : i32 to vector<1x256xi32>
    %578 = arith.cmpi sge, %29, %577 : vector<1x256xi32>
    %579 = arith.andi %576, %578 : vector<1x256xi1>
    %c13_i32_128 = arith.constant 13 : i32
    %580 = vector.broadcast %c13_i32_128 : i32 to vector<1x256xi32>
    %581 = arith.cmpi slt, %29, %580 : vector<1x256xi32>
    %582 = arith.andi %579, %581 : vector<1x256xi1>
    %583 = arith.extui %582 : vector<1x256xi1> to vector<1x256xi32>
    %584 = arith.sitofp %583 : vector<1x256xi32> to vector<1x256xf32>
    %585 = vector.extract_strided_slice %30 {offsets = [0, 27], sizes = [8, 1], strides = [1, 1]} : vector<8x49xf32> to vector<8x1xf32>
    %586 = vector.broadcast %585 : vector<8x1xf32> to vector<8x256xf32>
    %587 = vector.broadcast %584 : vector<1x256xf32> to vector<8x256xf32>
    %588 = arith.mulf %586, %587 : vector<8x256xf32>
    %589 = arith.mulf %588, %571 : vector<8x256xf32>
    %590 = arith.addf %570, %589 : vector<8x256xf32>
    %c243_i32 = arith.constant 243 : i32
    %591 = tpu.dynamic_rotate %27 by %c243_i32 dim 1 : vector<8x256xf32>, i32 -> vector<8x256xf32>
    %c-1_i32_129 = arith.constant -1 : i32
    %592 = vector.broadcast %c-1_i32_129 : i32 to vector<1x256xi32>
    %593 = arith.cmpi sge, %28, %592 : vector<1x256xi32>
    %c15_i32_130 = arith.constant 15 : i32
    %594 = vector.broadcast %c15_i32_130 : i32 to vector<1x256xi32>
    %595 = arith.cmpi slt, %28, %594 : vector<1x256xi32>
    %596 = arith.andi %593, %595 : vector<1x256xi1>
    %c3_i32_131 = arith.constant 3 : i32
    %597 = vector.broadcast %c3_i32_131 : i32 to vector<1x256xi32>
    %598 = arith.cmpi sge, %29, %597 : vector<1x256xi32>
    %599 = arith.andi %596, %598 : vector<1x256xi1>
    %c19_i32_132 = arith.constant 19 : i32
    %600 = vector.broadcast %c19_i32_132 : i32 to vector<1x256xi32>
    %601 = arith.cmpi slt, %29, %600 : vector<1x256xi32>
    %602 = arith.andi %599, %601 : vector<1x256xi1>
    %603 = arith.extui %602 : vector<1x256xi1> to vector<1x256xi32>
    %604 = arith.sitofp %603 : vector<1x256xi32> to vector<1x256xf32>
    %605 = vector.extract_strided_slice %30 {offsets = [0, 28], sizes = [8, 1], strides = [1, 1]} : vector<8x49xf32> to vector<8x1xf32>
    %606 = vector.broadcast %605 : vector<8x1xf32> to vector<8x256xf32>
    %607 = vector.broadcast %604 : vector<1x256xf32> to vector<8x256xf32>
    %608 = arith.mulf %606, %607 : vector<8x256xf32>
    %609 = arith.mulf %608, %591 : vector<8x256xf32>
    %610 = arith.addf %590, %609 : vector<8x256xf32>
    %c242_i32 = arith.constant 242 : i32
    %611 = tpu.dynamic_rotate %27 by %c242_i32 dim 1 : vector<8x256xf32>, i32 -> vector<8x256xf32>
    %c-1_i32_133 = arith.constant -1 : i32
    %612 = vector.broadcast %c-1_i32_133 : i32 to vector<1x256xi32>
    %613 = arith.cmpi sge, %28, %612 : vector<1x256xi32>
    %c15_i32_134 = arith.constant 15 : i32
    %614 = vector.broadcast %c15_i32_134 : i32 to vector<1x256xi32>
    %615 = arith.cmpi slt, %28, %614 : vector<1x256xi32>
    %616 = arith.andi %613, %615 : vector<1x256xi1>
    %c2_i32_135 = arith.constant 2 : i32
    %617 = vector.broadcast %c2_i32_135 : i32 to vector<1x256xi32>
    %618 = arith.cmpi sge, %29, %617 : vector<1x256xi32>
    %619 = arith.andi %616, %618 : vector<1x256xi1>
    %c18_i32_136 = arith.constant 18 : i32
    %620 = vector.broadcast %c18_i32_136 : i32 to vector<1x256xi32>
    %621 = arith.cmpi slt, %29, %620 : vector<1x256xi32>
    %622 = arith.andi %619, %621 : vector<1x256xi1>
    %623 = arith.extui %622 : vector<1x256xi1> to vector<1x256xi32>
    %624 = arith.sitofp %623 : vector<1x256xi32> to vector<1x256xf32>
    %625 = vector.extract_strided_slice %30 {offsets = [0, 29], sizes = [8, 1], strides = [1, 1]} : vector<8x49xf32> to vector<8x1xf32>
    %626 = vector.broadcast %625 : vector<8x1xf32> to vector<8x256xf32>
    %627 = vector.broadcast %624 : vector<1x256xf32> to vector<8x256xf32>
    %628 = arith.mulf %626, %627 : vector<8x256xf32>
    %629 = arith.mulf %628, %611 : vector<8x256xf32>
    %630 = arith.addf %610, %629 : vector<8x256xf32>
    %c241_i32 = arith.constant 241 : i32
    %631 = tpu.dynamic_rotate %27 by %c241_i32 dim 1 : vector<8x256xf32>, i32 -> vector<8x256xf32>
    %c-1_i32_137 = arith.constant -1 : i32
    %632 = vector.broadcast %c-1_i32_137 : i32 to vector<1x256xi32>
    %633 = arith.cmpi sge, %28, %632 : vector<1x256xi32>
    %c15_i32_138 = arith.constant 15 : i32
    %634 = vector.broadcast %c15_i32_138 : i32 to vector<1x256xi32>
    %635 = arith.cmpi slt, %28, %634 : vector<1x256xi32>
    %636 = arith.andi %633, %635 : vector<1x256xi1>
    %c1_i32_139 = arith.constant 1 : i32
    %637 = vector.broadcast %c1_i32_139 : i32 to vector<1x256xi32>
    %638 = arith.cmpi sge, %29, %637 : vector<1x256xi32>
    %639 = arith.andi %636, %638 : vector<1x256xi1>
    %c17_i32_140 = arith.constant 17 : i32
    %640 = vector.broadcast %c17_i32_140 : i32 to vector<1x256xi32>
    %641 = arith.cmpi slt, %29, %640 : vector<1x256xi32>
    %642 = arith.andi %639, %641 : vector<1x256xi1>
    %643 = arith.extui %642 : vector<1x256xi1> to vector<1x256xi32>
    %644 = arith.sitofp %643 : vector<1x256xi32> to vector<1x256xf32>
    %645 = vector.extract_strided_slice %30 {offsets = [0, 30], sizes = [8, 1], strides = [1, 1]} : vector<8x49xf32> to vector<8x1xf32>
    %646 = vector.broadcast %645 : vector<8x1xf32> to vector<8x256xf32>
    %647 = vector.broadcast %644 : vector<1x256xf32> to vector<8x256xf32>
    %648 = arith.mulf %646, %647 : vector<8x256xf32>
    %649 = arith.mulf %648, %631 : vector<8x256xf32>
    %650 = arith.addf %630, %649 : vector<8x256xf32>
    %c240_i32 = arith.constant 240 : i32
    %651 = tpu.dynamic_rotate %27 by %c240_i32 dim 1 : vector<8x256xf32>, i32 -> vector<8x256xf32>
    %c-1_i32_141 = arith.constant -1 : i32
    %652 = vector.broadcast %c-1_i32_141 : i32 to vector<1x256xi32>
    %653 = arith.cmpi sge, %28, %652 : vector<1x256xi32>
    %c15_i32_142 = arith.constant 15 : i32
    %654 = vector.broadcast %c15_i32_142 : i32 to vector<1x256xi32>
    %655 = arith.cmpi slt, %28, %654 : vector<1x256xi32>
    %656 = arith.andi %653, %655 : vector<1x256xi1>
    %c0_i32_143 = arith.constant 0 : i32
    %657 = vector.broadcast %c0_i32_143 : i32 to vector<1x256xi32>
    %658 = arith.cmpi sge, %29, %657 : vector<1x256xi32>
    %659 = arith.andi %656, %658 : vector<1x256xi1>
    %c16_i32_144 = arith.constant 16 : i32
    %660 = vector.broadcast %c16_i32_144 : i32 to vector<1x256xi32>
    %661 = arith.cmpi slt, %29, %660 : vector<1x256xi32>
    %662 = arith.andi %659, %661 : vector<1x256xi1>
    %663 = arith.extui %662 : vector<1x256xi1> to vector<1x256xi32>
    %664 = arith.sitofp %663 : vector<1x256xi32> to vector<1x256xf32>
    %665 = vector.extract_strided_slice %30 {offsets = [0, 31], sizes = [8, 1], strides = [1, 1]} : vector<8x49xf32> to vector<8x1xf32>
    %666 = vector.broadcast %665 : vector<8x1xf32> to vector<8x256xf32>
    %667 = vector.broadcast %664 : vector<1x256xf32> to vector<8x256xf32>
    %668 = arith.mulf %666, %667 : vector<8x256xf32>
    %669 = arith.mulf %668, %651 : vector<8x256xf32>
    %670 = arith.addf %650, %669 : vector<8x256xf32>
    %c239_i32 = arith.constant 239 : i32
    %671 = tpu.dynamic_rotate %27 by %c239_i32 dim 1 : vector<8x256xf32>, i32 -> vector<8x256xf32>
    %c-1_i32_145 = arith.constant -1 : i32
    %672 = vector.broadcast %c-1_i32_145 : i32 to vector<1x256xi32>
    %673 = arith.cmpi sge, %28, %672 : vector<1x256xi32>
    %c15_i32_146 = arith.constant 15 : i32
    %674 = vector.broadcast %c15_i32_146 : i32 to vector<1x256xi32>
    %675 = arith.cmpi slt, %28, %674 : vector<1x256xi32>
    %676 = arith.andi %673, %675 : vector<1x256xi1>
    %c-1_i32_147 = arith.constant -1 : i32
    %677 = vector.broadcast %c-1_i32_147 : i32 to vector<1x256xi32>
    %678 = arith.cmpi sge, %29, %677 : vector<1x256xi32>
    %679 = arith.andi %676, %678 : vector<1x256xi1>
    %c15_i32_148 = arith.constant 15 : i32
    %680 = vector.broadcast %c15_i32_148 : i32 to vector<1x256xi32>
    %681 = arith.cmpi slt, %29, %680 : vector<1x256xi32>
    %682 = arith.andi %679, %681 : vector<1x256xi1>
    %683 = arith.extui %682 : vector<1x256xi1> to vector<1x256xi32>
    %684 = arith.sitofp %683 : vector<1x256xi32> to vector<1x256xf32>
    %685 = vector.extract_strided_slice %30 {offsets = [0, 32], sizes = [8, 1], strides = [1, 1]} : vector<8x49xf32> to vector<8x1xf32>
    %686 = vector.broadcast %685 : vector<8x1xf32> to vector<8x256xf32>
    %687 = vector.broadcast %684 : vector<1x256xf32> to vector<8x256xf32>
    %688 = arith.mulf %686, %687 : vector<8x256xf32>
    %689 = arith.mulf %688, %671 : vector<8x256xf32>
    %690 = arith.addf %670, %689 : vector<8x256xf32>
    %c238_i32 = arith.constant 238 : i32
    %691 = tpu.dynamic_rotate %27 by %c238_i32 dim 1 : vector<8x256xf32>, i32 -> vector<8x256xf32>
    %c-1_i32_149 = arith.constant -1 : i32
    %692 = vector.broadcast %c-1_i32_149 : i32 to vector<1x256xi32>
    %693 = arith.cmpi sge, %28, %692 : vector<1x256xi32>
    %c15_i32_150 = arith.constant 15 : i32
    %694 = vector.broadcast %c15_i32_150 : i32 to vector<1x256xi32>
    %695 = arith.cmpi slt, %28, %694 : vector<1x256xi32>
    %696 = arith.andi %693, %695 : vector<1x256xi1>
    %c-2_i32_151 = arith.constant -2 : i32
    %697 = vector.broadcast %c-2_i32_151 : i32 to vector<1x256xi32>
    %698 = arith.cmpi sge, %29, %697 : vector<1x256xi32>
    %699 = arith.andi %696, %698 : vector<1x256xi1>
    %c14_i32_152 = arith.constant 14 : i32
    %700 = vector.broadcast %c14_i32_152 : i32 to vector<1x256xi32>
    %701 = arith.cmpi slt, %29, %700 : vector<1x256xi32>
    %702 = arith.andi %699, %701 : vector<1x256xi1>
    %703 = arith.extui %702 : vector<1x256xi1> to vector<1x256xi32>
    %704 = arith.sitofp %703 : vector<1x256xi32> to vector<1x256xf32>
    %705 = vector.extract_strided_slice %30 {offsets = [0, 33], sizes = [8, 1], strides = [1, 1]} : vector<8x49xf32> to vector<8x1xf32>
    %706 = vector.broadcast %705 : vector<8x1xf32> to vector<8x256xf32>
    %707 = vector.broadcast %704 : vector<1x256xf32> to vector<8x256xf32>
    %708 = arith.mulf %706, %707 : vector<8x256xf32>
    %709 = arith.mulf %708, %691 : vector<8x256xf32>
    %710 = arith.addf %690, %709 : vector<8x256xf32>
    %c237_i32 = arith.constant 237 : i32
    %711 = tpu.dynamic_rotate %27 by %c237_i32 dim 1 : vector<8x256xf32>, i32 -> vector<8x256xf32>
    %c-1_i32_153 = arith.constant -1 : i32
    %712 = vector.broadcast %c-1_i32_153 : i32 to vector<1x256xi32>
    %713 = arith.cmpi sge, %28, %712 : vector<1x256xi32>
    %c15_i32_154 = arith.constant 15 : i32
    %714 = vector.broadcast %c15_i32_154 : i32 to vector<1x256xi32>
    %715 = arith.cmpi slt, %28, %714 : vector<1x256xi32>
    %716 = arith.andi %713, %715 : vector<1x256xi1>
    %c-3_i32_155 = arith.constant -3 : i32
    %717 = vector.broadcast %c-3_i32_155 : i32 to vector<1x256xi32>
    %718 = arith.cmpi sge, %29, %717 : vector<1x256xi32>
    %719 = arith.andi %716, %718 : vector<1x256xi1>
    %c13_i32_156 = arith.constant 13 : i32
    %720 = vector.broadcast %c13_i32_156 : i32 to vector<1x256xi32>
    %721 = arith.cmpi slt, %29, %720 : vector<1x256xi32>
    %722 = arith.andi %719, %721 : vector<1x256xi1>
    %723 = arith.extui %722 : vector<1x256xi1> to vector<1x256xi32>
    %724 = arith.sitofp %723 : vector<1x256xi32> to vector<1x256xf32>
    %725 = vector.extract_strided_slice %30 {offsets = [0, 34], sizes = [8, 1], strides = [1, 1]} : vector<8x49xf32> to vector<8x1xf32>
    %726 = vector.broadcast %725 : vector<8x1xf32> to vector<8x256xf32>
    %727 = vector.broadcast %724 : vector<1x256xf32> to vector<8x256xf32>
    %728 = arith.mulf %726, %727 : vector<8x256xf32>
    %729 = arith.mulf %728, %711 : vector<8x256xf32>
    %730 = arith.addf %710, %729 : vector<8x256xf32>
    %c227_i32 = arith.constant 227 : i32
    %731 = tpu.dynamic_rotate %27 by %c227_i32 dim 1 : vector<8x256xf32>, i32 -> vector<8x256xf32>
    %c-2_i32_157 = arith.constant -2 : i32
    %732 = vector.broadcast %c-2_i32_157 : i32 to vector<1x256xi32>
    %733 = arith.cmpi sge, %28, %732 : vector<1x256xi32>
    %c14_i32_158 = arith.constant 14 : i32
    %734 = vector.broadcast %c14_i32_158 : i32 to vector<1x256xi32>
    %735 = arith.cmpi slt, %28, %734 : vector<1x256xi32>
    %736 = arith.andi %733, %735 : vector<1x256xi1>
    %c3_i32_159 = arith.constant 3 : i32
    %737 = vector.broadcast %c3_i32_159 : i32 to vector<1x256xi32>
    %738 = arith.cmpi sge, %29, %737 : vector<1x256xi32>
    %739 = arith.andi %736, %738 : vector<1x256xi1>
    %c19_i32_160 = arith.constant 19 : i32
    %740 = vector.broadcast %c19_i32_160 : i32 to vector<1x256xi32>
    %741 = arith.cmpi slt, %29, %740 : vector<1x256xi32>
    %742 = arith.andi %739, %741 : vector<1x256xi1>
    %743 = arith.extui %742 : vector<1x256xi1> to vector<1x256xi32>
    %744 = arith.sitofp %743 : vector<1x256xi32> to vector<1x256xf32>
    %745 = vector.extract_strided_slice %30 {offsets = [0, 35], sizes = [8, 1], strides = [1, 1]} : vector<8x49xf32> to vector<8x1xf32>
    %746 = vector.broadcast %745 : vector<8x1xf32> to vector<8x256xf32>
    %747 = vector.broadcast %744 : vector<1x256xf32> to vector<8x256xf32>
    %748 = arith.mulf %746, %747 : vector<8x256xf32>
    %749 = arith.mulf %748, %731 : vector<8x256xf32>
    %750 = arith.addf %730, %749 : vector<8x256xf32>
    %c226_i32 = arith.constant 226 : i32
    %751 = tpu.dynamic_rotate %27 by %c226_i32 dim 1 : vector<8x256xf32>, i32 -> vector<8x256xf32>
    %c-2_i32_161 = arith.constant -2 : i32
    %752 = vector.broadcast %c-2_i32_161 : i32 to vector<1x256xi32>
    %753 = arith.cmpi sge, %28, %752 : vector<1x256xi32>
    %c14_i32_162 = arith.constant 14 : i32
    %754 = vector.broadcast %c14_i32_162 : i32 to vector<1x256xi32>
    %755 = arith.cmpi slt, %28, %754 : vector<1x256xi32>
    %756 = arith.andi %753, %755 : vector<1x256xi1>
    %c2_i32_163 = arith.constant 2 : i32
    %757 = vector.broadcast %c2_i32_163 : i32 to vector<1x256xi32>
    %758 = arith.cmpi sge, %29, %757 : vector<1x256xi32>
    %759 = arith.andi %756, %758 : vector<1x256xi1>
    %c18_i32_164 = arith.constant 18 : i32
    %760 = vector.broadcast %c18_i32_164 : i32 to vector<1x256xi32>
    %761 = arith.cmpi slt, %29, %760 : vector<1x256xi32>
    %762 = arith.andi %759, %761 : vector<1x256xi1>
    %763 = arith.extui %762 : vector<1x256xi1> to vector<1x256xi32>
    %764 = arith.sitofp %763 : vector<1x256xi32> to vector<1x256xf32>
    %765 = vector.extract_strided_slice %30 {offsets = [0, 36], sizes = [8, 1], strides = [1, 1]} : vector<8x49xf32> to vector<8x1xf32>
    %766 = vector.broadcast %765 : vector<8x1xf32> to vector<8x256xf32>
    %767 = vector.broadcast %764 : vector<1x256xf32> to vector<8x256xf32>
    %768 = arith.mulf %766, %767 : vector<8x256xf32>
    %769 = arith.mulf %768, %751 : vector<8x256xf32>
    %770 = arith.addf %750, %769 : vector<8x256xf32>
    %c225_i32 = arith.constant 225 : i32
    %771 = tpu.dynamic_rotate %27 by %c225_i32 dim 1 : vector<8x256xf32>, i32 -> vector<8x256xf32>
    %c-2_i32_165 = arith.constant -2 : i32
    %772 = vector.broadcast %c-2_i32_165 : i32 to vector<1x256xi32>
    %773 = arith.cmpi sge, %28, %772 : vector<1x256xi32>
    %c14_i32_166 = arith.constant 14 : i32
    %774 = vector.broadcast %c14_i32_166 : i32 to vector<1x256xi32>
    %775 = arith.cmpi slt, %28, %774 : vector<1x256xi32>
    %776 = arith.andi %773, %775 : vector<1x256xi1>
    %c1_i32_167 = arith.constant 1 : i32
    %777 = vector.broadcast %c1_i32_167 : i32 to vector<1x256xi32>
    %778 = arith.cmpi sge, %29, %777 : vector<1x256xi32>
    %779 = arith.andi %776, %778 : vector<1x256xi1>
    %c17_i32_168 = arith.constant 17 : i32
    %780 = vector.broadcast %c17_i32_168 : i32 to vector<1x256xi32>
    %781 = arith.cmpi slt, %29, %780 : vector<1x256xi32>
    %782 = arith.andi %779, %781 : vector<1x256xi1>
    %783 = arith.extui %782 : vector<1x256xi1> to vector<1x256xi32>
    %784 = arith.sitofp %783 : vector<1x256xi32> to vector<1x256xf32>
    %785 = vector.extract_strided_slice %30 {offsets = [0, 37], sizes = [8, 1], strides = [1, 1]} : vector<8x49xf32> to vector<8x1xf32>
    %786 = vector.broadcast %785 : vector<8x1xf32> to vector<8x256xf32>
    %787 = vector.broadcast %784 : vector<1x256xf32> to vector<8x256xf32>
    %788 = arith.mulf %786, %787 : vector<8x256xf32>
    %789 = arith.mulf %788, %771 : vector<8x256xf32>
    %790 = arith.addf %770, %789 : vector<8x256xf32>
    %c224_i32 = arith.constant 224 : i32
    %791 = tpu.dynamic_rotate %27 by %c224_i32 dim 1 : vector<8x256xf32>, i32 -> vector<8x256xf32>
    %c-2_i32_169 = arith.constant -2 : i32
    %792 = vector.broadcast %c-2_i32_169 : i32 to vector<1x256xi32>
    %793 = arith.cmpi sge, %28, %792 : vector<1x256xi32>
    %c14_i32_170 = arith.constant 14 : i32
    %794 = vector.broadcast %c14_i32_170 : i32 to vector<1x256xi32>
    %795 = arith.cmpi slt, %28, %794 : vector<1x256xi32>
    %796 = arith.andi %793, %795 : vector<1x256xi1>
    %c0_i32_171 = arith.constant 0 : i32
    %797 = vector.broadcast %c0_i32_171 : i32 to vector<1x256xi32>
    %798 = arith.cmpi sge, %29, %797 : vector<1x256xi32>
    %799 = arith.andi %796, %798 : vector<1x256xi1>
    %c16_i32_172 = arith.constant 16 : i32
    %800 = vector.broadcast %c16_i32_172 : i32 to vector<1x256xi32>
    %801 = arith.cmpi slt, %29, %800 : vector<1x256xi32>
    %802 = arith.andi %799, %801 : vector<1x256xi1>
    %803 = arith.extui %802 : vector<1x256xi1> to vector<1x256xi32>
    %804 = arith.sitofp %803 : vector<1x256xi32> to vector<1x256xf32>
    %805 = vector.extract_strided_slice %30 {offsets = [0, 38], sizes = [8, 1], strides = [1, 1]} : vector<8x49xf32> to vector<8x1xf32>
    %806 = vector.broadcast %805 : vector<8x1xf32> to vector<8x256xf32>
    %807 = vector.broadcast %804 : vector<1x256xf32> to vector<8x256xf32>
    %808 = arith.mulf %806, %807 : vector<8x256xf32>
    %809 = arith.mulf %808, %791 : vector<8x256xf32>
    %810 = arith.addf %790, %809 : vector<8x256xf32>
    %c223_i32 = arith.constant 223 : i32
    %811 = tpu.dynamic_rotate %27 by %c223_i32 dim 1 : vector<8x256xf32>, i32 -> vector<8x256xf32>
    %c-2_i32_173 = arith.constant -2 : i32
    %812 = vector.broadcast %c-2_i32_173 : i32 to vector<1x256xi32>
    %813 = arith.cmpi sge, %28, %812 : vector<1x256xi32>
    %c14_i32_174 = arith.constant 14 : i32
    %814 = vector.broadcast %c14_i32_174 : i32 to vector<1x256xi32>
    %815 = arith.cmpi slt, %28, %814 : vector<1x256xi32>
    %816 = arith.andi %813, %815 : vector<1x256xi1>
    %c-1_i32_175 = arith.constant -1 : i32
    %817 = vector.broadcast %c-1_i32_175 : i32 to vector<1x256xi32>
    %818 = arith.cmpi sge, %29, %817 : vector<1x256xi32>
    %819 = arith.andi %816, %818 : vector<1x256xi1>
    %c15_i32_176 = arith.constant 15 : i32
    %820 = vector.broadcast %c15_i32_176 : i32 to vector<1x256xi32>
    %821 = arith.cmpi slt, %29, %820 : vector<1x256xi32>
    %822 = arith.andi %819, %821 : vector<1x256xi1>
    %823 = arith.extui %822 : vector<1x256xi1> to vector<1x256xi32>
    %824 = arith.sitofp %823 : vector<1x256xi32> to vector<1x256xf32>
    %825 = vector.extract_strided_slice %30 {offsets = [0, 39], sizes = [8, 1], strides = [1, 1]} : vector<8x49xf32> to vector<8x1xf32>
    %826 = vector.broadcast %825 : vector<8x1xf32> to vector<8x256xf32>
    %827 = vector.broadcast %824 : vector<1x256xf32> to vector<8x256xf32>
    %828 = arith.mulf %826, %827 : vector<8x256xf32>
    %829 = arith.mulf %828, %811 : vector<8x256xf32>
    %830 = arith.addf %810, %829 : vector<8x256xf32>
    %c222_i32 = arith.constant 222 : i32
    %831 = tpu.dynamic_rotate %27 by %c222_i32 dim 1 : vector<8x256xf32>, i32 -> vector<8x256xf32>
    %c-2_i32_177 = arith.constant -2 : i32
    %832 = vector.broadcast %c-2_i32_177 : i32 to vector<1x256xi32>
    %833 = arith.cmpi sge, %28, %832 : vector<1x256xi32>
    %c14_i32_178 = arith.constant 14 : i32
    %834 = vector.broadcast %c14_i32_178 : i32 to vector<1x256xi32>
    %835 = arith.cmpi slt, %28, %834 : vector<1x256xi32>
    %836 = arith.andi %833, %835 : vector<1x256xi1>
    %c-2_i32_179 = arith.constant -2 : i32
    %837 = vector.broadcast %c-2_i32_179 : i32 to vector<1x256xi32>
    %838 = arith.cmpi sge, %29, %837 : vector<1x256xi32>
    %839 = arith.andi %836, %838 : vector<1x256xi1>
    %c14_i32_180 = arith.constant 14 : i32
    %840 = vector.broadcast %c14_i32_180 : i32 to vector<1x256xi32>
    %841 = arith.cmpi slt, %29, %840 : vector<1x256xi32>
    %842 = arith.andi %839, %841 : vector<1x256xi1>
    %843 = arith.extui %842 : vector<1x256xi1> to vector<1x256xi32>
    %844 = arith.sitofp %843 : vector<1x256xi32> to vector<1x256xf32>
    %845 = vector.extract_strided_slice %30 {offsets = [0, 40], sizes = [8, 1], strides = [1, 1]} : vector<8x49xf32> to vector<8x1xf32>
    %846 = vector.broadcast %845 : vector<8x1xf32> to vector<8x256xf32>
    %847 = vector.broadcast %844 : vector<1x256xf32> to vector<8x256xf32>
    %848 = arith.mulf %846, %847 : vector<8x256xf32>
    %849 = arith.mulf %848, %831 : vector<8x256xf32>
    %850 = arith.addf %830, %849 : vector<8x256xf32>
    %c221_i32 = arith.constant 221 : i32
    %851 = tpu.dynamic_rotate %27 by %c221_i32 dim 1 : vector<8x256xf32>, i32 -> vector<8x256xf32>
    %c-2_i32_181 = arith.constant -2 : i32
    %852 = vector.broadcast %c-2_i32_181 : i32 to vector<1x256xi32>
    %853 = arith.cmpi sge, %28, %852 : vector<1x256xi32>
    %c14_i32_182 = arith.constant 14 : i32
    %854 = vector.broadcast %c14_i32_182 : i32 to vector<1x256xi32>
    %855 = arith.cmpi slt, %28, %854 : vector<1x256xi32>
    %856 = arith.andi %853, %855 : vector<1x256xi1>
    %c-3_i32_183 = arith.constant -3 : i32
    %857 = vector.broadcast %c-3_i32_183 : i32 to vector<1x256xi32>
    %858 = arith.cmpi sge, %29, %857 : vector<1x256xi32>
    %859 = arith.andi %856, %858 : vector<1x256xi1>
    %c13_i32_184 = arith.constant 13 : i32
    %860 = vector.broadcast %c13_i32_184 : i32 to vector<1x256xi32>
    %861 = arith.cmpi slt, %29, %860 : vector<1x256xi32>
    %862 = arith.andi %859, %861 : vector<1x256xi1>
    %863 = arith.extui %862 : vector<1x256xi1> to vector<1x256xi32>
    %864 = arith.sitofp %863 : vector<1x256xi32> to vector<1x256xf32>
    %865 = vector.extract_strided_slice %30 {offsets = [0, 41], sizes = [8, 1], strides = [1, 1]} : vector<8x49xf32> to vector<8x1xf32>
    %866 = vector.broadcast %865 : vector<8x1xf32> to vector<8x256xf32>
    %867 = vector.broadcast %864 : vector<1x256xf32> to vector<8x256xf32>
    %868 = arith.mulf %866, %867 : vector<8x256xf32>
    %869 = arith.mulf %868, %851 : vector<8x256xf32>
    %870 = arith.addf %850, %869 : vector<8x256xf32>
    %c211_i32 = arith.constant 211 : i32
    %871 = tpu.dynamic_rotate %27 by %c211_i32 dim 1 : vector<8x256xf32>, i32 -> vector<8x256xf32>
    %c-3_i32_185 = arith.constant -3 : i32
    %872 = vector.broadcast %c-3_i32_185 : i32 to vector<1x256xi32>
    %873 = arith.cmpi sge, %28, %872 : vector<1x256xi32>
    %c13_i32_186 = arith.constant 13 : i32
    %874 = vector.broadcast %c13_i32_186 : i32 to vector<1x256xi32>
    %875 = arith.cmpi slt, %28, %874 : vector<1x256xi32>
    %876 = arith.andi %873, %875 : vector<1x256xi1>
    %c3_i32_187 = arith.constant 3 : i32
    %877 = vector.broadcast %c3_i32_187 : i32 to vector<1x256xi32>
    %878 = arith.cmpi sge, %29, %877 : vector<1x256xi32>
    %879 = arith.andi %876, %878 : vector<1x256xi1>
    %c19_i32_188 = arith.constant 19 : i32
    %880 = vector.broadcast %c19_i32_188 : i32 to vector<1x256xi32>
    %881 = arith.cmpi slt, %29, %880 : vector<1x256xi32>
    %882 = arith.andi %879, %881 : vector<1x256xi1>
    %883 = arith.extui %882 : vector<1x256xi1> to vector<1x256xi32>
    %884 = arith.sitofp %883 : vector<1x256xi32> to vector<1x256xf32>
    %885 = vector.extract_strided_slice %30 {offsets = [0, 42], sizes = [8, 1], strides = [1, 1]} : vector<8x49xf32> to vector<8x1xf32>
    %886 = vector.broadcast %885 : vector<8x1xf32> to vector<8x256xf32>
    %887 = vector.broadcast %884 : vector<1x256xf32> to vector<8x256xf32>
    %888 = arith.mulf %886, %887 : vector<8x256xf32>
    %889 = arith.mulf %888, %871 : vector<8x256xf32>
    %890 = arith.addf %870, %889 : vector<8x256xf32>
    %c210_i32 = arith.constant 210 : i32
    %891 = tpu.dynamic_rotate %27 by %c210_i32 dim 1 : vector<8x256xf32>, i32 -> vector<8x256xf32>
    %c-3_i32_189 = arith.constant -3 : i32
    %892 = vector.broadcast %c-3_i32_189 : i32 to vector<1x256xi32>
    %893 = arith.cmpi sge, %28, %892 : vector<1x256xi32>
    %c13_i32_190 = arith.constant 13 : i32
    %894 = vector.broadcast %c13_i32_190 : i32 to vector<1x256xi32>
    %895 = arith.cmpi slt, %28, %894 : vector<1x256xi32>
    %896 = arith.andi %893, %895 : vector<1x256xi1>
    %c2_i32_191 = arith.constant 2 : i32
    %897 = vector.broadcast %c2_i32_191 : i32 to vector<1x256xi32>
    %898 = arith.cmpi sge, %29, %897 : vector<1x256xi32>
    %899 = arith.andi %896, %898 : vector<1x256xi1>
    %c18_i32_192 = arith.constant 18 : i32
    %900 = vector.broadcast %c18_i32_192 : i32 to vector<1x256xi32>
    %901 = arith.cmpi slt, %29, %900 : vector<1x256xi32>
    %902 = arith.andi %899, %901 : vector<1x256xi1>
    %903 = arith.extui %902 : vector<1x256xi1> to vector<1x256xi32>
    %904 = arith.sitofp %903 : vector<1x256xi32> to vector<1x256xf32>
    %905 = vector.extract_strided_slice %30 {offsets = [0, 43], sizes = [8, 1], strides = [1, 1]} : vector<8x49xf32> to vector<8x1xf32>
    %906 = vector.broadcast %905 : vector<8x1xf32> to vector<8x256xf32>
    %907 = vector.broadcast %904 : vector<1x256xf32> to vector<8x256xf32>
    %908 = arith.mulf %906, %907 : vector<8x256xf32>
    %909 = arith.mulf %908, %891 : vector<8x256xf32>
    %910 = arith.addf %890, %909 : vector<8x256xf32>
    %c209_i32 = arith.constant 209 : i32
    %911 = tpu.dynamic_rotate %27 by %c209_i32 dim 1 : vector<8x256xf32>, i32 -> vector<8x256xf32>
    %c-3_i32_193 = arith.constant -3 : i32
    %912 = vector.broadcast %c-3_i32_193 : i32 to vector<1x256xi32>
    %913 = arith.cmpi sge, %28, %912 : vector<1x256xi32>
    %c13_i32_194 = arith.constant 13 : i32
    %914 = vector.broadcast %c13_i32_194 : i32 to vector<1x256xi32>
    %915 = arith.cmpi slt, %28, %914 : vector<1x256xi32>
    %916 = arith.andi %913, %915 : vector<1x256xi1>
    %c1_i32_195 = arith.constant 1 : i32
    %917 = vector.broadcast %c1_i32_195 : i32 to vector<1x256xi32>
    %918 = arith.cmpi sge, %29, %917 : vector<1x256xi32>
    %919 = arith.andi %916, %918 : vector<1x256xi1>
    %c17_i32_196 = arith.constant 17 : i32
    %920 = vector.broadcast %c17_i32_196 : i32 to vector<1x256xi32>
    %921 = arith.cmpi slt, %29, %920 : vector<1x256xi32>
    %922 = arith.andi %919, %921 : vector<1x256xi1>
    %923 = arith.extui %922 : vector<1x256xi1> to vector<1x256xi32>
    %924 = arith.sitofp %923 : vector<1x256xi32> to vector<1x256xf32>
    %925 = vector.extract_strided_slice %30 {offsets = [0, 44], sizes = [8, 1], strides = [1, 1]} : vector<8x49xf32> to vector<8x1xf32>
    %926 = vector.broadcast %925 : vector<8x1xf32> to vector<8x256xf32>
    %927 = vector.broadcast %924 : vector<1x256xf32> to vector<8x256xf32>
    %928 = arith.mulf %926, %927 : vector<8x256xf32>
    %929 = arith.mulf %928, %911 : vector<8x256xf32>
    %930 = arith.addf %910, %929 : vector<8x256xf32>
    %c208_i32 = arith.constant 208 : i32
    %931 = tpu.dynamic_rotate %27 by %c208_i32 dim 1 : vector<8x256xf32>, i32 -> vector<8x256xf32>
    %c-3_i32_197 = arith.constant -3 : i32
    %932 = vector.broadcast %c-3_i32_197 : i32 to vector<1x256xi32>
    %933 = arith.cmpi sge, %28, %932 : vector<1x256xi32>
    %c13_i32_198 = arith.constant 13 : i32
    %934 = vector.broadcast %c13_i32_198 : i32 to vector<1x256xi32>
    %935 = arith.cmpi slt, %28, %934 : vector<1x256xi32>
    %936 = arith.andi %933, %935 : vector<1x256xi1>
    %c0_i32_199 = arith.constant 0 : i32
    %937 = vector.broadcast %c0_i32_199 : i32 to vector<1x256xi32>
    %938 = arith.cmpi sge, %29, %937 : vector<1x256xi32>
    %939 = arith.andi %936, %938 : vector<1x256xi1>
    %c16_i32_200 = arith.constant 16 : i32
    %940 = vector.broadcast %c16_i32_200 : i32 to vector<1x256xi32>
    %941 = arith.cmpi slt, %29, %940 : vector<1x256xi32>
    %942 = arith.andi %939, %941 : vector<1x256xi1>
    %943 = arith.extui %942 : vector<1x256xi1> to vector<1x256xi32>
    %944 = arith.sitofp %943 : vector<1x256xi32> to vector<1x256xf32>
    %945 = vector.extract_strided_slice %30 {offsets = [0, 45], sizes = [8, 1], strides = [1, 1]} : vector<8x49xf32> to vector<8x1xf32>
    %946 = vector.broadcast %945 : vector<8x1xf32> to vector<8x256xf32>
    %947 = vector.broadcast %944 : vector<1x256xf32> to vector<8x256xf32>
    %948 = arith.mulf %946, %947 : vector<8x256xf32>
    %949 = arith.mulf %948, %931 : vector<8x256xf32>
    %950 = arith.addf %930, %949 : vector<8x256xf32>
    %c207_i32 = arith.constant 207 : i32
    %951 = tpu.dynamic_rotate %27 by %c207_i32 dim 1 : vector<8x256xf32>, i32 -> vector<8x256xf32>
    %c-3_i32_201 = arith.constant -3 : i32
    %952 = vector.broadcast %c-3_i32_201 : i32 to vector<1x256xi32>
    %953 = arith.cmpi sge, %28, %952 : vector<1x256xi32>
    %c13_i32_202 = arith.constant 13 : i32
    %954 = vector.broadcast %c13_i32_202 : i32 to vector<1x256xi32>
    %955 = arith.cmpi slt, %28, %954 : vector<1x256xi32>
    %956 = arith.andi %953, %955 : vector<1x256xi1>
    %c-1_i32_203 = arith.constant -1 : i32
    %957 = vector.broadcast %c-1_i32_203 : i32 to vector<1x256xi32>
    %958 = arith.cmpi sge, %29, %957 : vector<1x256xi32>
    %959 = arith.andi %956, %958 : vector<1x256xi1>
    %c15_i32_204 = arith.constant 15 : i32
    %960 = vector.broadcast %c15_i32_204 : i32 to vector<1x256xi32>
    %961 = arith.cmpi slt, %29, %960 : vector<1x256xi32>
    %962 = arith.andi %959, %961 : vector<1x256xi1>
    %963 = arith.extui %962 : vector<1x256xi1> to vector<1x256xi32>
    %964 = arith.sitofp %963 : vector<1x256xi32> to vector<1x256xf32>
    %965 = vector.extract_strided_slice %30 {offsets = [0, 46], sizes = [8, 1], strides = [1, 1]} : vector<8x49xf32> to vector<8x1xf32>
    %966 = vector.broadcast %965 : vector<8x1xf32> to vector<8x256xf32>
    %967 = vector.broadcast %964 : vector<1x256xf32> to vector<8x256xf32>
    %968 = arith.mulf %966, %967 : vector<8x256xf32>
    %969 = arith.mulf %968, %951 : vector<8x256xf32>
    %970 = arith.addf %950, %969 : vector<8x256xf32>
    %c206_i32 = arith.constant 206 : i32
    %971 = tpu.dynamic_rotate %27 by %c206_i32 dim 1 : vector<8x256xf32>, i32 -> vector<8x256xf32>
    %c-3_i32_205 = arith.constant -3 : i32
    %972 = vector.broadcast %c-3_i32_205 : i32 to vector<1x256xi32>
    %973 = arith.cmpi sge, %28, %972 : vector<1x256xi32>
    %c13_i32_206 = arith.constant 13 : i32
    %974 = vector.broadcast %c13_i32_206 : i32 to vector<1x256xi32>
    %975 = arith.cmpi slt, %28, %974 : vector<1x256xi32>
    %976 = arith.andi %973, %975 : vector<1x256xi1>
    %c-2_i32_207 = arith.constant -2 : i32
    %977 = vector.broadcast %c-2_i32_207 : i32 to vector<1x256xi32>
    %978 = arith.cmpi sge, %29, %977 : vector<1x256xi32>
    %979 = arith.andi %976, %978 : vector<1x256xi1>
    %c14_i32_208 = arith.constant 14 : i32
    %980 = vector.broadcast %c14_i32_208 : i32 to vector<1x256xi32>
    %981 = arith.cmpi slt, %29, %980 : vector<1x256xi32>
    %982 = arith.andi %979, %981 : vector<1x256xi1>
    %983 = arith.extui %982 : vector<1x256xi1> to vector<1x256xi32>
    %984 = arith.sitofp %983 : vector<1x256xi32> to vector<1x256xf32>
    %985 = vector.extract_strided_slice %30 {offsets = [0, 47], sizes = [8, 1], strides = [1, 1]} : vector<8x49xf32> to vector<8x1xf32>
    %986 = vector.broadcast %985 : vector<8x1xf32> to vector<8x256xf32>
    %987 = vector.broadcast %984 : vector<1x256xf32> to vector<8x256xf32>
    %988 = arith.mulf %986, %987 : vector<8x256xf32>
    %989 = arith.mulf %988, %971 : vector<8x256xf32>
    %990 = arith.addf %970, %989 : vector<8x256xf32>
    %c205_i32 = arith.constant 205 : i32
    %991 = tpu.dynamic_rotate %27 by %c205_i32 dim 1 : vector<8x256xf32>, i32 -> vector<8x256xf32>
    %c-3_i32_209 = arith.constant -3 : i32
    %992 = vector.broadcast %c-3_i32_209 : i32 to vector<1x256xi32>
    %993 = arith.cmpi sge, %28, %992 : vector<1x256xi32>
    %c13_i32_210 = arith.constant 13 : i32
    %994 = vector.broadcast %c13_i32_210 : i32 to vector<1x256xi32>
    %995 = arith.cmpi slt, %28, %994 : vector<1x256xi32>
    %996 = arith.andi %993, %995 : vector<1x256xi1>
    %c-3_i32_211 = arith.constant -3 : i32
    %997 = vector.broadcast %c-3_i32_211 : i32 to vector<1x256xi32>
    %998 = arith.cmpi sge, %29, %997 : vector<1x256xi32>
    %999 = arith.andi %996, %998 : vector<1x256xi1>
    %c13_i32_212 = arith.constant 13 : i32
    %1000 = vector.broadcast %c13_i32_212 : i32 to vector<1x256xi32>
    %1001 = arith.cmpi slt, %29, %1000 : vector<1x256xi32>
    %1002 = arith.andi %999, %1001 : vector<1x256xi1>
    %1003 = arith.extui %1002 : vector<1x256xi1> to vector<1x256xi32>
    %1004 = arith.sitofp %1003 : vector<1x256xi32> to vector<1x256xf32>
    %1005 = vector.extract_strided_slice %30 {offsets = [0, 48], sizes = [8, 1], strides = [1, 1]} : vector<8x49xf32> to vector<8x1xf32>
    %1006 = vector.broadcast %1005 : vector<8x1xf32> to vector<8x256xf32>
    %1007 = vector.broadcast %1004 : vector<1x256xf32> to vector<8x256xf32>
    %1008 = arith.mulf %1006, %1007 : vector<8x256xf32>
    %1009 = arith.mulf %1008, %991 : vector<8x256xf32>
    %1010 = arith.addf %990, %1009 : vector<8x256xf32>
    %1011 = vector.extract_strided_slice %1010 {offsets = [0, 0], sizes = [4, 256], strides = [1, 1]} : vector<8x256xf32> to vector<4x256xf32>
    %1012 = vector.extract_strided_slice %1010 {offsets = [4, 0], sizes = [4, 256], strides = [1, 1]} : vector<8x256xf32> to vector<4x256xf32>
    %1013 = arith.addf %1011, %1012 : vector<4x256xf32>
    %1014 = arith.negf %1013 : vector<4x256xf32>
    %1015 = math.exp %1014 : vector<4x256xf32>
    %cst_213 = arith.constant 1.000000e+00 : f32
    %1016 = vector.broadcast %cst_213 : f32 to vector<4x256xf32>
    %1017 = arith.addf %1016, %1015 : vector<4x256xf32>
    %1018 = arith.divf %1016, %1017 : vector<4x256xf32>
    %1019 = vector.shape_cast %1018 : vector<4x256xf32> to vector<4x1x256xf32>
    %1020 = vector.broadcast %1019 : vector<4x1x256xf32> to vector<4x32x256xf32>
    %1021 = arith.mulf %22, %1020 : vector<4x32x256xf32>
    %c0_214 = arith.constant 0 : index
    %c0_215 = arith.constant 0 : index
    %c0_216 = arith.constant 0 : index
    %1022 = vector.load %arg6[%c0_214, %c0_215, %c0_216] : memref<4x32x256xf32, #tpu.memory_space<vmem>>, vector<4x32x256xf32>
    tpu.vector_store %arg6[%c0_214, %c0_215, %c0_216], %1021 {strides = array<i32>} : memref<4x32x256xf32, #tpu.memory_space<vmem>>, vector<4x32x256xf32>,
    return
  }
  func.func @transform_0(%arg0: i32) -> (i32, i32, i32) {
    %c0_i32 = arith.constant 0 : i32
    %c0_i32_0 = arith.constant 0 : i32
    %c0_i32_1 = arith.constant 0 : i32
    return %arg0, %c0_i32, %c0_i32_0 : i32, i32, i32
  }
  func.func @transform_1(%arg0: i32) -> (i32, i32) {
    %c0_i32 = arith.constant 0 : i32
    %c0_i32_0 = arith.constant 0 : i32
    %c0_i32_1 = arith.constant 0 : i32
    return %c0_i32, %c0_i32_0 : i32, i32
  }
  func.func @transform_2(%arg0: i32) -> (i32, i32) {
    %c0_i32 = arith.constant 0 : i32
    %c0_i32_0 = arith.constant 0 : i32
    %c0_i32_1 = arith.constant 0 : i32
    return %c0_i32, %c0_i32_0 : i32, i32
  }
  func.func @transform_3(%arg0: i32) -> (i32, i32) {
    %c0_i32 = arith.constant 0 : i32
    %c0_i32_0 = arith.constant 0 : i32
    %c0_i32_1 = arith.constant 0 : i32
    return %c0_i32, %c0_i32_0 : i32, i32
  }
  func.func @transform_4(%arg0: i32) -> (i32, i32) {
    %c0_i32 = arith.constant 0 : i32
    %c0_i32_0 = arith.constant 0 : i32
    %c0_i32_1 = arith.constant 0 : i32
    return %c0_i32, %c0_i32_0 : i32, i32
  }
  func.func @transform_5(%arg0: i32) -> (i32, i32, i32) {
    %c0_i32 = arith.constant 0 : i32
    %c0_i32_0 = arith.constant 0 : i32
    %c0_i32_1 = arith.constant 0 : i32
    return %arg0, %c0_i32, %c0_i32_0 : i32, i32, i32
  }
}

</mosaic_0001>

<llo_original>
// kernel: tpu_custom_call.1
$region0: #{tpu_custom_call.1}
  #allocation0 [shape = 'u32[]', space=smem, size = 0x4, offset = 0x4, fixed_abs, tag = 'smem constant byte address 0x4 - core index']
  #allocation1 [shape = 'u32[144,128]{1,0:T(1,128)}', space=vmem, size = 0x12000, scoped, tag = 'internal scratch']
  %s0 = inlined_call_operand.hbm [shape: f32[8,32,256], index: 0, kind: input, shape index: {}]
  %s1 = inlined_call_operand.vmem [shape: f32[32,2], index: 1, kind: input, shape index: {}]
  %s2 = inlined_call_operand.vmem [shape: f32[2,32], index: 2, kind: input, shape index: {}]
  %s3 = inlined_call_operand.vmem [shape: f32[8,49], index: 3, kind: input, shape index: {}]
  %s4 = inlined_call_operand.vmem [shape: s32[2,256], index: 4, kind: input, shape index: {}]
  %s5 = inlined_call_operand.hbm [shape: f32[8,32,256], index: 5, kind: output, shape index: {}]
  %s6 = sld [smem:[#allocation0]]
  $region57: #{tpu_custom_call.1} parent=0
    _
  %s8 = ssub.s32 1, %s6
  %s9 = scalar_select 0, %s8, %s6
  $region1: #{tpu_custom_call.1} parent=0
    #allocation2 [shape = 'u8[262144]{0}', space=vmem, size = 0x40000, scoped, tag = 'input window, operand 0']
    #allocation3 [shape = 's32[2]{0}', space=sflag, size = 0x8, scoped, tag = 'scoped memory for tpu_custom_call.1']
    #allocation4 [shape = 's32[2]{0}', space=sflag, size = 0x8, scoped, tag = 'scoped memory for tpu_custom_call.1']
    #allocation5 [shape = 'u8[262144]{0}', space=vmem, size = 0x40000, scoped, tag = 'output window, operand 0']
    %10 = vsyncpa [#allocation3], 0
    %s11 = scalar_lea.sflag [#allocation3], 1
    %12 = vsyncpa %s11, 0
    %13 = vsyncpa [#allocation4], 0
    %s14 = scalar_lea.sflag [#allocation4], 1
    %15 = vsyncpa %s14, 0
    loop: start=0, step=1, limit=4
    $region2: #{tpu_custom_call.1} parent=1 // loop_pre_header
      _
    $region3: #{tpu_custom_call.1} parent=1 // loop_header
      %s17 = sphi 0, %s21
      %p18 = scmp.ge.s32.totalorder %s17, 4
      %s27 = sphi 0, %s29
      %s30 = sphi 0, %s27
      %s31 = sphi 0, %s30
      %s47 = sphi 0, %s31
      %s51 = sphi 0, %s51
      %s53 = sphi 0, %s51
      %s54 = sphi 0, %s53
      %s68 = sphi 0, %s54
      %s72 = sphi 0, %s72
      %s74 = sphi 0, %s72
      %s75 = sphi 0, %s74
      %s89 = sphi 0, %s75
      %s93 = sphi 0, %s93
      %s95 = sphi 0, %s93
      %s96 = sphi 0, %s95
      %s110 = sphi 0, %s96
      %s114 = sphi 0, %s114
      %s116 = sphi 0, %s114
      %s117 = sphi 0, %s116
      %s131 = sphi 0, %s117
      %s137 = sphi 0, %s139
      %s140 = sphi 0, %s137
      %s141 = sphi 0, %s140
      %s157 = sphi 0, %s141
    $region4: #{tpu_custom_call.1} parent=1 // loop_header_branch
      %20 = sbr.rel (%p18) target = $region8
    $region5: #{tpu_custom_call.1} parent=1 // loop_body
      %s22 = ssub.s32 %s17, 1
      %s23 = ssub.s32 %s17, 2
      %s24 = sadd.s32 %s17, 1
      %s25 = ssub.s32 %s17, %s24
      %p26 = scmp.eq.s32.totalorder %s25, 0
      %s28 = sadd.s32 %s27, 1
      %s29 = scalar_select %p26, %s27, %s28
      %p32 = pneg %p26
      %p33 = scmp.eq.s32.totalorder %s17, 1
      %p34 = por %p32, %p33
      %p35 = scmp.ne.s32.totalorder %s27, %s30
      %p36 = scmp.eq.s32.totalorder %s17, 0
      %p37 = por %p35, %p36
      %p38 = scmp.ne.s32.totalorder %s27, %s30
      %p39 = scmp.eq.s32.totalorder %s22, 1
      %p40 = por %p38, %p39
      %p41 = scmp.ne.s32.totalorder %s30, %s31
      %p42 = scmp.eq.s32.totalorder %s22, 0
      %p43 = por %p41, %p42
      %p44 = scmp.ne.s32.totalorder %s30, %s31
      %p45 = scmp.eq.s32.totalorder %s23, 1
      %p46 = por %p44, %p45
      %p48 = scmp.ne.s32.totalorder %s31, %s47
      %p49 = scmp.eq.s32.totalorder %s23, 0
      %p50 = por %p48, %p49
      %s52 = sadd.s32 %s51, 1
      %p55 = scmp.eq.s32.totalorder %s17, 1
      %p56 = scmp.ne.s32.totalorder %s51, %s53
      %p57 = scmp.eq.s32.totalorder %s17, 0
      %p58 = por %p56, %p57
      %p59 = scmp.ne.s32.totalorder %s51, %s53
      %p60 = scmp.eq.s32.totalorder %s22, 1
      %p61 = por %p59, %p60
      %p62 = scmp.ne.s32.totalorder %s53, %s54
      %p63 = scmp.eq.s32.totalorder %s22, 0
      %p64 = por %p62, %p63
      %p65 = scmp.ne.s32.totalorder %s53, %s54
      %p66 = scmp.eq.s32.totalorder %s23, 1
      %p67 = por %p65, %p66
      %p69 = scmp.ne.s32.totalorder %s54, %s68
      %p70 = scmp.eq.s32.totalorder %s23, 0
      %p71 = por %p69, %p70
      %s73 = sadd.s32 %s72, 1
      %p76 = scmp.eq.s32.totalorder %s17, 1
      %p77 = scmp.ne.s32.totalorder %s72, %s74
      %p78 = scmp.eq.s32.totalorder %s17, 0
      %p79 = por %p77, %p78
      %p80 = scmp.ne.s32.totalorder %s72, %s74
      %p81 = scmp.eq.s32.totalorder %s22, 1
      %p82 = por %p80, %p81
      %p83 = scmp.ne.s32.totalorder %s74, %s75
      %p84 = scmp.eq.s32.totalorder %s22, 0
      %p85 = por %p83, %p84
      %p86 = scmp.ne.s32.totalorder %s74, %s75
      %p87 = scmp.eq.s32.totalorder %s23, 1
      %p88 = por %p86, %p87
      %p90 = scmp.ne.s32.totalorder %s75, %s89
      %p91 = scmp.eq.s32.totalorder %s23, 0
      %p92 = por %p90, %p91
      %s94 = sadd.s32 %s93, 1
      %p97 = scmp.eq.s32.totalorder %s17, 1
      %p98 = scmp.ne.s32.totalorder %s93, %s95
      %p99 = scmp.eq.s32.totalorder %s17, 0
      %p100 = por %p98, %p99
      %p101 = scmp.ne.s32.totalorder %s93, %s95
      %p102 = scmp.eq.s32.totalorder %s22, 1
      %p103 = por %p101, %p102
      %p104 = scmp.ne.s32.totalorder %s95, %s96
      %p105 = scmp.eq.s32.totalorder %s22, 0
      %p106 = por %p104, %p105
      %p107 = scmp.ne.s32.totalorder %s95, %s96
      %p108 = scmp.eq.s32.totalorder %s23, 1
      %p109 = por %p107, %p108
      %p111 = scmp.ne.s32.totalorder %s96, %s110
      %p112 = scmp.eq.s32.totalorder %s23, 0
      %p113 = por %p111, %p112
      %s115 = sadd.s32 %s114, 1
      %p118 = scmp.eq.s32.totalorder %s17, 1
      %p119 = scmp.ne.s32.totalorder %s114, %s116
      %p120 = scmp.eq.s32.totalorder %s17, 0
      %p121 = por %p119, %p120
      %p122 = scmp.ne.s32.totalorder %s114, %s116
      %p123 = scmp.eq.s32.totalorder %s22, 1
      %p124 = por %p122, %p123
      %p125 = scmp.ne.s32.totalorder %s116, %s117
      %p126 = scmp.eq.s32.totalorder %s22, 0
      %p127 = por %p125, %p126
      %p128 = scmp.ne.s32.totalorder %s116, %s117
      %p129 = scmp.eq.s32.totalorder %s23, 1
      %p130 = por %p128, %p129
      %p132 = scmp.ne.s32.totalorder %s117, %s131
      %p133 = scmp.eq.s32.totalorder %s23, 0
      %p134 = por %p132, %p133
      %s135 = ssub.s32 %s17, %s24
      %p136 = scmp.eq.s32.totalorder %s135, 0
      %s138 = sadd.s32 %s137, 1
      %s139 = scalar_select %p136, %s137, %s138
      %p142 = pneg %p136
      %p143 = scmp.eq.s32.totalorder %s17, 1
      %p144 = por %p142, %p143
      %p145 = scmp.ne.s32.totalorder %s137, %s140
      %p146 = scmp.eq.s32.totalorder %s17, 0
      %p147 = por %p145, %p146
      %p148 = scmp.ne.s32.totalorder %s137, %s140
      %p149 = scmp.eq.s32.totalorder %s22, 1
      %p150 = por %p148, %p149
      %p151 = scmp.ne.s32.totalorder %s140, %s141
      %p152 = scmp.eq.s32.totalorder %s22, 0
      %p153 = por %p151, %p152
      %p154 = scmp.ne.s32.totalorder %s140, %s141
      %p155 = scmp.eq.s32.totalorder %s23, 1
      %p156 = por %p154, %p155
      %p158 = scmp.ne.s32.totalorder %s141, %s157
      %p159 = scmp.eq.s32.totalorder %s23, 0
      %p160 = por %p158, %p159
      %p161 = scmp.le.s32.totalorder 1, %s17
      %p162 = scmp.lt.s32.totalorder %s17, 3
      %p163 = pnand %p161, %p162
      %p164 = pneg %p163
      // Predicated region
      $region9: #{tpu_custom_call.1} parent=5 // pred_check
        _
      $region10: #{tpu_custom_call.1} parent=5 // pred_check_branch
        %166 = sbr.rel (%p163) target = $region12
      $region11: #{tpu_custom_call.1} parent=5 // pred_region
        %s167 = ssub.s32 %s17, 1
        // Predicated region
        $region13: #{tpu_custom_call.1} parent=11 // pred_check
          %p168 = pneg %p64
        $region14: #{tpu_custom_call.1} parent=11 // pred_check_branch
          %170 = sbr.rel (%p168) target = $region16
        $region15: #{tpu_custom_call.1} parent=11 // pred_region
          _
        $region16: #{tpu_custom_call.1} parent=11 // pred_fallthru
          _
        // Predicated region
        $region17: #{tpu_custom_call.1} parent=11 // pred_check
          %p171 = pneg %p85
        $region18: #{tpu_custom_call.1} parent=11 // pred_check_branch
          %173 = sbr.rel (%p171) target = $region20
        $region19: #{tpu_custom_call.1} parent=11 // pred_region
          _
        $region20: #{tpu_custom_call.1} parent=11 // pred_fallthru
          _
        // Predicated region
        $region21: #{tpu_custom_call.1} parent=11 // pred_check
          %p174 = pneg %p106
        $region22: #{tpu_custom_call.1} parent=11 // pred_check_branch
          %176 = sbr.rel (%p174) target = $region24
        $region23: #{tpu_custom_call.1} parent=11 // pred_region
          _
        $region24: #{tpu_custom_call.1} parent=11 // pred_fallthru
          _
        // Predicated region
        $region25: #{tpu_custom_call.1} parent=11 // pred_check
          %p177 = pneg %p127
        $region26: #{tpu_custom_call.1} parent=11 // pred_check_branch
          %179 = sbr.rel (%p177) target = $region28
        $region27: #{tpu_custom_call.1} parent=11 // pred_region
          _
        $region28: #{tpu_custom_call.1} parent=11 // pred_fallthru
          _
      $region12: #{tpu_custom_call.1} parent=5 // pred_fallthru
        _
      %p180 = scmp.lt.s32.totalorder %s17, 2
      // Predicated region
      $region29: #{tpu_custom_call.1} parent=5 // pred_check
        %p181 = pneg %p180
      $region30: #{tpu_custom_call.1} parent=5 // pred_check_branch
        %183 = sbr.rel (%p181) target = $region32
      $region31: #{tpu_custom_call.1} parent=5 // pred_region
        // Predicated region
        $region33: #{tpu_custom_call.1} parent=31 // pred_check
          %p184 = pneg %p37
        $region34: #{tpu_custom_call.1} parent=31 // pred_check_branch
          %186 = sbr.rel (%p184) target = $region36
        $region35: #{tpu_custom_call.1} parent=31 // pred_region
          %s187 = sand.u32 %s27, 1
          %s188 = scalar_lea.sflag [#allocation3], %s187
          %s189 = sand.u32 %s27, 1
          %s190 = smul.addr %s189, 256
          %s191 = scalar_lea.vmem [#allocation2], %s190
          %s192 = smul.u32 4, %s17
          %s194 = ssub.s32 4096, 4096
          %195 = vsyncadd %s188, %s194
          %s196 = smul.addr %s192, 8
          %s197 = smul.addr %s196, 128
          %s198 = scalar_lea.hbm %s0, %s197
          %s199 = sshll.u32 %s191, 4
          %s200 = int_to_ptr.vmem [resolvable:$true] %s199
          %205 = dma.hbm_to_vmem [thread:$0]  %s198, 4096, %s200, %s188, 256, 256, 16
        $region36: #{tpu_custom_call.1} parent=31 // pred_fallthru
          _
      $region32: #{tpu_custom_call.1} parent=5 // pred_fallthru
        _
      %p206 = scmp.le.s32.totalorder 1, %s17
      %p207 = scmp.lt.s32.totalorder %s17, 3
      %p208 = pnand %p206, %p207
      %p209 = pneg %p208
      // Predicated region
      $region37: #{tpu_custom_call.1} parent=5 // pred_check
        _
      $region38: #{tpu_custom_call.1} parent=5 // pred_check_branch
        %211 = sbr.rel (%p208) target = $region40
      $region39: #{tpu_custom_call.1} parent=5 // pred_region
        %s212 = ssub.s32 %s17, 1
        %s213 = sand.u32 %s30, 1
        %s214 = scalar_lea.sflag [#allocation3], %s213
        %s215 = sand.u32 %s30, 1
        %s216 = smul.addr %s215, 256
        %s217 = scalar_lea.vmem [#allocation2], %s216
        // Predicated region
        $region41: #{tpu_custom_call.1} parent=39 // pred_check
          %p218 = pneg %p43
        $region42: #{tpu_custom_call.1} parent=39 // pred_check_branch
          %220 = sbr.rel (%p218) target = $region44
        $region43: #{tpu_custom_call.1} parent=39 // pred_region
          %221 = dma.done %s214, 4096
        $region44: #{tpu_custom_call.1} parent=39 // pred_fallthru
          _
        %s222 = sand.u32 %s30, 1
        %s223 = scalar_lea.sflag [#allocation3], %s222
        %s224 = sand.u32 %s30, 1
        %s225 = smul.addr %s224, 256
        %s226 = scalar_lea.vmem [#allocation2], %s225
        %p227 = pneg %p43
        %p228 = pneg %p40
        %p229 = pneg %p64
        %p230 = pneg %p61
        %p231 = pneg %p85
        %p232 = pneg %p82
        %p233 = pneg %p106
        %p234 = pneg %p103
        %p235 = pneg %p127
        %p236 = pneg %p124
        %p237 = pneg %p153
        %p238 = pneg %p150
        %s239 = sand.u32 %s140, 1
        %s240 = scalar_lea.sflag [#allocation4], %s239
        %s241 = sand.u32 %s140, 1
        %s242 = smul.addr %s241, 256
        %s243 = scalar_lea.vmem [#allocation5], %s242
        %s244 = smul.u32 4, %s22
        %s245 = smul.u32 4, %s22
        %v246 = vld [vmem:[%s217] sm:$0xff]
        %v247 = vld [vmem:[%s217 + $0x8] sm:$0xff]
        %v248 = vld [vmem:[%s217 + $0x10] sm:$0xff]
        %v249 = vld [vmem:[%s217 + $0x18] sm:$0xff]
        %v250 = vld [vmem:[%s217 + $0x20] sm:$0xff]
        %v251 = vld [vmem:[%s217 + $0x28] sm:$0xff]
        %v252 = vld [vmem:[%s217 + $0x30] sm:$0xff]
        %v253 = vld [vmem:[%s217 + $0x38] sm:$0xff]
        %v254 = vld [vmem:[%s217 + $0x40] sm:$0xff]
        %v255 = vld [vmem:[%s217 + $0x48] sm:$0xff]
        %v256 = vld [vmem:[%s217 + $0x50] sm:$0xff]
        %v257 = vld [vmem:[%s217 + $0x58] sm:$0xff]
        %v258 = vld [vmem:[%s217 + $0x60] sm:$0xff]
        %v259 = vld [vmem:[%s217 + $0x68] sm:$0xff]
        %v260 = vld [vmem:[%s217 + $0x70] sm:$0xff]
        %v261 = vld [vmem:[%s217 + $0x78] sm:$0xff]
        %v262 = vld [vmem:[%s217 + $0x80] sm:$0xff]
        %v263 = vld [vmem:[%s217 + $0x88] sm:$0xff]
        %v264 = vld [vmem:[%s217 + $0x90] sm:$0xff]
        %v265 = vld [vmem:[%s217 + $0x98] sm:$0xff]
        %v266 = vld [vmem:[%s217 + $0xa0] sm:$0xff]
        %v267 = vld [vmem:[%s217 + $0xa8] sm:$0xff]
        %v268 = vld [vmem:[%s217 + $0xb0] sm:$0xff]
        %v269 = vld [vmem:[%s217 + $0xb8] sm:$0xff]
        %v270 = vld [vmem:[%s217 + $0xc0] sm:$0xff]
        %v271 = vld [vmem:[%s217 + $0xc8] sm:$0xff]
        %v272 = vld [vmem:[%s217 + $0xd0] sm:$0xff]
        %v273 = vld [vmem:[%s217 + $0xd8] sm:$0xff]
        %v274 = vld [vmem:[%s217 + $0xe0] sm:$0xff]
        %v275 = vld [vmem:[%s217 + $0xe8] sm:$0xff]
        %v276 = vld [vmem:[%s217 + $0xf0] sm:$0xff]
        %v277 = vld [vmem:[%s217 + $0xf8] sm:$0xff]
        %v278 = vadd.f32 %v246, %v247
        %279 = vadd.xlane.f32.xlu0 %v278
        %v280 = vpop.xlane.xlu0 %279
        %v281 = vadd.f32 %v248, %v249
        %282 = vadd.xlane.f32.xlu0 %v281
        %v283 = vpop.xlane.xlu0 %282
        %v284 = vadd.f32 %v250, %v251
        %285 = vadd.xlane.f32.xlu0 %v284
        %v286 = vpop.xlane.xlu0 %285
        %v287 = vadd.f32 %v252, %v253
        %288 = vadd.xlane.f32.xlu0 %v287
        %v289 = vpop.xlane.xlu0 %288
        %v290 = vadd.f32 %v254, %v255
        %291 = vadd.xlane.f32.xlu0 %v290
        %v292 = vpop.xlane.xlu0 %291
        %v293 = vadd.f32 %v256, %v257
        %294 = vadd.xlane.f32.xlu0 %v293
        %v295 = vpop.xlane.xlu0 %294
        %v296 = vadd.f32 %v258, %v259
        %297 = vadd.xlane.f32.xlu0 %v296
        %v298 = vpop.xlane.xlu0 %297
        %v299 = vadd.f32 %v260, %v261
        %300 = vadd.xlane.f32.xlu0 %v299
        %v301 = vpop.xlane.xlu0 %300
        %v302 = vadd.f32 %v262, %v263
        %303 = vadd.xlane.f32.xlu0 %v302
        %v304 = vpop.xlane.xlu0 %303
        %v305 = vadd.f32 %v264, %v265
        %306 = vadd.xlane.f32.xlu0 %v305
        %v307 = vpop.xlane.xlu0 %306
        %v308 = vadd.f32 %v266, %v267
        %309 = vadd.xlane.f32.xlu0 %v308
        %v310 = vpop.xlane.xlu0 %309
        %v311 = vadd.f32 %v268, %v269
        %312 = vadd.xlane.f32.xlu0 %v311
        %v313 = vpop.xlane.xlu0 %312
        %v314 = vadd.f32 %v270, %v271
        %315 = vadd.xlane.f32.xlu0 %v314
        %v316 = vpop.xlane.xlu0 %315
        %v317 = vadd.f32 %v272, %v273
        %318 = vadd.xlane.f32.xlu0 %v317
        %v319 = vpop.xlane.xlu0 %318
        %v320 = vadd.f32 %v274, %v275
        %321 = vadd.xlane.f32.xlu0 %v320
        %v322 = vpop.xlane.xlu0 %321
        %v323 = vadd.f32 %v276, %v277
        %324 = vadd.xlane.f32.xlu0 %v323
        %v325 = vpop.xlane.xlu0 %324
        %v326 = vrcp.pop 256.0
        %v327 = vmul.f32 %v280, %v326
        %v328 = vmul.f32 %v283, %v326
        %v329 = vmul.f32 %v286, %v326
        %v330 = vmul.f32 %v289, %v326
        %v331 = vmul.f32 %v292, %v326
        %v332 = vmul.f32 %v295, %v326
        %v333 = vmul.f32 %v298, %v326
        %v334 = vmul.f32 %v301, %v326
        %v335 = vmul.f32 %v304, %v326
        %v336 = vmul.f32 %v307, %v326
        %v337 = vmul.f32 %v310, %v326
        %v338 = vmul.f32 %v313, %v326
        %v339 = vmul.f32 %v316, %v326
        %v340 = vmul.f32 %v319, %v326
        %v341 = vmul.f32 %v322, %v326
        %v342 = vmul.f32 %v325, %v326
        %v343 = vmax.f32 %v246, %v247
        %344 = vmax.xlane.f32.xlu0 %v343
        %v345 = vpop.xlane.xlu0 %344
        %v346 = vmax.f32 %v248, %v249
        %347 = vmax.xlane.f32.xlu0 %v346
        %v348 = vpop.xlane.xlu0 %347
        %v349 = vmax.f32 %v250, %v251
        %350 = vmax.xlane.f32.xlu0 %v349
        %v351 = vpop.xlane.xlu0 %350
        %v352 = vmax.f32 %v252, %v253
        %353 = vmax.xlane.f32.xlu0 %v352
        %v354 = vpop.xlane.xlu0 %353
        %v355 = vmax.f32 %v254, %v255
        %356 = vmax.xlane.f32.xlu0 %v355
        %v357 = vpop.xlane.xlu0 %356
        %v358 = vmax.f32 %v256, %v257
        %359 = vmax.xlane.f32.xlu0 %v358
        %v360 = vpop.xlane.xlu0 %359
        %v361 = vmax.f32 %v258, %v259
        %362 = vmax.xlane.f32.xlu0 %v361
        %v363 = vpop.xlane.xlu0 %362
        %v364 = vmax.f32 %v260, %v261
        %365 = vmax.xlane.f32.xlu0 %v364
        %v366 = vpop.xlane.xlu0 %365
        %v367 = vmax.f32 %v262, %v263
        %368 = vmax.xlane.f32.xlu0 %v367
        %v369 = vpop.xlane.xlu0 %368
        %v370 = vmax.f32 %v264, %v265
        %371 = vmax.xlane.f32.xlu0 %v370
        %v372 = vpop.xlane.xlu0 %371
        %v373 = vmax.f32 %v266, %v267
        %374 = vmax.xlane.f32.xlu0 %v373
        %v375 = vpop.xlane.xlu0 %374
        %v376 = vmax.f32 %v268, %v269
        %377 = vmax.xlane.f32.xlu0 %v376
        %v378 = vpop.xlane.xlu0 %377
        %v379 = vmax.f32 %v270, %v271
        %380 = vmax.xlane.f32.xlu0 %v379
        %v381 = vpop.xlane.xlu0 %380
        %v382 = vmax.f32 %v272, %v273
        %383 = vmax.xlane.f32.xlu0 %v382
        %v384 = vpop.xlane.xlu0 %383
        %v385 = vmax.f32 %v274, %v275
        %386 = vmax.xlane.f32.xlu0 %v385
        %v387 = vpop.xlane.xlu0 %386
        %v388 = vmax.f32 %v276, %v277
        %389 = vmax.xlane.f32.xlu0 %v388
        %v390 = vpop.xlane.xlu0 %389
        %v407 = vlaneseq
        %v408 = vand.u32 %v407, 127
        %v409 = vlaneseq
        %v410 = vshrl.u32 %v409, 7
        %v411 = vsub.s32 %v408, %v410
        %v412 = vrot.slane %v327, %v411
        %v413 = vadd.s32 %v408, 4294967288
        %v414 = vlaneseq
        %v415 = vshrl.u32 %v414, 7
        %v416 = vsub.s32 %v413, %v415
        %v417 = vrot.slane %v328, %v416
        %vm418 = vcmask 130112
        %v419 = vsel %vm418, %v417, %v412
        %v420 = vadd.s32 %v408, 4294967280
        %v421 = vlaneseq
        %v422 = vshrl.u32 %v421, 7
        %v423 = vsub.s32 %v420, %v422
        %v424 = vrot.slane %v329, %v423
        %vm425 = vcmask 195712
        %v426 = vsel %vm425, %v424, %v419
        %v427 = vadd.s32 %v408, 4294967272
        %v428 = vlaneseq
        %v429 = vshrl.u32 %v428, 7
        %v430 = vsub.s32 %v427, %v429
        %v431 = vrot.slane %v330, %v430
        %vm432 = vcmask 261312
        %v433 = vsel %vm432, %v431, %v426
        %v434 = vlaneseq
        %v435 = vshrl.u32 %v434, 7
        %v436 = vsub.s32 %v408, %v435
        %v437 = vrot.slane %v331, %v436
        %v438 = vlaneseq
        %v439 = vshrl.u32 %v438, 7
        %v440 = vsub.s32 %v413, %v439
        %v441 = vrot.slane %v332, %v440
        %v442 = vsel %vm418, %v441, %v437
        %v443 = vlaneseq
        %v444 = vshrl.u32 %v443, 7
        %v445 = vsub.s32 %v420, %v444
        %v446 = vrot.slane %v333, %v445
        %v447 = vsel %vm425, %v446, %v442
        %v448 = vlaneseq
        %v449 = vshrl.u32 %v448, 7
        %v450 = vsub.s32 %v427, %v449
        %v451 = vrot.slane %v334, %v450
        %v452 = vsel %vm432, %v451, %v447
        %v453 = vlaneseq
        %v454 = vshrl.u32 %v453, 7
        %v455 = vsub.s32 %v408, %v454
        %v456 = vrot.slane %v335, %v455
        %v457 = vlaneseq
        %v458 = vshrl.u32 %v457, 7
        %v459 = vsub.s32 %v413, %v458
        %v460 = vrot.slane %v336, %v459
        %v461 = vsel %vm418, %v460, %v456
        %v462 = vlaneseq
        %v463 = vshrl.u32 %v462, 7
        %v464 = vsub.s32 %v420, %v463
        %v465 = vrot.slane %v337, %v464
        %v466 = vsel %vm425, %v465, %v461
        %v467 = vlaneseq
        %v468 = vshrl.u32 %v467, 7
        %v469 = vsub.s32 %v427, %v468
        %v470 = vrot.slane %v338, %v469
        %v471 = vsel %vm432, %v470, %v466
        %v472 = vlaneseq
        %v473 = vshrl.u32 %v472, 7
        %v474 = vsub.s32 %v408, %v473
        %v475 = vrot.slane %v339, %v474
        %v476 = vlaneseq
        %v477 = vshrl.u32 %v476, 7
        %v478 = vsub.s32 %v413, %v477
        %v479 = vrot.slane %v340, %v478
        %v480 = vsel %vm418, %v479, %v475
        %v481 = vlaneseq
        %v482 = vshrl.u32 %v481, 7
        %v483 = vsub.s32 %v420, %v482
        %v484 = vrot.slane %v341, %v483
        %v485 = vsel %vm425, %v484, %v480
        %v486 = vlaneseq
        %v487 = vshrl.u32 %v486, 7
        %v488 = vsub.s32 %v427, %v487
        %v489 = vrot.slane %v342, %v488
        %v490 = vsel %vm432, %v489, %v485
        %vm491 = vcmask 1041409
        %v492 = vsel %vm491, %v452, %v433
        %vm493 = vcmask 1042434
        %v494 = vsel %vm493, %v471, %v492
        %vm495 = vcmask 1043459
        %v496 = vsel %vm495, %v490, %v494
        %v514 = vlaneseq
        %v515 = vshrl.u32 %v514, 7
        %v516 = vsub.s32 %v408, %v515
        %v517 = vrot.slane %v345, %v516
        %v518 = vlaneseq
        %v519 = vshrl.u32 %v518, 7
        %v520 = vsub.s32 %v413, %v519
        %v521 = vrot.slane %v348, %v520
        %v522 = vsel %vm418, %v521, %v517
        %v523 = vlaneseq
        %v524 = vshrl.u32 %v523, 7
        %v525 = vsub.s32 %v420, %v524
        %v526 = vrot.slane %v351, %v525
        %v527 = vsel %vm425, %v526, %v522
        %v528 = vlaneseq
        %v529 = vshrl.u32 %v528, 7
        %v530 = vsub.s32 %v427, %v529
        %v531 = vrot.slane %v354, %v530
        %v532 = vsel %vm432, %v531, %v527
        %v533 = vlaneseq
        %v534 = vshrl.u32 %v533, 7
        %v535 = vsub.s32 %v408, %v534
        %v536 = vrot.slane %v357, %v535
        %v537 = vlaneseq
        %v538 = vshrl.u32 %v537, 7
        %v539 = vsub.s32 %v413, %v538
        %v540 = vrot.slane %v360, %v539
        %v541 = vsel %vm418, %v540, %v536
        %v542 = vlaneseq
        %v543 = vshrl.u32 %v542, 7
        %v544 = vsub.s32 %v420, %v543
        %v545 = vrot.slane %v363, %v544
        %v546 = vsel %vm425, %v545, %v541
        %v547 = vlaneseq
        %v548 = vshrl.u32 %v547, 7
        %v549 = vsub.s32 %v427, %v548
        %v550 = vrot.slane %v366, %v549
        %v551 = vsel %vm432, %v550, %v546
        %v552 = vlaneseq
        %v553 = vshrl.u32 %v552, 7
        %v554 = vsub.s32 %v408, %v553
        %v555 = vrot.slane %v369, %v554
        %v556 = vlaneseq
        %v557 = vshrl.u32 %v556, 7
        %v558 = vsub.s32 %v413, %v557
        %v559 = vrot.slane %v372, %v558
        %v560 = vsel %vm418, %v559, %v555
        %v561 = vlaneseq
        %v562 = vshrl.u32 %v561, 7
        %v563 = vsub.s32 %v420, %v562
        %v564 = vrot.slane %v375, %v563
        %v565 = vsel %vm425, %v564, %v560
        %v566 = vlaneseq
        %v567 = vshrl.u32 %v566, 7
        %v568 = vsub.s32 %v427, %v567
        %v569 = vrot.slane %v378, %v568
        %v570 = vsel %vm432, %v569, %v565
        %v571 = vlaneseq
        %v572 = vshrl.u32 %v571, 7
        %v573 = vsub.s32 %v408, %v572
        %v574 = vrot.slane %v381, %v573
        %v575 = vlaneseq
        %v576 = vshrl.u32 %v575, 7
        %v577 = vsub.s32 %v413, %v576
        %v578 = vrot.slane %v384, %v577
        %v579 = vsel %vm418, %v578, %v574
        %v580 = vlaneseq
        %v581 = vshrl.u32 %v580, 7
        %v582 = vsub.s32 %v420, %v581
        %v583 = vrot.slane %v387, %v582
        %v584 = vsel %vm425, %v583, %v579
        %v585 = vlaneseq
        %v586 = vshrl.u32 %v585, 7
        %v587 = vsub.s32 %v427, %v586
        %v588 = vrot.slane %v390, %v587
        %v589 = vsel %vm432, %v588, %v584
        %vm590 = vcmask 1045509
        %v591 = vsel %vm590, %v551, %v532
        %vm592 = vcmask 1046534
        %v593 = vsel %vm592, %v570, %v591
        %vm594 = vcmask 1047559
        %v595 = vsel %vm594, %v589, %v593
        %vm597 = vcmask 1043456
        %v598 = vsel %vm597, %v496, %v595
        %v599 = vld [vmem:[%s1] sm:$0xff]
        %v600 = vld [vmem:[%s1 + $0x8] sm:$0xff]
        %v601 = vld [vmem:[%s1 + $0x10] sm:$0xff]
        %v602 = vld [vmem:[%s1 + $0x18] sm:$0xff]
        %vm603 = vcmask 261120
        %v605 = vsel %vm603, %v598, 0
        %607 = vmatprep.subr.mxu0 0.0
        %608 = vmatpush1.msra.mxu0 0.0
        %609 = vmatprep.subr.mxu0 0.0
        %610 = vmatpush1.msra.mxu0 0.0
        %611 = vmatprep.subr.mxu0 0.0
        %612 = vmatpush1.msra.mxu0 0.0
        %613 = vmatprep.subr.mxu0 0.0
        %614 = vmatpush1.msra.mxu0 0.0
        %615 = vmatprep.subr.mxu0 0.0
        %616 = vmatpush1.msra.mxu0 0.0
        %617 = vmatprep.subr.mxu0 0.0
        %618 = vmatpush1.msra.mxu0 0.0
        %619 = vmatprep.subr.mxu0 0.0
        %620 = vmatpush1.msra.mxu0 0.0
        %621 = vmatprep.subr.mxu0 0.0
        %622 = vmatpush1.msra.mxu0 0.0
        %623 = vmatprep.subr.mxu0 0.0
        %624 = vmatpush1.msra.mxu0 0.0
        %625 = vmatprep.subr.mxu0 0.0
        %626 = vmatpush1.msra.mxu0 0.0
        %627 = vmatprep.subr.mxu0 0.0
        %628 = vmatpush1.msra.mxu0 0.0
        %629 = vmatprep.subr.mxu0 0.0
        %630 = vmatpush1.msra.mxu0 0.0
        %631 = vmatprep.subr.mxu0 0.0
        %632 = vmatpush1.msra.mxu0 %v602
        %633 = vmatprep.subr.mxu0 0.0
        %634 = vmatpush1.msra.mxu0 %v601
        %635 = vmatprep.subr.mxu0 0.0
        %636 = vmatpush1.msra.mxu0 %v600
        %637 = vmatprep.subr.mxu0 0.0
        %638 = vmatpush1.msra.mxu0 %v599
        %639 = vmatprep.subr.mxu0 0.0
        %640 = vmatpush2.msra.mxu0 0.0
        %641 = vmatprep.subr.mxu0 0.0
        %642 = vmatpush2.msra.mxu0 0.0
        %643 = vmatprep.subr.mxu0 0.0
        %644 = vmatpush2.msra.mxu0 0.0
        %645 = vmatprep.subr.mxu0 0.0
        %646 = vmatpush2.msra.mxu0 0.0
        %647 = vmatprep.subr.mxu0 0.0
        %648 = vmatpush2.msra.mxu0 0.0
        %649 = vmatprep.subr.mxu0 0.0
        %650 = vmatpush2.msra.mxu0 0.0
        %651 = vmatprep.subr.mxu0 0.0
        %652 = vmatpush2.msra.mxu0 0.0
        %653 = vmatprep.subr.mxu0 0.0
        %654 = vmatpush2.msra.mxu0 0.0
        %655 = vmatprep.subr.mxu0 0.0
        %656 = vmatpush2.msra.mxu0 0.0
        %657 = vmatprep.subr.mxu0 0.0
        %658 = vmatpush2.msra.mxu0 0.0
        %659 = vmatprep.subr.mxu0 0.0
        %660 = vmatpush2.msra.mxu0 0.0
        %661 = vmatprep.subr.mxu0 0.0
        %662 = vmatpush2.msra.mxu0 0.0
        %663 = vmatprep.subr.mxu0 0.0
        %664 = vmatpush2.msra.mxu0 0.0
        %665 = vmatprep.subr.mxu0 0.0
        %666 = vmatpush2.msra.mxu0 0.0
        %667 = vmatprep.subr.mxu0 0.0
        %668 = vmatpush2.msra.mxu0 0.0
        %669 = vmatprep.subr.mxu0 0.0
        %670 = vmatpush2.msra.mxu0 0.0
        %671 = vmatprep.mubr.f32.mxu0 0.0
        %672 = vmatmul.mubr.f32.gmra.mxu0 %v605
        %v673 = vpop.f32.mrf.mxu0
        %v674 = vadd.f32 0.0, %v673
        %v675 = vpop.f32.mrf.mxu0
        %676 = vdwg.mxu0
        %v677 = vmax.f32 %v674, 0.0
        %v678 = vld [vmem:[%s2] sm:$0x3]
        %vm679 = vcmask 15360
        %v681 = vsel %vm679, %v677, 0
        %vm683 = vcmask 1041408
        %v685 = vsel %vm683, %v678, 0
        %687 = vmatprep.subr.mxu0 0.0
        %688 = vmatpush1.msra.mxu0 0.0
        %689 = vmatprep.subr.mxu0 0.0
        %690 = vmatpush1.msra.mxu0 0.0
        %691 = vmatprep.subr.mxu0 0.0
        %692 = vmatpush1.msra.mxu0 0.0
        %693 = vmatprep.subr.mxu0 0.0
        %694 = vmatpush1.msra.mxu0 0.0
        %695 = vmatprep.subr.mxu0 0.0
        %696 = vmatpush1.msra.mxu0 0.0
        %697 = vmatprep.subr.mxu0 0.0
        %698 = vmatpush1.msra.mxu0 0.0
        %699 = vmatprep.subr.mxu0 0.0
        %700 = vmatpush1.msra.mxu0 0.0
        %701 = vmatprep.subr.mxu0 0.0
        %702 = vmatpush1.msra.mxu0 0.0
        %703 = vmatprep.subr.mxu0 0.0
        %704 = vmatpush1.msra.mxu0 0.0
        %705 = vmatprep.subr.mxu0 0.0
        %706 = vmatpush1.msra.mxu0 0.0
        %707 = vmatprep.subr.mxu0 0.0
        %708 = vmatpush1.msra.mxu0 0.0
        %709 = vmatprep.subr.mxu0 0.0
        %710 = vmatpush1.msra.mxu0 0.0
        %711 = vmatprep.subr.mxu0 0.0
        %712 = vmatpush1.msra.mxu0 0.0
        %713 = vmatprep.subr.mxu0 0.0
        %714 = vmatpush1.msra.mxu0 0.0
        %715 = vmatprep.subr.mxu0 0.0
        %716 = vmatpush1.msra.mxu0 0.0
        %717 = vmatprep.subr.mxu0 0.0
        %718 = vmatpush1.msra.mxu0 %v685
        %719 = vmatprep.subr.mxu0 0.0
        %720 = vmatpush2.msra.mxu0 0.0
        %721 = vmatprep.subr.mxu0 0.0
        %722 = vmatpush2.msra.mxu0 0.0
        %723 = vmatprep.subr.mxu0 0.0
        %724 = vmatpush2.msra.mxu0 0.0
        %725 = vmatprep.subr.mxu0 0.0
        %726 = vmatpush2.msra.mxu0 0.0
        %727 = vmatprep.subr.mxu0 0.0
        %728 = vmatpush2.msra.mxu0 0.0
        %729 = vmatprep.subr.mxu0 0.0
        %730 = vmatpush2.msra.mxu0 0.0
        %731 = vmatprep.subr.mxu0 0.0
        %732 = vmatpush2.msra.mxu0 0.0
        %733 = vmatprep.subr.mxu0 0.0
        %734 = vmatpush2.msra.mxu0 0.0
        %735 = vmatprep.subr.mxu0 0.0
        %736 = vmatpush2.msra.mxu0 0.0
        %737 = vmatprep.subr.mxu0 0.0
        %738 = vmatpush2.msra.mxu0 0.0
        %739 = vmatprep.subr.mxu0 0.0
        %740 = vmatpush2.msra.mxu0 0.0
        %741 = vmatprep.subr.mxu0 0.0
        %742 = vmatpush2.msra.mxu0 0.0
        %743 = vmatprep.subr.mxu0 0.0
        %744 = vmatpush2.msra.mxu0 0.0
        %745 = vmatprep.subr.mxu0 0.0
        %746 = vmatpush2.msra.mxu0 0.0
        %747 = vmatprep.subr.mxu0 0.0
        %748 = vmatpush2.msra.mxu0 0.0
        %749 = vmatprep.subr.mxu0 0.0
        %750 = vmatpush2.msra.mxu0 0.0
        %751 = vmatprep.mubr.f32.mxu0 0.0
        %752 = vmatmul.mubr.f32.gmra.mxu0 %v681
        %v753 = vpop.f32.mrf.mxu0
        %v754 = vadd.f32 0.0, %v753
        %v755 = vpop.f32.mrf.mxu0
        %756 = vdwg.mxu0
        %v758 = vrot.slane %v754, 4
        %v760 = vadd.f32 %v754, %v758
        %v761 = vxor.u32 %v760, 2147483648
        %v762 = vmul.f32 %v761, 1.442695
        %v763 = vpow.pop %v762
        %v764 = vadd.f32 %v763, 1.0
        %v765 = vrcp.pop %v764
        %v766 = vmul.f32 1.0, %v765
        %v767 = vlaneseq
        %v768 = vshrl.u32 %v767, 7
        %v769 = vsub.s32 0, %v768
        %v770 = vrot.slane %v766, %v769
        %772 = vbcast.lane.b32.xlu0 %v770, 256
        %v773 = vpop.permute.xlu0 %772
        %s775 = sor.u32 256, 8
        %776 = vbcast.lane.b32.xlu0 %v770, %s775
        %v777 = vpop.permute.xlu0 %776
        %s779 = sor.u32 256, 16
        %780 = vbcast.lane.b32.xlu0 %v770, %s779
        %v781 = vpop.permute.xlu0 %780
        %s783 = sor.u32 256, 24
        %784 = vbcast.lane.b32.xlu0 %v770, %s783
        %v785 = vpop.permute.xlu0 %784
        %v786 = vlaneseq
        %v787 = vshrl.u32 %v786, 7
        %v788 = vsub.s32 1, %v787
        %v789 = vrot.slane %v766, %v788
        %791 = vbcast.lane.b32.xlu0 %v789, 256
        %v792 = vpop.permute.xlu0 %791
        %s794 = sor.u32 256, 8
        %795 = vbcast.lane.b32.xlu0 %v789, %s794
        %v796 = vpop.permute.xlu0 %795
        %s798 = sor.u32 256, 16
        %799 = vbcast.lane.b32.xlu0 %v789, %s798
        %v800 = vpop.permute.xlu0 %799
        %s802 = sor.u32 256, 24
        %803 = vbcast.lane.b32.xlu0 %v789, %s802
        %v804 = vpop.permute.xlu0 %803
        %v805 = vlaneseq
        %v806 = vshrl.u32 %v805, 7
        %v807 = vsub.s32 2, %v806
        %v808 = vrot.slane %v766, %v807
        %810 = vbcast.lane.b32.xlu0 %v808, 256
        %v811 = vpop.permute.xlu0 %810
        %s813 = sor.u32 256, 8
        %814 = vbcast.lane.b32.xlu0 %v808, %s813
        %v815 = vpop.permute.xlu0 %814
        %s817 = sor.u32 256, 16
        %818 = vbcast.lane.b32.xlu0 %v808, %s817
        %v819 = vpop.permute.xlu0 %818
        %s821 = sor.u32 256, 24
        %822 = vbcast.lane.b32.xlu0 %v808, %s821
        %v823 = vpop.permute.xlu0 %822
        %v824 = vlaneseq
        %v825 = vshrl.u32 %v824, 7
        %v826 = vsub.s32 3, %v825
        %v827 = vrot.slane %v766, %v826
        %829 = vbcast.lane.b32.xlu0 %v827, 256
        %v830 = vpop.permute.xlu0 %829
        %s832 = sor.u32 256, 8
        %833 = vbcast.lane.b32.xlu0 %v827, %s832
        %v834 = vpop.permute.xlu0 %833
        %s836 = sor.u32 256, 16
        %837 = vbcast.lane.b32.xlu0 %v827, %s836
        %v838 = vpop.permute.xlu0 %837
        %s840 = sor.u32 256, 24
        %841 = vbcast.lane.b32.xlu0 %v827, %s840
        %v842 = vpop.permute.xlu0 %841
        %v843 = vmul.f32 %v246, %v773
        %v844 = vmul.f32 %v247, %v773
        %v845 = vmul.f32 %v248, %v777
        %v846 = vmul.f32 %v249, %v777
        %v847 = vmul.f32 %v250, %v781
        %v848 = vmul.f32 %v251, %v781
        %v849 = vmul.f32 %v252, %v785
        %v850 = vmul.f32 %v253, %v785
        %v851 = vmul.f32 %v254, %v792
        %v852 = vmul.f32 %v255, %v792
        %v853 = vmul.f32 %v256, %v796
        %v854 = vmul.f32 %v257, %v796
        %v855 = vmul.f32 %v258, %v800
        %v856 = vmul.f32 %v259, %v800
        %v857 = vmul.f32 %v260, %v804
        %v858 = vmul.f32 %v261, %v804
        %v859 = vmul.f32 %v262, %v811
        %v860 = vmul.f32 %v263, %v811
        %v861 = vmul.f32 %v264, %v815
        %v862 = vmul.f32 %v265, %v815
        %v863 = vmul.f32 %v266, %v819
        %v864 = vmul.f32 %v267, %v819
        %v865 = vmul.f32 %v268, %v823
        %v866 = vmul.f32 %v269, %v823
        %v867 = vmul.f32 %v270, %v830
        %v868 = vmul.f32 %v271, %v830
        %v869 = vmul.f32 %v272, %v834
        %v870 = vmul.f32 %v273, %v834
        %v871 = vmul.f32 %v274, %v838
        %v872 = vmul.f32 %v275, %v838
        %v873 = vmul.f32 %v276, %v842
        %v874 = vmul.f32 %v277, %v842
        %v875 = vadd.f32 %v843, %v845
        %v876 = vadd.f32 %v875, %v847
        %v877 = vadd.f32 %v876, %v849
        %v878 = vrot.slane %v877, 4
        %v879 = vadd.f32 %v877, %v878
        %v880 = vrot.slane %v879, 2
        %v881 = vadd.f32 %v879, %v880
        %v882 = vrot.slane %v881, 1
        %v883 = vadd.f32 %v881, %v882
        %v884 = vadd.f32 %v844, %v846
        %v885 = vadd.f32 %v884, %v848
        %v886 = vadd.f32 %v885, %v850
        %v887 = vrot.slane %v886, 4
        %v888 = vadd.f32 %v886, %v887
        %v889 = vrot.slane %v888, 2
        %v890 = vadd.f32 %v888, %v889
        %v891 = vrot.slane %v890, 1
        %v892 = vadd.f32 %v890, %v891
        %v893 = vadd.f32 %v851, %v853
        %v894 = vadd.f32 %v893, %v855
        %v895 = vadd.f32 %v894, %v857
        %v896 = vrot.slane %v895, 4
        %v897 = vadd.f32 %v895, %v896
        %v898 = vrot.slane %v897, 2
        %v899 = vadd.f32 %v897, %v898
        %v900 = vrot.slane %v899, 1
        %v901 = vadd.f32 %v899, %v900
        %v902 = vadd.f32 %v852, %v854
        %v903 = vadd.f32 %v902, %v856
        %v904 = vadd.f32 %v903, %v858
        %v905 = vrot.slane %v904, 4
        %v906 = vadd.f32 %v904, %v905
        %v907 = vrot.slane %v906, 2
        %v908 = vadd.f32 %v906, %v907
        %v909 = vrot.slane %v908, 1
        %v910 = vadd.f32 %v908, %v909
        %v911 = vadd.f32 %v859, %v861
        %v912 = vadd.f32 %v911, %v863
        %v913 = vadd.f32 %v912, %v865
        %v914 = vrot.slane %v913, 4
        %v915 = vadd.f32 %v913, %v914
        %v916 = vrot.slane %v915, 2
        %v917 = vadd.f32 %v915, %v916
        %v918 = vrot.slane %v917, 1
        %v919 = vadd.f32 %v917, %v918
        %v920 = vadd.f32 %v860, %v862
        %v921 = vadd.f32 %v920, %v864
        %v922 = vadd.f32 %v921, %v866
        %v923 = vrot.slane %v922, 4
        %v924 = vadd.f32 %v922, %v923
        %v925 = vrot.slane %v924, 2
        %v926 = vadd.f32 %v924, %v925
        %v927 = vrot.slane %v926, 1
        %v928 = vadd.f32 %v926, %v927
        %v929 = vadd.f32 %v867, %v869
        %v930 = vadd.f32 %v929, %v871
        %v931 = vadd.f32 %v930, %v873
        %v932 = vrot.slane %v931, 4
        %v933 = vadd.f32 %v931, %v932
        %v934 = vrot.slane %v933, 2
        %v935 = vadd.f32 %v933, %v934
        %v936 = vrot.slane %v935, 1
        %v937 = vadd.f32 %v935, %v936
        %v938 = vadd.f32 %v868, %v870
        %v939 = vadd.f32 %v938, %v872
        %v940 = vadd.f32 %v939, %v874
        %v941 = vrot.slane %v940, 4
        %v942 = vadd.f32 %v940, %v941
        %v943 = vrot.slane %v942, 2
        %v944 = vadd.f32 %v942, %v943
        %v945 = vrot.slane %v944, 1
        %v946 = vadd.f32 %v944, %v945
        %v947 = vrcp.pop 32.0
        %v948 = vmul.f32 %v883, %v947
        %v949 = vmul.f32 %v892, %v947
        %v950 = vmul.f32 %v901, %v947
        %v951 = vmul.f32 %v910, %v947
        %v952 = vmul.f32 %v919, %v947
        %v953 = vmul.f32 %v928, %v947
        %v954 = vmul.f32 %v937, %v947
        %v955 = vmul.f32 %v946, %v947
        %v956 = vmax.f32 %v843, %v845
        %v957 = vmax.f32 %v956, %v847
        %v958 = vmax.f32 %v957, %v849
        %v959 = vrot.slane %v958, 4
        %v960 = vmax.f32 %v958, %v959
        %v961 = vrot.slane %v960, 2
        %v962 = vmax.f32 %v960, %v961
        %v963 = vrot.slane %v962, 1
        %v964 = vmax.f32 %v962, %v963
        %v965 = vmax.f32 %v844, %v846
        %v966 = vmax.f32 %v965, %v848
        %v967 = vmax.f32 %v966, %v850
        %v968 = vrot.slane %v967, 4
        %v969 = vmax.f32 %v967, %v968
        %v970 = vrot.slane %v969, 2
        %v971 = vmax.f32 %v969, %v970
        %v972 = vrot.slane %v971, 1
        %v973 = vmax.f32 %v971, %v972
        %v974 = vmax.f32 %v851, %v853
        %v975 = vmax.f32 %v974, %v855
        %v976 = vmax.f32 %v975, %v857
        %v977 = vrot.slane %v976, 4
        %v978 = vmax.f32 %v976, %v977
        %v979 = vrot.slane %v978, 2
        %v980 = vmax.f32 %v978, %v979
        %v981 = vrot.slane %v980, 1
        %v982 = vmax.f32 %v980, %v981
        %v983 = vmax.f32 %v852, %v854
        %v984 = vmax.f32 %v983, %v856
        %v985 = vmax.f32 %v984, %v858
        %v986 = vrot.slane %v985, 4
        %v987 = vmax.f32 %v985, %v986
        %v988 = vrot.slane %v987, 2
        %v989 = vmax.f32 %v987, %v988
        %v990 = vrot.slane %v989, 1
        %v991 = vmax.f32 %v989, %v990
        %v992 = vmax.f32 %v859, %v861
        %v993 = vmax.f32 %v992, %v863
        %v994 = vmax.f32 %v993, %v865
        %v995 = vrot.slane %v994, 4
        %v996 = vmax.f32 %v994, %v995
        %v997 = vrot.slane %v996, 2
        %v998 = vmax.f32 %v996, %v997
        %v999 = vrot.slane %v998, 1
        %v1000 = vmax.f32 %v998, %v999
        %v1001 = vmax.f32 %v860, %v862
        %v1002 = vmax.f32 %v1001, %v864
        %v1003 = vmax.f32 %v1002, %v866
        %v1004 = vrot.slane %v1003, 4
        %v1005 = vmax.f32 %v1003, %v1004
        %v1006 = vrot.slane %v1005, 2
        %v1007 = vmax.f32 %v1005, %v1006
        %v1008 = vrot.slane %v1007, 1
        %v1009 = vmax.f32 %v1007, %v1008
        %v1010 = vmax.f32 %v867, %v869
        %v1011 = vmax.f32 %v1010, %v871
        %v1012 = vmax.f32 %v1011, %v873
        %v1013 = vrot.slane %v1012, 4
        %v1014 = vmax.f32 %v1012, %v1013
        %v1015 = vrot.slane %v1014, 2
        %v1016 = vmax.f32 %v1014, %v1015
        %v1017 = vrot.slane %v1016, 1
        %v1018 = vmax.f32 %v1016, %v1017
        %v1019 = vmax.f32 %v868, %v870
        %v1020 = vmax.f32 %v1019, %v872
        %v1021 = vmax.f32 %v1020, %v874
        %v1022 = vrot.slane %v1021, 4
        %v1023 = vmax.f32 %v1021, %v1022
        %v1024 = vrot.slane %v1023, 2
        %v1025 = vmax.f32 %v1023, %v1024
        %v1026 = vrot.slane %v1025, 1
        %v1027 = vmax.f32 %v1025, %v1026
        %v1036 = vsel %vm491, %v950, %v948
        %v1037 = vsel %vm493, %v952, %v1036
        %v1038 = vsel %vm495, %v954, %v1037
        %v1039 = vsel %vm491, %v951, %v949
        %v1040 = vsel %vm493, %v953, %v1039
        %v1041 = vsel %vm495, %v955, %v1040
        %v1052 = vsel %vm590, %v982, %v964
        %v1053 = vsel %vm592, %v1000, %v1052
        %v1054 = vsel %vm594, %v1018, %v1053
        %v1055 = vsel %vm590, %v991, %v973
        %v1056 = vsel %vm592, %v1009, %v1055
        %v1057 = vsel %vm594, %v1027, %v1056
        %v1060 = vsel %vm597, %v1038, %v1054
        %v1061 = vsel %vm597, %v1041, %v1057
        %v1062 = vld [vmem:[%s4] ss:$2 sm:$0x3]
        %s1063 = scalar_lea.vmem %s4, 1
        %v1064 = vld [vmem:[%s1063] ss:$2 sm:$0x3]
        %v1065 = vld [vmem:[%s3] sm:$0xff]
        %1066 = vrot.lane.b32.xlu0 %v1060, 51
        %v1067 = vpop.permute.xlu0 %1066
        %1068 = vrot.lane.b32.xlu0 %v1061, 51
        %v1069 = vpop.permute.xlu0 %1068
        %vm1070 = vcmp.lt.s32.totalorder %v408, 51
        %v1071 = vsel %vm1070, %v1067, %v1069
        %v1072 = vsel %vm1070, %v1069, %v1067
        %vm1073 = vcmp.ge.s32.totalorder %v1062, 3
        %vm1074 = vcmp.lt.s32.totalorder %v1062, 19
        %vm1075 = vmand %vm1073, %vm1074
        %vm1076 = vcmp.ge.s32.totalorder %v1064, 3
        %vm1077 = vmand %vm1075, %vm1076
        %vm1078 = vcmp.lt.s32.totalorder %v1064, 19
        %vm1079 = vmand %vm1077, %vm1078
        %v1080 = vsel %vm1079, 1, 0
        %v1081 = vcvt.s32.f32 %v1080
        %1083 = vset.pattern.permute.xlu0 0
        %1084 = vperm.xlu0 %1083, %v1065
        %v1085 = vpop.permute.xlu0 %1084
        %v1088 = vlaneseq
        %v1089 = vshrl.u32 %v1088, 7
        %v1090 = vsub.s32 0, %v1089
        %v1091 = vrot.slane %v1081, %v1090
        %v1092 = vlaneseq
        %v1093 = vshrl.u32 %v1092, 7
        %v1094 = vsub.s32 1, %v1093
        %v1095 = vrot.slane %v1081, %v1094
        %v1098 = vmul.f32 %v1085, %v1091
        %v1099 = vmul.f32 %v1085, %v1095
        %v1100 = vmul.f32 %v1098, %v1072
        %v1101 = vmul.f32 %v1099, %v1071
        %v1102 = vadd.f32 %v1100, 0.0
        %v1103 = vadd.f32 %v1101, 0.0
        %1104 = vrot.lane.b32.xlu0 %v1060, 50
        %v1105 = vpop.permute.xlu0 %1104
        %1106 = vrot.lane.b32.xlu0 %v1061, 50
        %v1107 = vpop.permute.xlu0 %1106
        %vm1108 = vcmp.lt.s32.totalorder %v408, 50
        %v1109 = vsel %vm1108, %v1105, %v1107
        %v1110 = vsel %vm1108, %v1107, %v1105
        %vm1111 = vcmp.ge.s32.totalorder %v1064, 2
        %vm1112 = vmand %vm1075, %vm1111
        %vm1113 = vcmp.lt.s32.totalorder %v1064, 18
        %vm1114 = vmand %vm1112, %vm1113
        %v1115 = vsel %vm1114, 1, 0
        %v1116 = vcvt.s32.f32 %v1115
        %1117 = vset.pattern.permute.xlu0 1
        %1118 = vperm.xlu0 %1117, %v1065
        %v1119 = vpop.permute.xlu0 %1118
        %v1122 = vlaneseq
        %v1123 = vshrl.u32 %v1122, 7
        %v1124 = vsub.s32 0, %v1123
        %v1125 = vrot.slane %v1116, %v1124
        %v1126 = vlaneseq
        %v1127 = vshrl.u32 %v1126, 7
        %v1128 = vsub.s32 1, %v1127
        %v1129 = vrot.slane %v1116, %v1128
        %v1132 = vmul.f32 %v1119, %v1125
        %v1133 = vmul.f32 %v1119, %v1129
        %v1134 = vmul.f32 %v1132, %v1110
        %v1135 = vmul.f32 %v1133, %v1109
        %v1136 = vadd.f32 %v1102, %v1134
        %v1137 = vadd.f32 %v1103, %v1135
        %1138 = vrot.lane.b32.xlu0 %v1060, 49
        %v1139 = vpop.permute.xlu0 %1138
        %1140 = vrot.lane.b32.xlu0 %v1061, 49
        %v1141 = vpop.permute.xlu0 %1140
        %vm1142 = vcmp.lt.s32.totalorder %v408, 49
        %v1143 = vsel %vm1142, %v1139, %v1141
        %v1144 = vsel %vm1142, %v1141, %v1139
        %vm1145 = vcmp.ge.s32.totalorder %v1064, 1
        %vm1146 = vmand %vm1075, %vm1145
        %vm1147 = vcmp.lt.s32.totalorder %v1064, 17
        %vm1148 = vmand %vm1146, %vm1147
        %v1149 = vsel %vm1148, 1, 0
        %v1150 = vcvt.s32.f32 %v1149
        %1151 = vset.pattern.permute.xlu0 2
        %1152 = vperm.xlu0 %1151, %v1065
        %v1153 = vpop.permute.xlu0 %1152
        %v1156 = vlaneseq
        %v1157 = vshrl.u32 %v1156, 7
        %v1158 = vsub.s32 0, %v1157
        %v1159 = vrot.slane %v1150, %v1158
        %v1160 = vlaneseq
        %v1161 = vshrl.u32 %v1160, 7
        %v1162 = vsub.s32 1, %v1161
        %v1163 = vrot.slane %v1150, %v1162
        %v1166 = vmul.f32 %v1153, %v1159
        %v1167 = vmul.f32 %v1153, %v1163
        %v1168 = vmul.f32 %v1166, %v1144
        %v1169 = vmul.f32 %v1167, %v1143
        %v1170 = vadd.f32 %v1136, %v1168
        %v1171 = vadd.f32 %v1137, %v1169
        %1172 = vrot.lane.b32.xlu0 %v1060, 48
        %v1173 = vpop.permute.xlu0 %1172
        %1174 = vrot.lane.b32.xlu0 %v1061, 48
        %v1175 = vpop.permute.xlu0 %1174
        %vm1176 = vcmp.lt.s32.totalorder %v408, 48
        %v1177 = vsel %vm1176, %v1173, %v1175
        %v1178 = vsel %vm1176, %v1175, %v1173
        %vm1179 = vcmp.ge.s32.totalorder %v1064, 0
        %vm1180 = vmand %vm1075, %vm1179
        %vm1181 = vcmp.lt.s32.totalorder %v1064, 16
        %vm1182 = vmand %vm1180, %vm1181
        %v1183 = vsel %vm1182, 1, 0
        %v1184 = vcvt.s32.f32 %v1183
        %1185 = vset.pattern.permute.xlu0 3
        %1186 = vperm.xlu0 %1185, %v1065
        %v1187 = vpop.permute.xlu0 %1186
        %v1190 = vlaneseq
        %v1191 = vshrl.u32 %v1190, 7
        %v1192 = vsub.s32 0, %v1191
        %v1193 = vrot.slane %v1184, %v1192
        %v1194 = vlaneseq
        %v1195 = vshrl.u32 %v1194, 7
        %v1196 = vsub.s32 1, %v1195
        %v1197 = vrot.slane %v1184, %v1196
        %v1200 = vmul.f32 %v1187, %v1193
        %v1201 = vmul.f32 %v1187, %v1197
        %v1202 = vmul.f32 %v1200, %v1178
        %v1203 = vmul.f32 %v1201, %v1177
        %v1204 = vadd.f32 %v1170, %v1202
        %v1205 = vadd.f32 %v1171, %v1203
        %1206 = vrot.lane.b32.xlu0 %v1060, 47
        %v1207 = vpop.permute.xlu0 %1206
        %1208 = vrot.lane.b32.xlu0 %v1061, 47
        %v1209 = vpop.permute.xlu0 %1208
        %vm1210 = vcmp.lt.s32.totalorder %v408, 47
        %v1211 = vsel %vm1210, %v1207, %v1209
        %v1212 = vsel %vm1210, %v1209, %v1207
        %vm1213 = vcmp.ge.s32.totalorder %v1064, 4294967295
        %vm1214 = vmand %vm1075, %vm1213
        %vm1215 = vcmp.lt.s32.totalorder %v1064, 15
        %vm1216 = vmand %vm1214, %vm1215
        %v1217 = vsel %vm1216, 1, 0
        %v1218 = vcvt.s32.f32 %v1217
        %1219 = vset.pattern.permute.xlu0 4
        %1220 = vperm.xlu0 %1219, %v1065
        %v1221 = vpop.permute.xlu0 %1220
        %v1224 = vlaneseq
        %v1225 = vshrl.u32 %v1224, 7
        %v1226 = vsub.s32 0, %v1225
        %v1227 = vrot.slane %v1218, %v1226
        %v1228 = vlaneseq
        %v1229 = vshrl.u32 %v1228, 7
        %v1230 = vsub.s32 1, %v1229
        %v1231 = vrot.slane %v1218, %v1230
        %v1234 = vmul.f32 %v1221, %v1227
        %v1235 = vmul.f32 %v1221, %v1231
        %v1236 = vmul.f32 %v1234, %v1212
        %v1237 = vmul.f32 %v1235, %v1211
        %v1238 = vadd.f32 %v1204, %v1236
        %v1239 = vadd.f32 %v1205, %v1237
        %1240 = vrot.lane.b32.xlu0 %v1060, 46
        %v1241 = vpop.permute.xlu0 %1240
        %1242 = vrot.lane.b32.xlu0 %v1061, 46
        %v1243 = vpop.permute.xlu0 %1242
        %vm1244 = vcmp.lt.s32.totalorder %v408, 46
        %v1245 = vsel %vm1244, %v1241, %v1243
        %v1246 = vsel %vm1244, %v1243, %v1241
        %vm1247 = vcmp.ge.s32.totalorder %v1064, 4294967294
        %vm1248 = vmand %vm1075, %vm1247
        %vm1249 = vcmp.lt.s32.totalorder %v1064, 14
        %vm1250 = vmand %vm1248, %vm1249
        %v1251 = vsel %vm1250, 1, 0
        %v1252 = vcvt.s32.f32 %v1251
        %1253 = vset.pattern.permute.xlu0 5
        %1254 = vperm.xlu0 %1253, %v1065
        %v1255 = vpop.permute.xlu0 %1254
        %v1258 = vlaneseq
        %v1259 = vshrl.u32 %v1258, 7
        %v1260 = vsub.s32 0, %v1259
        %v1261 = vrot.slane %v1252, %v1260
        %v1262 = vlaneseq
        %v1263 = vshrl.u32 %v1262, 7
        %v1264 = vsub.s32 1, %v1263
        %v1265 = vrot.slane %v1252, %v1264
        %v1268 = vmul.f32 %v1255, %v1261
        %v1269 = vmul.f32 %v1255, %v1265
        %v1270 = vmul.f32 %v1268, %v1246
        %v1271 = vmul.f32 %v1269, %v1245
        %v1272 = vadd.f32 %v1238, %v1270
        %v1273 = vadd.f32 %v1239, %v1271
        %1274 = vrot.lane.b32.xlu0 %v1060, 45
        %v1275 = vpop.permute.xlu0 %1274
        %1276 = vrot.lane.b32.xlu0 %v1061, 45
        %v1277 = vpop.permute.xlu0 %1276
        %vm1278 = vcmp.lt.s32.totalorder %v408, 45
        %v1279 = vsel %vm1278, %v1275, %v1277
        %v1280 = vsel %vm1278, %v1277, %v1275
        %vm1281 = vcmp.ge.s32.totalorder %v1064, 4294967293
        %vm1282 = vmand %vm1075, %vm1281
        %vm1283 = vcmp.lt.s32.totalorder %v1064, 13
        %vm1284 = vmand %vm1282, %vm1283
        %v1285 = vsel %vm1284, 1, 0
        %v1286 = vcvt.s32.f32 %v1285
        %1287 = vset.pattern.permute.xlu0 6
        %1288 = vperm.xlu0 %1287, %v1065
        %v1289 = vpop.permute.xlu0 %1288
        %v1292 = vlaneseq
        %v1293 = vshrl.u32 %v1292, 7
        %v1294 = vsub.s32 0, %v1293
        %v1295 = vrot.slane %v1286, %v1294
        %v1296 = vlaneseq
        %v1297 = vshrl.u32 %v1296, 7
        %v1298 = vsub.s32 1, %v1297
        %v1299 = vrot.slane %v1286, %v1298
        %v1302 = vmul.f32 %v1289, %v1295
        %v1303 = vmul.f32 %v1289, %v1299
        %v1304 = vmul.f32 %v1302, %v1280
        %v1305 = vmul.f32 %v1303, %v1279
        %v1306 = vadd.f32 %v1272, %v1304
        %v1307 = vadd.f32 %v1273, %v1305
        %1308 = vrot.lane.b32.xlu0 %v1060, 35
        %v1309 = vpop.permute.xlu0 %1308
        %1310 = vrot.lane.b32.xlu0 %v1061, 35
        %v1311 = vpop.permute.xlu0 %1310
        %vm1312 = vcmp.lt.s32.totalorder %v408, 35
        %v1313 = vsel %vm1312, %v1309, %v1311
        %v1314 = vsel %vm1312, %v1311, %v1309
        %vm1315 = vcmp.ge.s32.totalorder %v1062, 2
        %vm1316 = vcmp.lt.s32.totalorder %v1062, 18
        %vm1317 = vmand %vm1315, %vm1316
        %vm1318 = vmand %vm1317, %vm1076
        %vm1319 = vmand %vm1318, %vm1078
        %v1320 = vsel %vm1319, 1, 0
        %v1321 = vcvt.s32.f32 %v1320
        %1322 = vset.pattern.permute.xlu0 7
        %1323 = vperm.xlu0 %1322, %v1065
        %v1324 = vpop.permute.xlu0 %1323
        %v1327 = vlaneseq
        %v1328 = vshrl.u32 %v1327, 7
        %v1329 = vsub.s32 0, %v1328
        %v1330 = vrot.slane %v1321, %v1329
        %v1331 = vlaneseq
        %v1332 = vshrl.u32 %v1331, 7
        %v1333 = vsub.s32 1, %v1332
        %v1334 = vrot.slane %v1321, %v1333
        %v1337 = vmul.f32 %v1324, %v1330
        %v1338 = vmul.f32 %v1324, %v1334
        %v1339 = vmul.f32 %v1337, %v1314
        %v1340 = vmul.f32 %v1338, %v1313
        %v1341 = vadd.f32 %v1306, %v1339
        %v1342 = vadd.f32 %v1307, %v1340
        %1343 = vrot.lane.b32.xlu0 %v1060, 34
        %v1344 = vpop.permute.xlu0 %1343
        %1345 = vrot.lane.b32.xlu0 %v1061, 34
        %v1346 = vpop.permute.xlu0 %1345
        %vm1347 = vcmp.lt.s32.totalorder %v408, 34
        %v1348 = vsel %vm1347, %v1344, %v1346
        %v1349 = vsel %vm1347, %v1346, %v1344
        %vm1350 = vmand %vm1317, %vm1111
        %vm1351 = vmand %vm1350, %vm1113
        %v1352 = vsel %vm1351, 1, 0
        %v1353 = vcvt.s32.f32 %v1352
        %1354 = vset.pattern.permute.xlu0 8
        %1355 = vperm.xlu0 %1354, %v1065
        %v1356 = vpop.permute.xlu0 %1355
        %v1359 = vlaneseq
        %v1360 = vshrl.u32 %v1359, 7
        %v1361 = vsub.s32 0, %v1360
        %v1362 = vrot.slane %v1353, %v1361
        %v1363 = vlaneseq
        %v1364 = vshrl.u32 %v1363, 7
        %v1365 = vsub.s32 1, %v1364
        %v1366 = vrot.slane %v1353, %v1365
        %v1369 = vmul.f32 %v1356, %v1362
        %v1370 = vmul.f32 %v1356, %v1366
        %v1371 = vmul.f32 %v1369, %v1349
        %v1372 = vmul.f32 %v1370, %v1348
        %v1373 = vadd.f32 %v1341, %v1371
        %v1374 = vadd.f32 %v1342, %v1372
        %1375 = vrot.lane.b32.xlu0 %v1060, 33
        %v1376 = vpop.permute.xlu0 %1375
        %1377 = vrot.lane.b32.xlu0 %v1061, 33
        %v1378 = vpop.permute.xlu0 %1377
        %vm1379 = vcmp.lt.s32.totalorder %v408, 33
        %v1380 = vsel %vm1379, %v1376, %v1378
        %v1381 = vsel %vm1379, %v1378, %v1376
        %vm1382 = vmand %vm1317, %vm1145
        %vm1383 = vmand %vm1382, %vm1147
        %v1384 = vsel %vm1383, 1, 0
        %v1385 = vcvt.s32.f32 %v1384
        %1386 = vset.pattern.permute.xlu0 9
        %1387 = vperm.xlu0 %1386, %v1065
        %v1388 = vpop.permute.xlu0 %1387
        %v1391 = vlaneseq
        %v1392 = vshrl.u32 %v1391, 7
        %v1393 = vsub.s32 0, %v1392
        %v1394 = vrot.slane %v1385, %v1393
        %v1395 = vlaneseq
        %v1396 = vshrl.u32 %v1395, 7
        %v1397 = vsub.s32 1, %v1396
        %v1398 = vrot.slane %v1385, %v1397
        %v1401 = vmul.f32 %v1388, %v1394
        %v1402 = vmul.f32 %v1388, %v1398
        %v1403 = vmul.f32 %v1401, %v1381
        %v1404 = vmul.f32 %v1402, %v1380
        %v1405 = vadd.f32 %v1373, %v1403
        %v1406 = vadd.f32 %v1374, %v1404
        %1407 = vrot.lane.b32.xlu0 %v1060, 32
        %v1408 = vpop.permute.xlu0 %1407
        %1409 = vrot.lane.b32.xlu0 %v1061, 32
        %v1410 = vpop.permute.xlu0 %1409
        %vm1411 = vcmp.lt.s32.totalorder %v408, 32
        %v1412 = vsel %vm1411, %v1408, %v1410
        %v1413 = vsel %vm1411, %v1410, %v1408
        %vm1414 = vmand %vm1317, %vm1179
        %vm1415 = vmand %vm1414, %vm1181
        %v1416 = vsel %vm1415, 1, 0
        %v1417 = vcvt.s32.f32 %v1416
        %1418 = vset.pattern.permute.xlu0 10
        %1419 = vperm.xlu0 %1418, %v1065
        %v1420 = vpop.permute.xlu0 %1419
        %v1423 = vlaneseq
        %v1424 = vshrl.u32 %v1423, 7
        %v1425 = vsub.s32 0, %v1424
        %v1426 = vrot.slane %v1417, %v1425
        %v1427 = vlaneseq
        %v1428 = vshrl.u32 %v1427, 7
        %v1429 = vsub.s32 1, %v1428
        %v1430 = vrot.slane %v1417, %v1429
        %v1433 = vmul.f32 %v1420, %v1426
        %v1434 = vmul.f32 %v1420, %v1430
        %v1435 = vmul.f32 %v1433, %v1413
        %v1436 = vmul.f32 %v1434, %v1412
        %v1437 = vadd.f32 %v1405, %v1435
        %v1438 = vadd.f32 %v1406, %v1436
        %1439 = vrot.lane.b32.xlu0 %v1060, 31
        %v1440 = vpop.permute.xlu0 %1439
        %1441 = vrot.lane.b32.xlu0 %v1061, 31
        %v1442 = vpop.permute.xlu0 %1441
        %vm1443 = vcmp.lt.s32.totalorder %v408, 31
        %v1444 = vsel %vm1443, %v1440, %v1442
        %v1445 = vsel %vm1443, %v1442, %v1440
        %vm1446 = vmand %vm1317, %vm1213
        %vm1447 = vmand %vm1446, %vm1215
        %v1448 = vsel %vm1447, 1, 0
        %v1449 = vcvt.s32.f32 %v1448
        %1450 = vset.pattern.permute.xlu0 11
        %1451 = vperm.xlu0 %1450, %v1065
        %v1452 = vpop.permute.xlu0 %1451
        %v1455 = vlaneseq
        %v1456 = vshrl.u32 %v1455, 7
        %v1457 = vsub.s32 0, %v1456
        %v1458 = vrot.slane %v1449, %v1457
        %v1459 = vlaneseq
        %v1460 = vshrl.u32 %v1459, 7
        %v1461 = vsub.s32 1, %v1460
        %v1462 = vrot.slane %v1449, %v1461
        %v1465 = vmul.f32 %v1452, %v1458
        %v1466 = vmul.f32 %v1452, %v1462
        %v1467 = vmul.f32 %v1465, %v1445
        %v1468 = vmul.f32 %v1466, %v1444
        %v1469 = vadd.f32 %v1437, %v1467
        %v1470 = vadd.f32 %v1438, %v1468
        %1471 = vrot.lane.b32.xlu0 %v1060, 30
        %v1472 = vpop.permute.xlu0 %1471
        %1473 = vrot.lane.b32.xlu0 %v1061, 30
        %v1474 = vpop.permute.xlu0 %1473
        %vm1475 = vcmp.lt.s32.totalorder %v408, 30
        %v1476 = vsel %vm1475, %v1472, %v1474
        %v1477 = vsel %vm1475, %v1474, %v1472
        %vm1478 = vmand %vm1317, %vm1247
        %vm1479 = vmand %vm1478, %vm1249
        %v1480 = vsel %vm1479, 1, 0
        %v1481 = vcvt.s32.f32 %v1480
        %1482 = vset.pattern.permute.xlu0 12
        %1483 = vperm.xlu0 %1482, %v1065
        %v1484 = vpop.permute.xlu0 %1483
        %v1487 = vlaneseq
        %v1488 = vshrl.u32 %v1487, 7
        %v1489 = vsub.s32 0, %v1488
        %v1490 = vrot.slane %v1481, %v1489
        %v1491 = vlaneseq
        %v1492 = vshrl.u32 %v1491, 7
        %v1493 = vsub.s32 1, %v1492
        %v1494 = vrot.slane %v1481, %v1493
        %v1497 = vmul.f32 %v1484, %v1490
        %v1498 = vmul.f32 %v1484, %v1494
        %v1499 = vmul.f32 %v1497, %v1477
        %v1500 = vmul.f32 %v1498, %v1476
        %v1501 = vadd.f32 %v1469, %v1499
        %v1502 = vadd.f32 %v1470, %v1500
        %1503 = vrot.lane.b32.xlu0 %v1060, 29
        %v1504 = vpop.permute.xlu0 %1503
        %1505 = vrot.lane.b32.xlu0 %v1061, 29
        %v1506 = vpop.permute.xlu0 %1505
        %vm1507 = vcmp.lt.s32.totalorder %v408, 29
        %v1508 = vsel %vm1507, %v1504, %v1506
        %v1509 = vsel %vm1507, %v1506, %v1504
        %vm1510 = vmand %vm1317, %vm1281
        %vm1511 = vmand %vm1510, %vm1283
        %v1512 = vsel %vm1511, 1, 0
        %v1513 = vcvt.s32.f32 %v1512
        %1514 = vset.pattern.permute.xlu0 13
        %1515 = vperm.xlu0 %1514, %v1065
        %v1516 = vpop.permute.xlu0 %1515
        %v1519 = vlaneseq
        %v1520 = vshrl.u32 %v1519, 7
        %v1521 = vsub.s32 0, %v1520
        %v1522 = vrot.slane %v1513, %v1521
        %v1523 = vlaneseq
        %v1524 = vshrl.u32 %v1523, 7
        %v1525 = vsub.s32 1, %v1524
        %v1526 = vrot.slane %v1513, %v1525
        %v1529 = vmul.f32 %v1516, %v1522
        %v1530 = vmul.f32 %v1516, %v1526
        %v1531 = vmul.f32 %v1529, %v1509
        %v1532 = vmul.f32 %v1530, %v1508
        %v1533 = vadd.f32 %v1501, %v1531
        %v1534 = vadd.f32 %v1502, %v1532
        %1535 = vrot.lane.b32.xlu0 %v1060, 19
        %v1536 = vpop.permute.xlu0 %1535
        %1537 = vrot.lane.b32.xlu0 %v1061, 19
        %v1538 = vpop.permute.xlu0 %1537
        %vm1539 = vcmp.lt.s32.totalorder %v408, 19
        %v1540 = vsel %vm1539, %v1536, %v1538
        %v1541 = vsel %vm1539, %v1538, %v1536
        %vm1542 = vcmp.ge.s32.totalorder %v1062, 1
        %vm1543 = vcmp.lt.s32.totalorder %v1062, 17
        %vm1544 = vmand %vm1542, %vm1543
        %vm1545 = vmand %vm1544, %vm1076
        %vm1546 = vmand %vm1545, %vm1078
        %v1547 = vsel %vm1546, 1, 0
        %v1548 = vcvt.s32.f32 %v1547
        %1549 = vset.pattern.permute.xlu0 14
        %1550 = vperm.xlu0 %1549, %v1065
        %v1551 = vpop.permute.xlu0 %1550
        %v1554 = vlaneseq
        %v1555 = vshrl.u32 %v1554, 7
        %v1556 = vsub.s32 0, %v1555
        %v1557 = vrot.slane %v1548, %v1556
        %v1558 = vlaneseq
        %v1559 = vshrl.u32 %v1558, 7
        %v1560 = vsub.s32 1, %v1559
        %v1561 = vrot.slane %v1548, %v1560
        %v1564 = vmul.f32 %v1551, %v1557
        %v1565 = vmul.f32 %v1551, %v1561
        %v1566 = vmul.f32 %v1564, %v1541
        %v1567 = vmul.f32 %v1565, %v1540
        %v1568 = vadd.f32 %v1533, %v1566
        %v1569 = vadd.f32 %v1534, %v1567
        %1570 = vrot.lane.b32.xlu0 %v1060, 18
        %v1571 = vpop.permute.xlu0 %1570
        %1572 = vrot.lane.b32.xlu0 %v1061, 18
        %v1573 = vpop.permute.xlu0 %1572
        %vm1574 = vcmp.lt.s32.totalorder %v408, 18
        %v1575 = vsel %vm1574, %v1571, %v1573
        %v1576 = vsel %vm1574, %v1573, %v1571
        %vm1577 = vmand %vm1544, %vm1111
        %vm1578 = vmand %vm1577, %vm1113
        %v1579 = vsel %vm1578, 1, 0
        %v1580 = vcvt.s32.f32 %v1579
        %1581 = vset.pattern.permute.xlu0 15
        %1582 = vperm.xlu0 %1581, %v1065
        %v1583 = vpop.permute.xlu0 %1582
        %v1586 = vlaneseq
        %v1587 = vshrl.u32 %v1586, 7
        %v1588 = vsub.s32 0, %v1587
        %v1589 = vrot.slane %v1580, %v1588
        %v1590 = vlaneseq
        %v1591 = vshrl.u32 %v1590, 7
        %v1592 = vsub.s32 1, %v1591
        %v1593 = vrot.slane %v1580, %v1592
        %v1596 = vmul.f32 %v1583, %v1589
        %v1597 = vmul.f32 %v1583, %v1593
        %v1598 = vmul.f32 %v1596, %v1576
        %v1599 = vmul.f32 %v1597, %v1575
        %v1600 = vadd.f32 %v1568, %v1598
        %v1601 = vadd.f32 %v1569, %v1599
        %1602 = vrot.lane.b32.xlu0 %v1060, 17
        %v1603 = vpop.permute.xlu0 %1602
        %1604 = vrot.lane.b32.xlu0 %v1061, 17
        %v1605 = vpop.permute.xlu0 %1604
        %vm1606 = vcmp.lt.s32.totalorder %v408, 17
        %v1607 = vsel %vm1606, %v1603, %v1605
        %v1608 = vsel %vm1606, %v1605, %v1603
        %vm1609 = vmand %vm1544, %vm1145
        %vm1610 = vmand %vm1609, %vm1147
        %v1611 = vsel %vm1610, 1, 0
        %v1612 = vcvt.s32.f32 %v1611
        %1613 = vset.pattern.permute.xlu0 16
        %1614 = vperm.xlu0 %1613, %v1065
        %v1615 = vpop.permute.xlu0 %1614
        %v1618 = vlaneseq
        %v1619 = vshrl.u32 %v1618, 7
        %v1620 = vsub.s32 0, %v1619
        %v1621 = vrot.slane %v1612, %v1620
        %v1622 = vlaneseq
        %v1623 = vshrl.u32 %v1622, 7
        %v1624 = vsub.s32 1, %v1623
        %v1625 = vrot.slane %v1612, %v1624
        %v1628 = vmul.f32 %v1615, %v1621
        %v1629 = vmul.f32 %v1615, %v1625
        %v1630 = vmul.f32 %v1628, %v1608
        %v1631 = vmul.f32 %v1629, %v1607
        %v1632 = vadd.f32 %v1600, %v1630
        %v1633 = vadd.f32 %v1601, %v1631
        %1634 = vrot.lane.b32.xlu0 %v1060, 16
        %v1635 = vpop.permute.xlu0 %1634
        %1636 = vrot.lane.b32.xlu0 %v1061, 16
        %v1637 = vpop.permute.xlu0 %1636
        %vm1638 = vcmp.lt.s32.totalorder %v408, 16
        %v1639 = vsel %vm1638, %v1635, %v1637
        %v1640 = vsel %vm1638, %v1637, %v1635
        %vm1641 = vmand %vm1544, %vm1179
        %vm1642 = vmand %vm1641, %vm1181
        %v1643 = vsel %vm1642, 1, 0
        %v1644 = vcvt.s32.f32 %v1643
        %1645 = vset.pattern.permute.xlu0 17
        %1646 = vperm.xlu0 %1645, %v1065
        %v1647 = vpop.permute.xlu0 %1646
        %v1650 = vlaneseq
        %v1651 = vshrl.u32 %v1650, 7
        %v1652 = vsub.s32 0, %v1651
        %v1653 = vrot.slane %v1644, %v1652
        %v1654 = vlaneseq
        %v1655 = vshrl.u32 %v1654, 7
        %v1656 = vsub.s32 1, %v1655
        %v1657 = vrot.slane %v1644, %v1656
        %v1660 = vmul.f32 %v1647, %v1653
        %v1661 = vmul.f32 %v1647, %v1657
        %v1662 = vmul.f32 %v1660, %v1640
        %v1663 = vmul.f32 %v1661, %v1639
        %v1664 = vadd.f32 %v1632, %v1662
        %v1665 = vadd.f32 %v1633, %v1663
        %1666 = vrot.lane.b32.xlu0 %v1060, 15
        %v1667 = vpop.permute.xlu0 %1666
        %1668 = vrot.lane.b32.xlu0 %v1061, 15
        %v1669 = vpop.permute.xlu0 %1668
        %vm1670 = vcmp.lt.s32.totalorder %v408, 15
        %v1671 = vsel %vm1670, %v1667, %v1669
        %v1672 = vsel %vm1670, %v1669, %v1667
        %vm1673 = vmand %vm1544, %vm1213
        %vm1674 = vmand %vm1673, %vm1215
        %v1675 = vsel %vm1674, 1, 0
        %v1676 = vcvt.s32.f32 %v1675
        %1677 = vset.pattern.permute.xlu0 18
        %1678 = vperm.xlu0 %1677, %v1065
        %v1679 = vpop.permute.xlu0 %1678
        %v1682 = vlaneseq
        %v1683 = vshrl.u32 %v1682, 7
        %v1684 = vsub.s32 0, %v1683
        %v1685 = vrot.slane %v1676, %v1684
        %v1686 = vlaneseq
        %v1687 = vshrl.u32 %v1686, 7
        %v1688 = vsub.s32 1, %v1687
        %v1689 = vrot.slane %v1676, %v1688
        %v1692 = vmul.f32 %v1679, %v1685
        %v1693 = vmul.f32 %v1679, %v1689
        %v1694 = vmul.f32 %v1692, %v1672
        %v1695 = vmul.f32 %v1693, %v1671
        %v1696 = vadd.f32 %v1664, %v1694
        %v1697 = vadd.f32 %v1665, %v1695
        %1698 = vrot.lane.b32.xlu0 %v1060, 14
        %v1699 = vpop.permute.xlu0 %1698
        %1700 = vrot.lane.b32.xlu0 %v1061, 14
        %v1701 = vpop.permute.xlu0 %1700
        %vm1702 = vcmp.lt.s32.totalorder %v408, 14
        %v1703 = vsel %vm1702, %v1699, %v1701
        %v1704 = vsel %vm1702, %v1701, %v1699
        %vm1705 = vmand %vm1544, %vm1247
        %vm1706 = vmand %vm1705, %vm1249
        %v1707 = vsel %vm1706, 1, 0
        %v1708 = vcvt.s32.f32 %v1707
        %1709 = vset.pattern.permute.xlu0 19
        %1710 = vperm.xlu0 %1709, %v1065
        %v1711 = vpop.permute.xlu0 %1710
        %v1714 = vlaneseq
        %v1715 = vshrl.u32 %v1714, 7
        %v1716 = vsub.s32 0, %v1715
        %v1717 = vrot.slane %v1708, %v1716
        %v1718 = vlaneseq
        %v1719 = vshrl.u32 %v1718, 7
        %v1720 = vsub.s32 1, %v1719
        %v1721 = vrot.slane %v1708, %v1720
        %v1724 = vmul.f32 %v1711, %v1717
        %v1725 = vmul.f32 %v1711, %v1721
        %v1726 = vmul.f32 %v1724, %v1704
        %v1727 = vmul.f32 %v1725, %v1703
        %v1728 = vadd.f32 %v1696, %v1726
        %v1729 = vadd.f32 %v1697, %v1727
        %1730 = vrot.lane.b32.xlu0 %v1060, 13
        %v1731 = vpop.permute.xlu0 %1730
        %1732 = vrot.lane.b32.xlu0 %v1061, 13
        %v1733 = vpop.permute.xlu0 %1732
        %vm1734 = vcmp.lt.s32.totalorder %v408, 13
        %v1735 = vsel %vm1734, %v1731, %v1733
        %v1736 = vsel %vm1734, %v1733, %v1731
        %vm1737 = vmand %vm1544, %vm1281
        %vm1738 = vmand %vm1737, %vm1283
        %v1739 = vsel %vm1738, 1, 0
        %v1740 = vcvt.s32.f32 %v1739
        %1741 = vset.pattern.permute.xlu0 20
        %1742 = vperm.xlu0 %1741, %v1065
        %v1743 = vpop.permute.xlu0 %1742
        %v1746 = vlaneseq
        %v1747 = vshrl.u32 %v1746, 7
        %v1748 = vsub.s32 0, %v1747
        %v1749 = vrot.slane %v1740, %v1748
        %v1750 = vlaneseq
        %v1751 = vshrl.u32 %v1750, 7
        %v1752 = vsub.s32 1, %v1751
        %v1753 = vrot.slane %v1740, %v1752
        %v1756 = vmul.f32 %v1743, %v1749
        %v1757 = vmul.f32 %v1743, %v1753
        %v1758 = vmul.f32 %v1756, %v1736
        %v1759 = vmul.f32 %v1757, %v1735
        %v1760 = vadd.f32 %v1728, %v1758
        %v1761 = vadd.f32 %v1729, %v1759
        %1762 = vrot.lane.b32.xlu0 %v1060, 3
        %v1763 = vpop.permute.xlu0 %1762
        %1764 = vrot.lane.b32.xlu0 %v1061, 3
        %v1765 = vpop.permute.xlu0 %1764
        %vm1766 = vcmp.lt.s32.totalorder %v408, 3
        %v1767 = vsel %vm1766, %v1763, %v1765
        %v1768 = vsel %vm1766, %v1765, %v1763
        %vm1769 = vcmp.ge.s32.totalorder %v1062, 0
        %vm1770 = vcmp.lt.s32.totalorder %v1062, 16
        %vm1771 = vmand %vm1769, %vm1770
        %vm1772 = vmand %vm1771, %vm1076
        %vm1773 = vmand %vm1772, %vm1078
        %v1774 = vsel %vm1773, 1, 0
        %v1775 = vcvt.s32.f32 %v1774
        %1776 = vset.pattern.permute.xlu0 21
        %1777 = vperm.xlu0 %1776, %v1065
        %v1778 = vpop.permute.xlu0 %1777
        %v1781 = vlaneseq
        %v1782 = vshrl.u32 %v1781, 7
        %v1783 = vsub.s32 0, %v1782
        %v1784 = vrot.slane %v1775, %v1783
        %v1785 = vlaneseq
        %v1786 = vshrl.u32 %v1785, 7
        %v1787 = vsub.s32 1, %v1786
        %v1788 = vrot.slane %v1775, %v1787
        %v1791 = vmul.f32 %v1778, %v1784
        %v1792 = vmul.f32 %v1778, %v1788
        %v1793 = vmul.f32 %v1791, %v1768
        %v1794 = vmul.f32 %v1792, %v1767
        %v1795 = vadd.f32 %v1760, %v1793
        %v1796 = vadd.f32 %v1761, %v1794
        %1797 = vrot.lane.b32.xlu0 %v1060, 2
        %v1798 = vpop.permute.xlu0 %1797
        %1799 = vrot.lane.b32.xlu0 %v1061, 2
        %v1800 = vpop.permute.xlu0 %1799
        %vm1801 = vcmp.lt.s32.totalorder %v408, 2
        %v1802 = vsel %vm1801, %v1798, %v1800
        %v1803 = vsel %vm1801, %v1800, %v1798
        %vm1804 = vmand %vm1771, %vm1111
        %vm1805 = vmand %vm1804, %vm1113
        %v1806 = vsel %vm1805, 1, 0
        %v1807 = vcvt.s32.f32 %v1806
        %1808 = vset.pattern.permute.xlu0 22
        %1809 = vperm.xlu0 %1808, %v1065
        %v1810 = vpop.permute.xlu0 %1809
        %v1813 = vlaneseq
        %v1814 = vshrl.u32 %v1813, 7
        %v1815 = vsub.s32 0, %v1814
        %v1816 = vrot.slane %v1807, %v1815
        %v1817 = vlaneseq
        %v1818 = vshrl.u32 %v1817, 7
        %v1819 = vsub.s32 1, %v1818
        %v1820 = vrot.slane %v1807, %v1819
        %v1823 = vmul.f32 %v1810, %v1816
        %v1824 = vmul.f32 %v1810, %v1820
        %v1825 = vmul.f32 %v1823, %v1803
        %v1826 = vmul.f32 %v1824, %v1802
        %v1827 = vadd.f32 %v1795, %v1825
        %v1828 = vadd.f32 %v1796, %v1826
        %1829 = vrot.lane.b32.xlu0 %v1060, 1
        %v1830 = vpop.permute.xlu0 %1829
        %1831 = vrot.lane.b32.xlu0 %v1061, 1
        %v1832 = vpop.permute.xlu0 %1831
        %vm1833 = vcmp.lt.s32.totalorder %v408, 1
        %v1834 = vsel %vm1833, %v1830, %v1832
        %v1835 = vsel %vm1833, %v1832, %v1830
        %vm1836 = vmand %vm1771, %vm1145
        %vm1837 = vmand %vm1836, %vm1147
        %v1838 = vsel %vm1837, 1, 0
        %v1839 = vcvt.s32.f32 %v1838
        %1840 = vset.pattern.permute.xlu0 23
        %1841 = vperm.xlu0 %1840, %v1065
        %v1842 = vpop.permute.xlu0 %1841
        %v1845 = vlaneseq
        %v1846 = vshrl.u32 %v1845, 7
        %v1847 = vsub.s32 0, %v1846
        %v1848 = vrot.slane %v1839, %v1847
        %v1849 = vlaneseq
        %v1850 = vshrl.u32 %v1849, 7
        %v1851 = vsub.s32 1, %v1850
        %v1852 = vrot.slane %v1839, %v1851
        %v1855 = vmul.f32 %v1842, %v1848
        %v1856 = vmul.f32 %v1842, %v1852
        %v1857 = vmul.f32 %v1855, %v1835
        %v1858 = vmul.f32 %v1856, %v1834
        %v1859 = vadd.f32 %v1827, %v1857
        %v1860 = vadd.f32 %v1828, %v1858
        %vm1861 = vmand %vm1771, %vm1179
        %vm1862 = vmand %vm1861, %vm1181
        %v1863 = vsel %vm1862, 1, 0
        %v1864 = vcvt.s32.f32 %v1863
        %1865 = vset.pattern.permute.xlu0 24
        %1866 = vperm.xlu0 %1865, %v1065
        %v1867 = vpop.permute.xlu0 %1866
        %v1870 = vlaneseq
        %v1871 = vshrl.u32 %v1870, 7
        %v1872 = vsub.s32 0, %v1871
        %v1873 = vrot.slane %v1864, %v1872
        %v1874 = vlaneseq
        %v1875 = vshrl.u32 %v1874, 7
        %v1876 = vsub.s32 1, %v1875
        %v1877 = vrot.slane %v1864, %v1876
        %v1880 = vmul.f32 %v1867, %v1873
        %v1881 = vmul.f32 %v1867, %v1877
        %v1882 = vmul.f32 %v1880, %v1060
        %v1883 = vmul.f32 %v1881, %v1061
        %v1884 = vadd.f32 %v1859, %v1882
        %v1885 = vadd.f32 %v1860, %v1883
        %1886 = vrot.lane.b32.xlu0 %v1060, 127
        %v1887 = vpop.permute.xlu0 %1886
        %1888 = vrot.lane.b32.xlu0 %v1061, 127
        %v1889 = vpop.permute.xlu0 %1888
        %vm1890 = vcmp.lt.s32.totalorder %v408, 127
        %v1891 = vsel %vm1890, %v1887, %v1889
        %v1892 = vsel %vm1890, %v1889, %v1887
        %vm1893 = vmand %vm1771, %vm1213
        %vm1894 = vmand %vm1893, %vm1215
        %v1895 = vsel %vm1894, 1, 0
        %v1896 = vcvt.s32.f32 %v1895
        %1897 = vset.pattern.permute.xlu0 25
        %1898 = vperm.xlu0 %1897, %v1065
        %v1899 = vpop.permute.xlu0 %1898
        %v1902 = vlaneseq
        %v1903 = vshrl.u32 %v1902, 7
        %v1904 = vsub.s32 0, %v1903
        %v1905 = vrot.slane %v1896, %v1904
        %v1906 = vlaneseq
        %v1907 = vshrl.u32 %v1906, 7
        %v1908 = vsub.s32 1, %v1907
        %v1909 = vrot.slane %v1896, %v1908
        %v1912 = vmul.f32 %v1899, %v1905
        %v1913 = vmul.f32 %v1899, %v1909
        %v1914 = vmul.f32 %v1912, %v1891
        %v1915 = vmul.f32 %v1913, %v1892
        %v1916 = vadd.f32 %v1884, %v1914
        %v1917 = vadd.f32 %v1885, %v1915
        %1918 = vrot.lane.b32.xlu0 %v1060, 126
        %v1919 = vpop.permute.xlu0 %1918
        %1920 = vrot.lane.b32.xlu0 %v1061, 126
        %v1921 = vpop.permute.xlu0 %1920
        %vm1922 = vcmp.lt.s32.totalorder %v408, 126
        %v1923 = vsel %vm1922, %v1919, %v1921
        %v1924 = vsel %vm1922, %v1921, %v1919
        %vm1925 = vmand %vm1771, %vm1247
        %vm1926 = vmand %vm1925, %vm1249
        %v1927 = vsel %vm1926, 1, 0
        %v1928 = vcvt.s32.f32 %v1927
        %1929 = vset.pattern.permute.xlu0 26
        %1930 = vperm.xlu0 %1929, %v1065
        %v1931 = vpop.permute.xlu0 %1930
        %v1934 = vlaneseq
        %v1935 = vshrl.u32 %v1934, 7
        %v1936 = vsub.s32 0, %v1935
        %v1937 = vrot.slane %v1928, %v1936
        %v1938 = vlaneseq
        %v1939 = vshrl.u32 %v1938, 7
        %v1940 = vsub.s32 1, %v1939
        %v1941 = vrot.slane %v1928, %v1940
        %v1944 = vmul.f32 %v1931, %v1937
        %v1945 = vmul.f32 %v1931, %v1941
        %v1946 = vmul.f32 %v1944, %v1923
        %v1947 = vmul.f32 %v1945, %v1924
        %v1948 = vadd.f32 %v1916, %v1946
        %v1949 = vadd.f32 %v1917, %v1947
        %1950 = vrot.lane.b32.xlu0 %v1060, 125
        %v1951 = vpop.permute.xlu0 %1950
        %1952 = vrot.lane.b32.xlu0 %v1061, 125
        %v1953 = vpop.permute.xlu0 %1952
        %vm1954 = vcmp.lt.s32.totalorder %v408, 125
        %v1955 = vsel %vm1954, %v1951, %v1953
        %v1956 = vsel %vm1954, %v1953, %v1951
        %vm1957 = vmand %vm1771, %vm1281
        %vm1958 = vmand %vm1957, %vm1283
        %v1959 = vsel %vm1958, 1, 0
        %v1960 = vcvt.s32.f32 %v1959
        %1961 = vset.pattern.permute.xlu0 27
        %1962 = vperm.xlu0 %1961, %v1065
        %v1963 = vpop.permute.xlu0 %1962
        %v1966 = vlaneseq
        %v1967 = vshrl.u32 %v1966, 7
        %v1968 = vsub.s32 0, %v1967
        %v1969 = vrot.slane %v1960, %v1968
        %v1970 = vlaneseq
        %v1971 = vshrl.u32 %v1970, 7
        %v1972 = vsub.s32 1, %v1971
        %v1973 = vrot.slane %v1960, %v1972
        %v1976 = vmul.f32 %v1963, %v1969
        %v1977 = vmul.f32 %v1963, %v1973
        %v1978 = vmul.f32 %v1976, %v1955
        %v1979 = vmul.f32 %v1977, %v1956
        %v1980 = vadd.f32 %v1948, %v1978
        %v1981 = vadd.f32 %v1949, %v1979
        %1982 = vrot.lane.b32.xlu0 %v1060, 115
        %v1983 = vpop.permute.xlu0 %1982
        %1984 = vrot.lane.b32.xlu0 %v1061, 115
        %v1985 = vpop.permute.xlu0 %1984
        %vm1986 = vcmp.lt.s32.totalorder %v408, 115
        %v1987 = vsel %vm1986, %v1983, %v1985
        %v1988 = vsel %vm1986, %v1985, %v1983
        %vm1989 = vcmp.ge.s32.totalorder %v1062, 4294967295
        %vm1990 = vcmp.lt.s32.totalorder %v1062, 15
        %vm1991 = vmand %vm1989, %vm1990
        %vm1992 = vmand %vm1991, %vm1076
        %vm1993 = vmand %vm1992, %vm1078
        %v1994 = vsel %vm1993, 1, 0
        %v1995 = vcvt.s32.f32 %v1994
        %1996 = vset.pattern.permute.xlu0 28
        %1997 = vperm.xlu0 %1996, %v1065
        %v1998 = vpop.permute.xlu0 %1997
        %v2001 = vlaneseq
        %v2002 = vshrl.u32 %v2001, 7
        %v2003 = vsub.s32 0, %v2002
        %v2004 = vrot.slane %v1995, %v2003
        %v2005 = vlaneseq
        %v2006 = vshrl.u32 %v2005, 7
        %v2007 = vsub.s32 1, %v2006
        %v2008 = vrot.slane %v1995, %v2007
        %v2011 = vmul.f32 %v1998, %v2004
        %v2012 = vmul.f32 %v1998, %v2008
        %v2013 = vmul.f32 %v2011, %v1987
        %v2014 = vmul.f32 %v2012, %v1988
        %v2015 = vadd.f32 %v1980, %v2013
        %v2016 = vadd.f32 %v1981, %v2014
        %2017 = vrot.lane.b32.xlu0 %v1060, 114
        %v2018 = vpop.permute.xlu0 %2017
        %2019 = vrot.lane.b32.xlu0 %v1061, 114
        %v2020 = vpop.permute.xlu0 %2019
        %vm2021 = vcmp.lt.s32.totalorder %v408, 114
        %v2022 = vsel %vm2021, %v2018, %v2020
        %v2023 = vsel %vm2021, %v2020, %v2018
        %vm2024 = vmand %vm1991, %vm1111
        %vm2025 = vmand %vm2024, %vm1113
        %v2026 = vsel %vm2025, 1, 0
        %v2027 = vcvt.s32.f32 %v2026
        %2028 = vset.pattern.permute.xlu0 29
        %2029 = vperm.xlu0 %2028, %v1065
        %v2030 = vpop.permute.xlu0 %2029
        %v2033 = vlaneseq
        %v2034 = vshrl.u32 %v2033, 7
        %v2035 = vsub.s32 0, %v2034
        %v2036 = vrot.slane %v2027, %v2035
        %v2037 = vlaneseq
        %v2038 = vshrl.u32 %v2037, 7
        %v2039 = vsub.s32 1, %v2038
        %v2040 = vrot.slane %v2027, %v2039
        %v2043 = vmul.f32 %v2030, %v2036
        %v2044 = vmul.f32 %v2030, %v2040
        %v2045 = vmul.f32 %v2043, %v2022
        %v2046 = vmul.f32 %v2044, %v2023
        %v2047 = vadd.f32 %v2015, %v2045
        %v2048 = vadd.f32 %v2016, %v2046
        %2049 = vrot.lane.b32.xlu0 %v1060, 113
        %v2050 = vpop.permute.xlu0 %2049
        %2051 = vrot.lane.b32.xlu0 %v1061, 113
        %v2052 = vpop.permute.xlu0 %2051
        %vm2053 = vcmp.lt.s32.totalorder %v408, 113
        %v2054 = vsel %vm2053, %v2050, %v2052
        %v2055 = vsel %vm2053, %v2052, %v2050
        %vm2056 = vmand %vm1991, %vm1145
        %vm2057 = vmand %vm2056, %vm1147
        %v2058 = vsel %vm2057, 1, 0
        %v2059 = vcvt.s32.f32 %v2058
        %2060 = vset.pattern.permute.xlu0 30
        %2061 = vperm.xlu0 %2060, %v1065
        %v2062 = vpop.permute.xlu0 %2061
        %v2065 = vlaneseq
        %v2066 = vshrl.u32 %v2065, 7
        %v2067 = vsub.s32 0, %v2066
        %v2068 = vrot.slane %v2059, %v2067
        %v2069 = vlaneseq
        %v2070 = vshrl.u32 %v2069, 7
        %v2071 = vsub.s32 1, %v2070
        %v2072 = vrot.slane %v2059, %v2071
        %v2075 = vmul.f32 %v2062, %v2068
        %v2076 = vmul.f32 %v2062, %v2072
        %v2077 = vmul.f32 %v2075, %v2054
        %v2078 = vmul.f32 %v2076, %v2055
        %v2079 = vadd.f32 %v2047, %v2077
        %v2080 = vadd.f32 %v2048, %v2078
        %2081 = vrot.lane.b32.xlu0 %v1060, 112
        %v2082 = vpop.permute.xlu0 %2081
        %2083 = vrot.lane.b32.xlu0 %v1061, 112
        %v2084 = vpop.permute.xlu0 %2083
        %vm2085 = vcmp.lt.s32.totalorder %v408, 112
        %v2086 = vsel %vm2085, %v2082, %v2084
        %v2087 = vsel %vm2085, %v2084, %v2082
        %vm2088 = vmand %vm1991, %vm1179
        %vm2089 = vmand %vm2088, %vm1181
        %v2090 = vsel %vm2089, 1, 0
        %v2091 = vcvt.s32.f32 %v2090
        %2092 = vset.pattern.permute.xlu0 31
        %2093 = vperm.xlu0 %2092, %v1065
        %v2094 = vpop.permute.xlu0 %2093
        %v2097 = vlaneseq
        %v2098 = vshrl.u32 %v2097, 7
        %v2099 = vsub.s32 0, %v2098
        %v2100 = vrot.slane %v2091, %v2099
        %v2101 = vlaneseq
        %v2102 = vshrl.u32 %v2101, 7
        %v2103 = vsub.s32 1, %v2102
        %v2104 = vrot.slane %v2091, %v2103
        %v2107 = vmul.f32 %v2094, %v2100
        %v2108 = vmul.f32 %v2094, %v2104
        %v2109 = vmul.f32 %v2107, %v2086
        %v2110 = vmul.f32 %v2108, %v2087
        %v2111 = vadd.f32 %v2079, %v2109
        %v2112 = vadd.f32 %v2080, %v2110
        %2113 = vrot.lane.b32.xlu0 %v1060, 111
        %v2114 = vpop.permute.xlu0 %2113
        %2115 = vrot.lane.b32.xlu0 %v1061, 111
        %v2116 = vpop.permute.xlu0 %2115
        %vm2117 = vcmp.lt.s32.totalorder %v408, 111
        %v2118 = vsel %vm2117, %v2114, %v2116
        %v2119 = vsel %vm2117, %v2116, %v2114
        %vm2120 = vmand %vm1991, %vm1213
        %vm2121 = vmand %vm2120, %vm1215
        %v2122 = vsel %vm2121, 1, 0
        %v2123 = vcvt.s32.f32 %v2122
        %2124 = vset.pattern.permute.xlu0 32
        %2125 = vperm.xlu0 %2124, %v1065
        %v2126 = vpop.permute.xlu0 %2125
        %v2129 = vlaneseq
        %v2130 = vshrl.u32 %v2129, 7
        %v2131 = vsub.s32 0, %v2130
        %v2132 = vrot.slane %v2123, %v2131
        %v2133 = vlaneseq
        %v2134 = vshrl.u32 %v2133, 7
        %v2135 = vsub.s32 1, %v2134
        %v2136 = vrot.slane %v2123, %v2135
        %v2139 = vmul.f32 %v2126, %v2132
        %v2140 = vmul.f32 %v2126, %v2136
        %v2141 = vmul.f32 %v2139, %v2118
        %v2142 = vmul.f32 %v2140, %v2119
        %v2143 = vadd.f32 %v2111, %v2141
        %v2144 = vadd.f32 %v2112, %v2142
        %2145 = vrot.lane.b32.xlu0 %v1060, 110
        %v2146 = vpop.permute.xlu0 %2145
        %2147 = vrot.lane.b32.xlu0 %v1061, 110
        %v2148 = vpop.permute.xlu0 %2147
        %vm2149 = vcmp.lt.s32.totalorder %v408, 110
        %v2150 = vsel %vm2149, %v2146, %v2148
        %v2151 = vsel %vm2149, %v2148, %v2146
        %vm2152 = vmand %vm1991, %vm1247
        %vm2153 = vmand %vm2152, %vm1249
        %v2154 = vsel %vm2153, 1, 0
        %v2155 = vcvt.s32.f32 %v2154
        %2156 = vset.pattern.permute.xlu0 33
        %2157 = vperm.xlu0 %2156, %v1065
        %v2158 = vpop.permute.xlu0 %2157
        %v2161 = vlaneseq
        %v2162 = vshrl.u32 %v2161, 7
        %v2163 = vsub.s32 0, %v2162
        %v2164 = vrot.slane %v2155, %v2163
        %v2165 = vlaneseq
        %v2166 = vshrl.u32 %v2165, 7
        %v2167 = vsub.s32 1, %v2166
        %v2168 = vrot.slane %v2155, %v2167
        %v2171 = vmul.f32 %v2158, %v2164
        %v2172 = vmul.f32 %v2158, %v2168
        %v2173 = vmul.f32 %v2171, %v2150
        %v2174 = vmul.f32 %v2172, %v2151
        %v2175 = vadd.f32 %v2143, %v2173
        %v2176 = vadd.f32 %v2144, %v2174
        %2177 = vrot.lane.b32.xlu0 %v1060, 109
        %v2178 = vpop.permute.xlu0 %2177
        %2179 = vrot.lane.b32.xlu0 %v1061, 109
        %v2180 = vpop.permute.xlu0 %2179
        %vm2181 = vcmp.lt.s32.totalorder %v408, 109
        %v2182 = vsel %vm2181, %v2178, %v2180
        %v2183 = vsel %vm2181, %v2180, %v2178
        %vm2184 = vmand %vm1991, %vm1281
        %vm2185 = vmand %vm2184, %vm1283
        %v2186 = vsel %vm2185, 1, 0
        %v2187 = vcvt.s32.f32 %v2186
        %2188 = vset.pattern.permute.xlu0 34
        %2189 = vperm.xlu0 %2188, %v1065
        %v2190 = vpop.permute.xlu0 %2189
        %v2193 = vlaneseq
        %v2194 = vshrl.u32 %v2193, 7
        %v2195 = vsub.s32 0, %v2194
        %v2196 = vrot.slane %v2187, %v2195
        %v2197 = vlaneseq
        %v2198 = vshrl.u32 %v2197, 7
        %v2199 = vsub.s32 1, %v2198
        %v2200 = vrot.slane %v2187, %v2199
        %v2203 = vmul.f32 %v2190, %v2196
        %v2204 = vmul.f32 %v2190, %v2200
        %v2205 = vmul.f32 %v2203, %v2182
        %v2206 = vmul.f32 %v2204, %v2183
        %v2207 = vadd.f32 %v2175, %v2205
        %v2208 = vadd.f32 %v2176, %v2206
        %2209 = vrot.lane.b32.xlu0 %v1060, 99
        %v2210 = vpop.permute.xlu0 %2209
        %2211 = vrot.lane.b32.xlu0 %v1061, 99
        %v2212 = vpop.permute.xlu0 %2211
        %vm2213 = vcmp.lt.s32.totalorder %v408, 99
        %v2214 = vsel %vm2213, %v2210, %v2212
        %v2215 = vsel %vm2213, %v2212, %v2210
        %vm2216 = vcmp.ge.s32.totalorder %v1062, 4294967294
        %vm2217 = vcmp.lt.s32.totalorder %v1062, 14
        %vm2218 = vmand %vm2216, %vm2217
        %vm2219 = vmand %vm2218, %vm1076
        %vm2220 = vmand %vm2219, %vm1078
        %v2221 = vsel %vm2220, 1, 0
        %v2222 = vcvt.s32.f32 %v2221
        %2223 = vset.pattern.permute.xlu0 35
        %2224 = vperm.xlu0 %2223, %v1065
        %v2225 = vpop.permute.xlu0 %2224
        %v2228 = vlaneseq
        %v2229 = vshrl.u32 %v2228, 7
        %v2230 = vsub.s32 0, %v2229
        %v2231 = vrot.slane %v2222, %v2230
        %v2232 = vlaneseq
        %v2233 = vshrl.u32 %v2232, 7
        %v2234 = vsub.s32 1, %v2233
        %v2235 = vrot.slane %v2222, %v2234
        %v2238 = vmul.f32 %v2225, %v2231
        %v2239 = vmul.f32 %v2225, %v2235
        %v2240 = vmul.f32 %v2238, %v2214
        %v2241 = vmul.f32 %v2239, %v2215
        %v2242 = vadd.f32 %v2207, %v2240
        %v2243 = vadd.f32 %v2208, %v2241
        %2244 = vrot.lane.b32.xlu0 %v1060, 98
        %v2245 = vpop.permute.xlu0 %2244
        %2246 = vrot.lane.b32.xlu0 %v1061, 98
        %v2247 = vpop.permute.xlu0 %2246
        %vm2248 = vcmp.lt.s32.totalorder %v408, 98
        %v2249 = vsel %vm2248, %v2245, %v2247
        %v2250 = vsel %vm2248, %v2247, %v2245
        %vm2251 = vmand %vm2218, %vm1111
        %vm2252 = vmand %vm2251, %vm1113
        %v2253 = vsel %vm2252, 1, 0
        %v2254 = vcvt.s32.f32 %v2253
        %2255 = vset.pattern.permute.xlu0 36
        %2256 = vperm.xlu0 %2255, %v1065
        %v2257 = vpop.permute.xlu0 %2256
        %v2260 = vlaneseq
        %v2261 = vshrl.u32 %v2260, 7
        %v2262 = vsub.s32 0, %v2261
        %v2263 = vrot.slane %v2254, %v2262
        %v2264 = vlaneseq
        %v2265 = vshrl.u32 %v2264, 7
        %v2266 = vsub.s32 1, %v2265
        %v2267 = vrot.slane %v2254, %v2266
        %v2270 = vmul.f32 %v2257, %v2263
        %v2271 = vmul.f32 %v2257, %v2267
        %v2272 = vmul.f32 %v2270, %v2249
        %v2273 = vmul.f32 %v2271, %v2250
        %v2274 = vadd.f32 %v2242, %v2272
        %v2275 = vadd.f32 %v2243, %v2273
        %2276 = vrot.lane.b32.xlu0 %v1060, 97
        %v2277 = vpop.permute.xlu0 %2276
        %2278 = vrot.lane.b32.xlu0 %v1061, 97
        %v2279 = vpop.permute.xlu0 %2278
        %vm2280 = vcmp.lt.s32.totalorder %v408, 97
        %v2281 = vsel %vm2280, %v2277, %v2279
        %v2282 = vsel %vm2280, %v2279, %v2277
        %vm2283 = vmand %vm2218, %vm1145
        %vm2284 = vmand %vm2283, %vm1147
        %v2285 = vsel %vm2284, 1, 0
        %v2286 = vcvt.s32.f32 %v2285
        %2287 = vset.pattern.permute.xlu0 37
        %2288 = vperm.xlu0 %2287, %v1065
        %v2289 = vpop.permute.xlu0 %2288
        %v2292 = vlaneseq
        %v2293 = vshrl.u32 %v2292, 7
        %v2294 = vsub.s32 0, %v2293
        %v2295 = vrot.slane %v2286, %v2294
        %v2296 = vlaneseq
        %v2297 = vshrl.u32 %v2296, 7
        %v2298 = vsub.s32 1, %v2297
        %v2299 = vrot.slane %v2286, %v2298
        %v2302 = vmul.f32 %v2289, %v2295
        %v2303 = vmul.f32 %v2289, %v2299
        %v2304 = vmul.f32 %v2302, %v2281
        %v2305 = vmul.f32 %v2303, %v2282
        %v2306 = vadd.f32 %v2274, %v2304
        %v2307 = vadd.f32 %v2275, %v2305
        %2308 = vrot.lane.b32.xlu0 %v1060, 96
        %v2309 = vpop.permute.xlu0 %2308
        %2310 = vrot.lane.b32.xlu0 %v1061, 96
        %v2311 = vpop.permute.xlu0 %2310
        %vm2312 = vcmp.lt.s32.totalorder %v408, 96
        %v2313 = vsel %vm2312, %v2309, %v2311
        %v2314 = vsel %vm2312, %v2311, %v2309
        %vm2315 = vmand %vm2218, %vm1179
        %vm2316 = vmand %vm2315, %vm1181
        %v2317 = vsel %vm2316, 1, 0
        %v2318 = vcvt.s32.f32 %v2317
        %2319 = vset.pattern.permute.xlu0 38
        %2320 = vperm.xlu0 %2319, %v1065
        %v2321 = vpop.permute.xlu0 %2320
        %v2324 = vlaneseq
        %v2325 = vshrl.u32 %v2324, 7
        %v2326 = vsub.s32 0, %v2325
        %v2327 = vrot.slane %v2318, %v2326
        %v2328 = vlaneseq
        %v2329 = vshrl.u32 %v2328, 7
        %v2330 = vsub.s32 1, %v2329
        %v2331 = vrot.slane %v2318, %v2330
        %v2334 = vmul.f32 %v2321, %v2327
        %v2335 = vmul.f32 %v2321, %v2331
        %v2336 = vmul.f32 %v2334, %v2313
        %v2337 = vmul.f32 %v2335, %v2314
        %v2338 = vadd.f32 %v2306, %v2336
        %v2339 = vadd.f32 %v2307, %v2337
        %2340 = vrot.lane.b32.xlu0 %v1060, 95
        %v2341 = vpop.permute.xlu0 %2340
        %2342 = vrot.lane.b32.xlu0 %v1061, 95
        %v2343 = vpop.permute.xlu0 %2342
        %vm2344 = vcmp.lt.s32.totalorder %v408, 95
        %v2345 = vsel %vm2344, %v2341, %v2343
        %v2346 = vsel %vm2344, %v2343, %v2341
        %vm2347 = vmand %vm2218, %vm1213
        %vm2348 = vmand %vm2347, %vm1215
        %v2349 = vsel %vm2348, 1, 0
        %v2350 = vcvt.s32.f32 %v2349
        %2351 = vset.pattern.permute.xlu0 39
        %2352 = vperm.xlu0 %2351, %v1065
        %v2353 = vpop.permute.xlu0 %2352
        %v2356 = vlaneseq
        %v2357 = vshrl.u32 %v2356, 7
        %v2358 = vsub.s32 0, %v2357
        %v2359 = vrot.slane %v2350, %v2358
        %v2360 = vlaneseq
        %v2361 = vshrl.u32 %v2360, 7
        %v2362 = vsub.s32 1, %v2361
        %v2363 = vrot.slane %v2350, %v2362
        %v2366 = vmul.f32 %v2353, %v2359
        %v2367 = vmul.f32 %v2353, %v2363
        %v2368 = vmul.f32 %v2366, %v2345
        %v2369 = vmul.f32 %v2367, %v2346
        %v2370 = vadd.f32 %v2338, %v2368
        %v2371 = vadd.f32 %v2339, %v2369
        %2372 = vrot.lane.b32.xlu0 %v1060, 94
        %v2373 = vpop.permute.xlu0 %2372
        %2374 = vrot.lane.b32.xlu0 %v1061, 94
        %v2375 = vpop.permute.xlu0 %2374
        %vm2376 = vcmp.lt.s32.totalorder %v408, 94
        %v2377 = vsel %vm2376, %v2373, %v2375
        %v2378 = vsel %vm2376, %v2375, %v2373
        %vm2379 = vmand %vm2218, %vm1247
        %vm2380 = vmand %vm2379, %vm1249
        %v2381 = vsel %vm2380, 1, 0
        %v2382 = vcvt.s32.f32 %v2381
        %2383 = vset.pattern.permute.xlu0 40
        %2384 = vperm.xlu0 %2383, %v1065
        %v2385 = vpop.permute.xlu0 %2384
        %v2388 = vlaneseq
        %v2389 = vshrl.u32 %v2388, 7
        %v2390 = vsub.s32 0, %v2389
        %v2391 = vrot.slane %v2382, %v2390
        %v2392 = vlaneseq
        %v2393 = vshrl.u32 %v2392, 7
        %v2394 = vsub.s32 1, %v2393
        %v2395 = vrot.slane %v2382, %v2394
        %v2398 = vmul.f32 %v2385, %v2391
        %v2399 = vmul.f32 %v2385, %v2395
        %v2400 = vmul.f32 %v2398, %v2377
        %v2401 = vmul.f32 %v2399, %v2378
        %v2402 = vadd.f32 %v2370, %v2400
        %v2403 = vadd.f32 %v2371, %v2401
        %2404 = vrot.lane.b32.xlu0 %v1060, 93
        %v2405 = vpop.permute.xlu0 %2404
        %2406 = vrot.lane.b32.xlu0 %v1061, 93
        %v2407 = vpop.permute.xlu0 %2406
        %vm2408 = vcmp.lt.s32.totalorder %v408, 93
        %v2409 = vsel %vm2408, %v2405, %v2407
        %v2410 = vsel %vm2408, %v2407, %v2405
        %vm2411 = vmand %vm2218, %vm1281
        %vm2412 = vmand %vm2411, %vm1283
        %v2413 = vsel %vm2412, 1, 0
        %v2414 = vcvt.s32.f32 %v2413
        %2415 = vset.pattern.permute.xlu0 41
        %2416 = vperm.xlu0 %2415, %v1065
        %v2417 = vpop.permute.xlu0 %2416
        %v2420 = vlaneseq
        %v2421 = vshrl.u32 %v2420, 7
        %v2422 = vsub.s32 0, %v2421
        %v2423 = vrot.slane %v2414, %v2422
        %v2424 = vlaneseq
        %v2425 = vshrl.u32 %v2424, 7
        %v2426 = vsub.s32 1, %v2425
        %v2427 = vrot.slane %v2414, %v2426
        %v2430 = vmul.f32 %v2417, %v2423
        %v2431 = vmul.f32 %v2417, %v2427
        %v2432 = vmul.f32 %v2430, %v2409
        %v2433 = vmul.f32 %v2431, %v2410
        %v2434 = vadd.f32 %v2402, %v2432
        %v2435 = vadd.f32 %v2403, %v2433
        %2436 = vrot.lane.b32.xlu0 %v1060, 83
        %v2437 = vpop.permute.xlu0 %2436
        %2438 = vrot.lane.b32.xlu0 %v1061, 83
        %v2439 = vpop.permute.xlu0 %2438
        %vm2440 = vcmp.lt.s32.totalorder %v408, 83
        %v2441 = vsel %vm2440, %v2437, %v2439
        %v2442 = vsel %vm2440, %v2439, %v2437
        %vm2443 = vcmp.ge.s32.totalorder %v1062, 4294967293
        %vm2444 = vcmp.lt.s32.totalorder %v1062, 13
        %vm2445 = vmand %vm2443, %vm2444
        %vm2446 = vmand %vm2445, %vm1076
        %vm2447 = vmand %vm2446, %vm1078
        %v2448 = vsel %vm2447, 1, 0
        %v2449 = vcvt.s32.f32 %v2448
        %2450 = vset.pattern.permute.xlu0 42
        %2451 = vperm.xlu0 %2450, %v1065
        %v2452 = vpop.permute.xlu0 %2451
        %v2455 = vlaneseq
        %v2456 = vshrl.u32 %v2455, 7
        %v2457 = vsub.s32 0, %v2456
        %v2458 = vrot.slane %v2449, %v2457
        %v2459 = vlaneseq
        %v2460 = vshrl.u32 %v2459, 7
        %v2461 = vsub.s32 1, %v2460
        %v2462 = vrot.slane %v2449, %v2461
        %v2465 = vmul.f32 %v2452, %v2458
        %v2466 = vmul.f32 %v2452, %v2462
        %v2467 = vmul.f32 %v2465, %v2441
        %v2468 = vmul.f32 %v2466, %v2442
        %v2469 = vadd.f32 %v2434, %v2467
        %v2470 = vadd.f32 %v2435, %v2468
        %2471 = vrot.lane.b32.xlu0 %v1060, 82
        %v2472 = vpop.permute.xlu0 %2471
        %2473 = vrot.lane.b32.xlu0 %v1061, 82
        %v2474 = vpop.permute.xlu0 %2473
        %vm2475 = vcmp.lt.s32.totalorder %v408, 82
        %v2476 = vsel %vm2475, %v2472, %v2474
        %v2477 = vsel %vm2475, %v2474, %v2472
        %vm2478 = vmand %vm2445, %vm1111
        %vm2479 = vmand %vm2478, %vm1113
        %v2480 = vsel %vm2479, 1, 0
        %v2481 = vcvt.s32.f32 %v2480
        %2482 = vset.pattern.permute.xlu0 43
        %2483 = vperm.xlu0 %2482, %v1065
        %v2484 = vpop.permute.xlu0 %2483
        %v2487 = vlaneseq
        %v2488 = vshrl.u32 %v2487, 7
        %v2489 = vsub.s32 0, %v2488
        %v2490 = vrot.slane %v2481, %v2489
        %v2491 = vlaneseq
        %v2492 = vshrl.u32 %v2491, 7
        %v2493 = vsub.s32 1, %v2492
        %v2494 = vrot.slane %v2481, %v2493
        %v2497 = vmul.f32 %v2484, %v2490
        %v2498 = vmul.f32 %v2484, %v2494
        %v2499 = vmul.f32 %v2497, %v2476
        %v2500 = vmul.f32 %v2498, %v2477
        %v2501 = vadd.f32 %v2469, %v2499
        %v2502 = vadd.f32 %v2470, %v2500
        %2503 = vrot.lane.b32.xlu0 %v1060, 81
        %v2504 = vpop.permute.xlu0 %2503
        %2505 = vrot.lane.b32.xlu0 %v1061, 81
        %v2506 = vpop.permute.xlu0 %2505
        %vm2507 = vcmp.lt.s32.totalorder %v408, 81
        %v2508 = vsel %vm2507, %v2504, %v2506
        %v2509 = vsel %vm2507, %v2506, %v2504
        %vm2510 = vmand %vm2445, %vm1145
        %vm2511 = vmand %vm2510, %vm1147
        %v2512 = vsel %vm2511, 1, 0
        %v2513 = vcvt.s32.f32 %v2512
        %2514 = vset.pattern.permute.xlu0 44
        %2515 = vperm.xlu0 %2514, %v1065
        %v2516 = vpop.permute.xlu0 %2515
        %v2519 = vlaneseq
        %v2520 = vshrl.u32 %v2519, 7
        %v2521 = vsub.s32 0, %v2520
        %v2522 = vrot.slane %v2513, %v2521
        %v2523 = vlaneseq
        %v2524 = vshrl.u32 %v2523, 7
        %v2525 = vsub.s32 1, %v2524
        %v2526 = vrot.slane %v2513, %v2525
        %v2529 = vmul.f32 %v2516, %v2522
        %v2530 = vmul.f32 %v2516, %v2526
        %v2531 = vmul.f32 %v2529, %v2508
        %v2532 = vmul.f32 %v2530, %v2509
        %v2533 = vadd.f32 %v2501, %v2531
        %v2534 = vadd.f32 %v2502, %v2532
        %2535 = vrot.lane.b32.xlu0 %v1060, 80
        %v2536 = vpop.permute.xlu0 %2535
        %2537 = vrot.lane.b32.xlu0 %v1061, 80
        %v2538 = vpop.permute.xlu0 %2537
        %vm2539 = vcmp.lt.s32.totalorder %v408, 80
        %v2540 = vsel %vm2539, %v2536, %v2538
        %v2541 = vsel %vm2539, %v2538, %v2536
        %vm2542 = vmand %vm2445, %vm1179
        %vm2543 = vmand %vm2542, %vm1181
        %v2544 = vsel %vm2543, 1, 0
        %v2545 = vcvt.s32.f32 %v2544
        %2546 = vset.pattern.permute.xlu0 45
        %2547 = vperm.xlu0 %2546, %v1065
        %v2548 = vpop.permute.xlu0 %2547
        %v2551 = vlaneseq
        %v2552 = vshrl.u32 %v2551, 7
        %v2553 = vsub.s32 0, %v2552
        %v2554 = vrot.slane %v2545, %v2553
        %v2555 = vlaneseq
        %v2556 = vshrl.u32 %v2555, 7
        %v2557 = vsub.s32 1, %v2556
        %v2558 = vrot.slane %v2545, %v2557
        %v2561 = vmul.f32 %v2548, %v2554
        %v2562 = vmul.f32 %v2548, %v2558
        %v2563 = vmul.f32 %v2561, %v2540
        %v2564 = vmul.f32 %v2562, %v2541
        %v2565 = vadd.f32 %v2533, %v2563
        %v2566 = vadd.f32 %v2534, %v2564
        %2567 = vrot.lane.b32.xlu0 %v1060, 79
        %v2568 = vpop.permute.xlu0 %2567
        %2569 = vrot.lane.b32.xlu0 %v1061, 79
        %v2570 = vpop.permute.xlu0 %2569
        %vm2571 = vcmp.lt.s32.totalorder %v408, 79
        %v2572 = vsel %vm2571, %v2568, %v2570
        %v2573 = vsel %vm2571, %v2570, %v2568
        %vm2574 = vmand %vm2445, %vm1213
        %vm2575 = vmand %vm2574, %vm1215
        %v2576 = vsel %vm2575, 1, 0
        %v2577 = vcvt.s32.f32 %v2576
        %2578 = vset.pattern.permute.xlu0 46
        %2579 = vperm.xlu0 %2578, %v1065
        %v2580 = vpop.permute.xlu0 %2579
        %v2583 = vlaneseq
        %v2584 = vshrl.u32 %v2583, 7
        %v2585 = vsub.s32 0, %v2584
        %v2586 = vrot.slane %v2577, %v2585
        %v2587 = vlaneseq
        %v2588 = vshrl.u32 %v2587, 7
        %v2589 = vsub.s32 1, %v2588
        %v2590 = vrot.slane %v2577, %v2589
        %v2593 = vmul.f32 %v2580, %v2586
        %v2594 = vmul.f32 %v2580, %v2590
        %v2595 = vmul.f32 %v2593, %v2572
        %v2596 = vmul.f32 %v2594, %v2573
        %v2597 = vadd.f32 %v2565, %v2595
        %v2598 = vadd.f32 %v2566, %v2596
        %2599 = vrot.lane.b32.xlu0 %v1060, 78
        %v2600 = vpop.permute.xlu0 %2599
        %2601 = vrot.lane.b32.xlu0 %v1061, 78
        %v2602 = vpop.permute.xlu0 %2601
        %vm2603 = vcmp.lt.s32.totalorder %v408, 78
        %v2604 = vsel %vm2603, %v2600, %v2602
        %v2605 = vsel %vm2603, %v2602, %v2600
        %vm2606 = vmand %vm2445, %vm1247
        %vm2607 = vmand %vm2606, %vm1249
        %v2608 = vsel %vm2607, 1, 0
        %v2609 = vcvt.s32.f32 %v2608
        %2610 = vset.pattern.permute.xlu0 47
        %2611 = vperm.xlu0 %2610, %v1065
        %v2612 = vpop.permute.xlu0 %2611
        %v2615 = vlaneseq
        %v2616 = vshrl.u32 %v2615, 7
        %v2617 = vsub.s32 0, %v2616
        %v2618 = vrot.slane %v2609, %v2617
        %v2619 = vlaneseq
        %v2620 = vshrl.u32 %v2619, 7
        %v2621 = vsub.s32 1, %v2620
        %v2622 = vrot.slane %v2609, %v2621
        %v2625 = vmul.f32 %v2612, %v2618
        %v2626 = vmul.f32 %v2612, %v2622
        %v2627 = vmul.f32 %v2625, %v2604
        %v2628 = vmul.f32 %v2626, %v2605
        %v2629 = vadd.f32 %v2597, %v2627
        %v2630 = vadd.f32 %v2598, %v2628
        %2631 = vrot.lane.b32.xlu0 %v1060, 77
        %v2632 = vpop.permute.xlu0 %2631
        %2633 = vrot.lane.b32.xlu0 %v1061, 77
        %v2634 = vpop.permute.xlu0 %2633
        %vm2635 = vcmp.lt.s32.totalorder %v408, 77
        %v2636 = vsel %vm2635, %v2632, %v2634
        %v2637 = vsel %vm2635, %v2634, %v2632
        %vm2638 = vmand %vm2445, %vm1281
        %vm2639 = vmand %vm2638, %vm1283
        %v2640 = vsel %vm2639, 1, 0
        %v2641 = vcvt.s32.f32 %v2640
        %2642 = vset.pattern.permute.xlu0 48
        %2643 = vperm.xlu0 %2642, %v1065
        %v2644 = vpop.permute.xlu0 %2643
        %v2647 = vlaneseq
        %v2648 = vshrl.u32 %v2647, 7
        %v2649 = vsub.s32 0, %v2648
        %v2650 = vrot.slane %v2641, %v2649
        %v2651 = vlaneseq
        %v2652 = vshrl.u32 %v2651, 7
        %v2653 = vsub.s32 1, %v2652
        %v2654 = vrot.slane %v2641, %v2653
        %v2657 = vmul.f32 %v2644, %v2650
        %v2658 = vmul.f32 %v2644, %v2654
        %v2659 = vmul.f32 %v2657, %v2636
        %v2660 = vmul.f32 %v2658, %v2637
        %v2661 = vadd.f32 %v2629, %v2659
        %v2662 = vadd.f32 %v2630, %v2660
        %v2665 = vrot.slane %v2661, 4
        %v2666 = vrot.slane %v2662, 4
        %v2669 = vadd.f32 %v2661, %v2665
        %v2670 = vadd.f32 %v2662, %v2666
        %v2671 = vxor.u32 %v2669, 2147483648
        %v2672 = vxor.u32 %v2670, 2147483648
        %v2673 = vmul.f32 %v2671, 1.442695
        %v2674 = vpow.pop %v2673
        %v2675 = vmul.f32 %v2672, 1.442695
        %v2676 = vpow.pop %v2675
        %v2677 = vadd.f32 %v2674, 1.0
        %v2678 = vadd.f32 %v2676, 1.0
        %v2679 = vrcp.pop %v2677
        %v2680 = vmul.f32 1.0, %v2679
        %v2681 = vrcp.pop %v2678
        %v2682 = vmul.f32 1.0, %v2681
        %v2685 = vcombine.low %v2680, %v2682
        %v2687 = vunpack.c.l.s4 1966171168
        %v2688 = vunpack.c.0.s8 %v2687
        %v2689 = vlaneseq
        %v2690 = vshrl.u32 %v2689, 7
        %v2691 = vsub.s32 %v2688, %v2690
        %v2692 = vrot.slane %v2685, %v2691
        %v2693 = vcombine.high %v2692, %v2692
        %v2695 = vunpack.c.l.s4 1966171168
        %v2696 = vunpack.c.0.s8 %v2695
        %v2697 = vlaneseq
        %v2698 = vshrl.u32 %v2697, 7
        %v2699 = vsub.s32 %v2696, %v2698
        %v2700 = vrot.slane %v2692, %v2699
        %v2702 = vunpack.c.l.s4 1966171168
        %v2703 = vunpack.c.0.s8 %v2702
        %v2704 = vlaneseq
        %v2705 = vshrl.u32 %v2704, 7
        %v2706 = vsub.s32 %v2703, %v2705
        %v2707 = vrot.slane %v2693, %v2706
        %v2708 = vcombine.high %v2700, %v2700
        %v2709 = vcombine.high %v2707, %v2707
        %v2710 = vlaneseq
        %v2711 = vshrl.u32 %v2710, 7
        %v2712 = vsub.s32 0, %v2711
        %v2713 = vrot.slane %v2700, %v2712
        %v2714 = vlaneseq
        %v2715 = vshrl.u32 %v2714, 7
        %v2716 = vsub.s32 1, %v2715
        %v2717 = vrot.slane %v2700, %v2716
        %v2718 = vlaneseq
        %v2719 = vshrl.u32 %v2718, 7
        %v2720 = vsub.s32 0, %v2719
        %v2721 = vrot.slane %v2707, %v2720
        %v2722 = vlaneseq
        %v2723 = vshrl.u32 %v2722, 7
        %v2724 = vsub.s32 1, %v2723
        %v2725 = vrot.slane %v2707, %v2724
        %v2726 = vlaneseq
        %v2727 = vshrl.u32 %v2726, 7
        %v2728 = vsub.s32 0, %v2727
        %v2729 = vrot.slane %v2708, %v2728
        %v2730 = vlaneseq
        %v2731 = vshrl.u32 %v2730, 7
        %v2732 = vsub.s32 1, %v2731
        %v2733 = vrot.slane %v2708, %v2732
        %v2734 = vlaneseq
        %v2735 = vshrl.u32 %v2734, 7
        %v2736 = vsub.s32 0, %v2735
        %v2737 = vrot.slane %v2709, %v2736
        %v2738 = vlaneseq
        %v2739 = vshrl.u32 %v2738, 7
        %v2740 = vsub.s32 1, %v2739
        %v2741 = vrot.slane %v2709, %v2740
        %v2750 = vmul.f32 %v843, %v2713
        %v2751 = vmul.f32 %v844, %v2717
        %v2752 = vmul.f32 %v845, %v2713
        %v2753 = vmul.f32 %v846, %v2717
        %v2754 = vmul.f32 %v847, %v2713
        %v2755 = vmul.f32 %v848, %v2717
        %v2756 = vmul.f32 %v849, %v2713
        %v2757 = vmul.f32 %v850, %v2717
        %v2758 = vmul.f32 %v851, %v2721
        %v2759 = vmul.f32 %v852, %v2725
        %v2760 = vmul.f32 %v853, %v2721
        %v2761 = vmul.f32 %v854, %v2725
        %v2762 = vmul.f32 %v855, %v2721
        %v2763 = vmul.f32 %v856, %v2725
        %v2764 = vmul.f32 %v857, %v2721
        %v2765 = vmul.f32 %v858, %v2725
        %v2766 = vmul.f32 %v859, %v2729
        %v2767 = vmul.f32 %v860, %v2733
        %v2768 = vmul.f32 %v861, %v2729
        %v2769 = vmul.f32 %v862, %v2733
        %v2770 = vmul.f32 %v863, %v2729
        %v2771 = vmul.f32 %v864, %v2733
        %v2772 = vmul.f32 %v865, %v2729
        %v2773 = vmul.f32 %v866, %v2733
        %v2774 = vmul.f32 %v867, %v2737
        %v2775 = vmul.f32 %v868, %v2741
        %v2776 = vmul.f32 %v869, %v2737
        %v2777 = vmul.f32 %v870, %v2741
        %v2778 = vmul.f32 %v871, %v2737
        %v2779 = vmul.f32 %v872, %v2741
        %v2780 = vmul.f32 %v873, %v2737
        %v2781 = vmul.f32 %v874, %v2741
        %2782 = vst [vmem:[%s243] sm:$0xff] %v2750
        %2783 = vst [vmem:[%s243 + $0x8] sm:$0xff] %v2751
        %2784 = vst [vmem:[%s243 + $0x10] sm:$0xff] %v2752
        %2785 = vst [vmem:[%s243 + $0x18] sm:$0xff] %v2753
        %2786 = vst [vmem:[%s243 + $0x20] sm:$0xff] %v2754
        %2787 = vst [vmem:[%s243 + $0x28] sm:$0xff] %v2755
        %2788 = vst [vmem:[%s243 + $0x30] sm:$0xff] %v2756
        %2789 = vst [vmem:[%s243 + $0x38] sm:$0xff] %v2757
        %2790 = vst [vmem:[%s243 + $0x40] sm:$0xff] %v2758
        %2791 = vst [vmem:[%s243 + $0x48] sm:$0xff] %v2759
        %2792 = vst [vmem:[%s243 + $0x50] sm:$0xff] %v2760
        %2793 = vst [vmem:[%s243 + $0x58] sm:$0xff] %v2761
        %2794 = vst [vmem:[%s243 + $0x60] sm:$0xff] %v2762
        %2795 = vst [vmem:[%s243 + $0x68] sm:$0xff] %v2763
        %2796 = vst [vmem:[%s243 + $0x70] sm:$0xff] %v2764
        %2797 = vst [vmem:[%s243 + $0x78] sm:$0xff] %v2765
        %2798 = vst [vmem:[%s243 + $0x80] sm:$0xff] %v2766
        %2799 = vst [vmem:[%s243 + $0x88] sm:$0xff] %v2767
        %2800 = vst [vmem:[%s243 + $0x90] sm:$0xff] %v2768
        %2801 = vst [vmem:[%s243 + $0x98] sm:$0xff] %v2769
        %2802 = vst [vmem:[%s243 + $0xa0] sm:$0xff] %v2770
        %2803 = vst [vmem:[%s243 + $0xa8] sm:$0xff] %v2771
        %2804 = vst [vmem:[%s243 + $0xb0] sm:$0xff] %v2772
        %2805 = vst [vmem:[%s243 + $0xb8] sm:$0xff] %v2773
        %2806 = vst [vmem:[%s243 + $0xc0] sm:$0xff] %v2774
        %2807 = vst [vmem:[%s243 + $0xc8] sm:$0xff] %v2775
        %2808 = vst [vmem:[%s243 + $0xd0] sm:$0xff] %v2776
        %2809 = vst [vmem:[%s243 + $0xd8] sm:$0xff] %v2777
        %2810 = vst [vmem:[%s243 + $0xe0] sm:$0xff] %v2778
        %2811 = vst [vmem:[%s243 + $0xe8] sm:$0xff] %v2779
        %2812 = vst [vmem:[%s243 + $0xf0] sm:$0xff] %v2780
        %2813 = vst [vmem:[%s243 + $0xf8] sm:$0xff] %v2781
        %s2814 = sand.u32 %s140, 1
        %s2815 = scalar_lea.sflag [#allocation4], %s2814
        %s2816 = sand.u32 %s140, 1
        %s2817 = smul.addr %s2816, 256
        %s2818 = scalar_lea.vmem [#allocation5], %s2817
        // Predicated region
        $region45: #{tpu_custom_call.1} parent=39 // pred_check
          %p2819 = pneg %p150
        $region46: #{tpu_custom_call.1} parent=39 // pred_check_branch
          %2821 = sbr.rel (%p2819) target = $region48
        $region47: #{tpu_custom_call.1} parent=39 // pred_region
          %s2822 = smul.u32 4, %s22
          %s2824 = ssub.s32 4096, 4096
          %2825 = vsyncadd %s2815, %s2824
          %s2826 = smul.addr %s2822, 8
          %s2827 = smul.addr %s2826, 128
          %s2828 = scalar_lea.hbm %s5, %s2827
          %s2829 = sshll.u32 %s2818, 4
          %s2830 = int_to_ptr.vmem [resolvable:$true] %s2829
          %2835 = dma.vmem_to_hbm [thread:$0]  %s2830, 4096, %s2828, %s2815, 256, 256, 16
        $region48: #{tpu_custom_call.1} parent=39 // pred_fallthru
          _
      $region40: #{tpu_custom_call.1} parent=5 // pred_fallthru
        _
      %p2836 = scmp.le.s32.totalorder 2, %s17
      // Predicated region
      $region49: #{tpu_custom_call.1} parent=5 // pred_check
        %p2837 = pneg %p2836
      $region50: #{tpu_custom_call.1} parent=5 // pred_check_branch
        %2839 = sbr.rel (%p2837) target = $region52
      $region51: #{tpu_custom_call.1} parent=5 // pred_region
        %s2840 = ssub.s32 %s17, 2
        // Predicated region
        $region53: #{tpu_custom_call.1} parent=51 // pred_check
          %p2841 = pneg %p156
        $region54: #{tpu_custom_call.1} parent=51 // pred_check_branch
          %2843 = sbr.rel (%p2841) target = $region56
        $region55: #{tpu_custom_call.1} parent=51 // pred_region
          %s2844 = sand.u32 %s141, 1
          %s2845 = scalar_lea.sflag [#allocation4], %s2844
          %s2846 = sand.u32 %s141, 1
          %s2847 = smul.addr %s2846, 256
          %s2848 = scalar_lea.vmem [#allocation5], %s2847
          %2849 = dma.done %s2845, 4096
        $region56: #{tpu_custom_call.1} parent=51 // pred_fallthru
          _
      $region52: #{tpu_custom_call.1} parent=5 // pred_fallthru
        _
    $region6: #{tpu_custom_call.1} parent=1 // loop_footer
      %s21 = sadd.s32 1, %s17
    $region7: #{tpu_custom_call.1} parent=1 // loop_footer_branch
      %16 = sbr.rel target = $region3
    $region8: #{tpu_custom_call.1} parent=1 // loop_exit
      _
    %2850 = vsyncpa [#allocation3], 1
    %s2851 = scalar_lea.sflag [#allocation3], 1
    %2852 = vsyncpa %s2851, 1
    %2853 = vsyncpa [#allocation4], 1
    %s2854 = scalar_lea.sflag [#allocation4], 1
    %2855 = vsyncpa %s2854, 1

</llo_original>
